<compile_context>
chip_gen: v7x
topology: tpu7x:2x2x1
jax: 0.10.0
libtpu: 0.0.40
codegen_flags: <defaults>
</compile_context>

<pallas_src>
import functools

import jax
import jax.numpy as jnp
from jax.experimental import pallas as pl
from jax.experimental.pallas import tpu as pltpu

CHANNELS = 1
IMG_SIZE = 28
LATENT_DIM = 100
IMG_PIXELS = CHANNELS * IMG_SIZE * IMG_SIZE          # 784
PADDED_PIXELS = 896                                  # 7 * 128, lane-dense store
BN_EPS = 0.8


# ----------------------------------------------------------------------------
# Fused Pallas kernel: the entire generator forward pass in one body.
# ----------------------------------------------------------------------------
def _generator_fused_kernel(
    z_ref,
    w0_ref, b0_ref,
    w1_ref, g0_ref, be0_ref,
    w2_ref, g1_ref, be1_ref,
    w3_ref, g2_ref, be2_ref,
    w4_ref, b4_ref,
    out_ref,
    *, eps,
):
    def mm(x, w_ref):
        # bf16 x bf16 on the MXU, f32 accumulation.
        return jnp.dot(x.astype(jnp.bfloat16), w_ref[...],
                       preferred_element_type=jnp.float32)

    def lrelu(y):
        return jnp.where(y > 0, y, 0.2 * y)

    def bn_lrelu(y, g_ref, b_ref):
        # Training-mode BatchNorm1d (batch stats, biased variance), folded to
        # a single scale/shift. Linear bias omitted upstream: it is exactly
        # cancelled by the mean subtraction.
        mean = jnp.mean(y, axis=0, keepdims=True)
        var = jnp.mean(jnp.square(y - mean), axis=0, keepdims=True)
        scale = g_ref[...] * jax.lax.rsqrt(var + eps)
        shift = b_ref[...] - mean * scale
        return lrelu(y * scale + shift)

    # block(100, 128, normalize=False): Linear + LeakyReLU
    h = lrelu(mm(z_ref[...], w0_ref) + b0_ref[...])
    # block(128, 256): Linear (bias dropped) + BN(eps=0.8) + LeakyReLU
    h = bn_lrelu(mm(h, w1_ref), g0_ref, be0_ref)
    # block(256, 512)
    h = bn_lrelu(mm(h, w2_ref), g1_ref, be1_ref)
    # block(512, 1024)
    h = bn_lrelu(mm(h, w3_ref), g2_ref, be2_ref)
    # Linear(1024, 784->896 zero-padded) + Tanh
    y = jnp.tanh(mm(h, w4_ref) + b4_ref[...])
    out_ref[...] = y.astype(out_ref.dtype)


# ----------------------------------------------------------------------------
# Wrapper: single-block fused pallas_call (everything resident in VMEM).
# ----------------------------------------------------------------------------
@jax.jit
def generator_forward(params, z):
    B = z.shape[0]
    args = (
        z,
        params["w0"], params["b0"],
        params["w1"], params["gamma0"], params["beta0"],
        params["w2"], params["gamma1"], params["beta1"],
        params["w3"], params["gamma2"], params["beta2"],
        params["w4p"], params["b4p"],
    )
    out = pl.pallas_call(
        functools.partial(_generator_fused_kernel, eps=BN_EPS),
        out_shape=jax.ShapeDtypeStruct((B, PADDED_PIXELS), jnp.float32),
        in_specs=[pl.BlockSpec(a.shape, lambda: (0, 0)) for a in args],
        out_specs=pl.BlockSpec((B, PADDED_PIXELS), lambda: (0, 0)),
        compiler_params=pltpu.CompilerParams(
            vmem_limit_bytes=32 * 1024 * 1024),
    )(*args)
    # Drop the zero-padded columns and reshape to NCHW, like img.view(B,1,28,28).
    img = out[:, :IMG_PIXELS]
    return img.reshape(B, CHANNELS, IMG_SIZE, IMG_SIZE)


# ----------------------------------------------------------------------------
# Parameter construction (deterministic, mimics PyTorch default Linear init).
# Weights stored in bf16 (halves HBM weight traffic, native MXU path);
# biases / BN affine params stay f32.
# ----------------------------------------------------------------------------
def init_params(key):
    dims = [(LATENT_DIM, 128), (128, 256), (256, 512), (512, 1024),
            (1024, IMG_PIXELS)]
    params = {}
    for i, (fan_in, fan_out) in enumerate(dims):
        key, kw, kb = jax.random.split(key, 3)
        bound = 1.0 / jnp.sqrt(jnp.float32(fan_in))
        # weight stored as (in, out) == transpose of PyTorch's (out, in)
        w = jax.random.uniform(kw, (fan_in, fan_out), jnp.float32, -bound, bound)
        b = jax.random.uniform(kb, (1, fan_out), jnp.float32, -bound, bound)
        if i == 4:
            # zero-pad the final layer to a lane-dense 896 output width
            pad = PADDED_PIXELS - IMG_PIXELS
            params["w4p"] = jnp.pad(w, ((0, 0), (0, pad))).astype(jnp.bfloat16)
            params["b4p"] = jnp.pad(b, ((0, 0), (0, pad)))
        else:
            params[f"w{i}"] = w.astype(jnp.bfloat16)
            params[f"b{i}"] = b    # b1,b2,b3 kept for the reference; the kernel
                                   # drops them (cancelled by BN mean subtraction)
    # BatchNorm affine params for the 3 normalized blocks (PyTorch init: 1, 0)
    for j, f in enumerate([256, 512, 1024]):
        params[f"gamma{j}"] = jnp.ones((1, f), jnp.float32)
        params[f"beta{j}"] = jnp.zeros((1, f), jnp.float32)
    return params


# ----------------------------------------------------------------------------
# Pure-JAX reference (same bf16-weight numerics, full original semantics
# including the biases that feed BatchNorm).
# ----------------------------------------------------------------------------
def reference_forward(params, z):
    def mm(x, w):
        return jnp.dot(x.astype(jnp.bfloat16), w,
                       preferred_element_type=jnp.float32)

    def lrelu(x):
        return jnp.where(x > 0, x, 0.2 * x)

    def bn(x, g, b, eps=BN_EPS):
        m = jnp.mean(x, axis=0, keepdims=True)
        v = jnp.mean(jnp.square(x - m), axis=0, keepdims=True)
        return (x - m) / jnp.sqrt(v + eps) * g + b

    h = lrelu(mm(z, params["w0"]) + params["b0"])
    h = lrelu(bn(mm(h, params["w1"]) + params["b1"],
                 params["gamma0"], params["beta0"]))
    h = lrelu(bn(mm(h, params["w2"]) + params["b2"],
                 params["gamma1"], params["beta1"]))
    h = lrelu(bn(mm(h, params["w3"]) + params["b3"],
                 params["gamma2"], params["beta2"]))
    img = jnp.tanh(mm(h, params["w4p"]) + params["b4p"])[:, :IMG_PIXELS]
    return img.reshape(img.shape[0], CHANNELS, IMG_SIZE, IMG_SIZE)


if __name__ == "__main__":
    key = jax.random.PRNGKey(0)
    kp, kz = jax.random.split(key)
    params = init_params(kp)

    batch = 8  # small batch; latent_dim=100 fixed by the module
    z = jax.random.normal(kz, (batch, LATENT_DIM), jnp.float32)

    img = generator_forward(params, z)
    img = jax.block_until_ready(img)

    assert img.shape == (batch, CHANNELS, IMG_SIZE, IMG_SIZE), img.shape
    ref = reference_forward(params, z)
    assert jnp.allclose(img, ref, atol=2e-3, rtol=2e-3), "mismatch vs reference"

    print("KERNEL_OK")
</pallas_src>

<mosaic_0001>
module attributes {stable_mosaic.version = 11 : i64} {
  func.func @_generator_fused_kernel(%arg0: memref<8x100xf32, #tpu.memory_space<vmem>>, %arg1: memref<100x128xbf16, #tpu.memory_space<vmem>>, %arg2: memref<1x128xf32, #tpu.memory_space<vmem>>, %arg3: memref<128x256xbf16, #tpu.memory_space<vmem>>, %arg4: memref<1x256xf32, #tpu.memory_space<vmem>>, %arg5: memref<1x256xf32, #tpu.memory_space<vmem>>, %arg6: memref<256x512xbf16, #tpu.memory_space<vmem>>, %arg7: memref<1x512xf32, #tpu.memory_space<vmem>>, %arg8: memref<1x512xf32, #tpu.memory_space<vmem>>, %arg9: memref<512x1024xbf16, #tpu.memory_space<vmem>>, %arg10: memref<1x1024xf32, #tpu.memory_space<vmem>>, %arg11: memref<1x1024xf32, #tpu.memory_space<vmem>>, %arg12: memref<1024x896xbf16, #tpu.memory_space<vmem>>, %arg13: memref<1x896xf32, #tpu.memory_space<vmem>>, %arg14: memref<8x896xf32, #tpu.memory_space<vmem>>) attributes {dimension_semantics = [], scalar_prefetch = 0 : i64, scratch_operands = 0 : i64, tpu.core_type = #tpu.core_type<tc>} {
    %c0 = arith.constant 0 : index
    %c0_0 = arith.constant 0 : index
    %0 = vector.load %arg0[%c0, %c0_0] : memref<8x100xf32, #tpu.memory_space<vmem>>, vector<8x100xf32>
    %1 = arith.truncf %0 : vector<8x100xf32> to vector<8x100xbf16>
    %c0_1 = arith.constant 0 : index
    %c0_2 = arith.constant 0 : index
    %2 = vector.load %arg1[%c0_1, %c0_2] : memref<100x128xbf16, #tpu.memory_space<vmem>>, vector<100x128xbf16>
    %cst = arith.constant dense<0.000000e+00> : vector<8x128xf32>
    %3 = tpu.matmul %1, %2, %cst {dimension_numbers = #tpu.dot_dimension_numbers<[1], [0], [0], [1], [0, 0, 1, 1], [], []>} : vector<8x100xbf16>, vector<100x128xbf16>, vector<8x128xf32> -> vector<8x128xf32>
    %c0_3 = arith.constant 0 : index
    %c0_4 = arith.constant 0 : index
    %4 = vector.load %arg2[%c0_3, %c0_4] : memref<1x128xf32, #tpu.memory_space<vmem>>, vector<1x128xf32>
    %5 = vector.broadcast %4 : vector<1x128xf32> to vector<8x128xf32>
    %6 = arith.addf %3, %5 : vector<8x128xf32>
    %cst_5 = arith.constant 0.000000e+00 : f32
    %7 = vector.broadcast %cst_5 : f32 to vector<8x128xf32>
    %8 = arith.cmpf ogt, %6, %7 : vector<8x128xf32>
    %cst_6 = arith.constant 2.000000e-01 : f32
    %9 = vector.broadcast %cst_6 : f32 to vector<8x128xf32>
    %10 = arith.mulf %9, %6 : vector<8x128xf32>
    %11 = arith.select %8, %6, %10 : vector<8x128xi1>, vector<8x128xf32>
    %12 = arith.truncf %11 : vector<8x128xf32> to vector<8x128xbf16>
    %c0_7 = arith.constant 0 : index
    %c0_8 = arith.constant 0 : index
    %13 = vector.load %arg3[%c0_7, %c0_8] : memref<128x256xbf16, #tpu.memory_space<vmem>>, vector<128x256xbf16>
    %cst_9 = arith.constant dense<0.000000e+00> : vector<8x256xf32>
    %14 = tpu.matmul %12, %13, %cst_9 {dimension_numbers = #tpu.dot_dimension_numbers<[1], [0], [0], [1], [0, 0, 1, 1], [], []>} : vector<8x128xbf16>, vector<128x256xbf16>, vector<8x256xf32> -> vector<8x256xf32>
    %cst_10 = arith.constant dense<0.000000e+00> : vector<256xf32>
    %15 = vector.multi_reduction <add>, %14, %cst_10 [0] : vector<8x256xf32> to vector<256xf32>
    %16 = vector.shape_cast %15 : vector<256xf32> to vector<1x256xf32>
    %cst_11 = arith.constant 8.000000e+00 : f32
    %17 = vector.broadcast %cst_11 : f32 to vector<1x256xf32>
    %18 = arith.divf %16, %17 : vector<1x256xf32>
    %19 = vector.broadcast %18 : vector<1x256xf32> to vector<8x256xf32>
    %20 = arith.subf %14, %19 : vector<8x256xf32>
    %21 = arith.mulf %20, %20 : vector<8x256xf32>
    %cst_12 = arith.constant dense<0.000000e+00> : vector<256xf32>
    %22 = vector.multi_reduction <add>, %21, %cst_12 [0] : vector<8x256xf32> to vector<256xf32>
    %23 = vector.shape_cast %22 : vector<256xf32> to vector<1x256xf32>
    %cst_13 = arith.constant 8.000000e+00 : f32
    %24 = vector.broadcast %cst_13 : f32 to vector<1x256xf32>
    %25 = arith.divf %23, %24 : vector<1x256xf32>
    %c0_14 = arith.constant 0 : index
    %c0_15 = arith.constant 0 : index
    %26 = vector.load %arg4[%c0_14, %c0_15] : memref<1x256xf32, #tpu.memory_space<vmem>>, vector<1x256xf32>
    %cst_16 = arith.constant 8.000000e-01 : f32
    %27 = vector.broadcast %cst_16 : f32 to vector<1x256xf32>
    %28 = arith.addf %25, %27 : vector<1x256xf32>
    %29 = math.rsqrt %28 : vector<1x256xf32>
    %30 = arith.mulf %26, %29 : vector<1x256xf32>
    %c0_17 = arith.constant 0 : index
    %c0_18 = arith.constant 0 : index
    %31 = vector.load %arg5[%c0_17, %c0_18] : memref<1x256xf32, #tpu.memory_space<vmem>>, vector<1x256xf32>
    %32 = arith.mulf %18, %30 : vector<1x256xf32>
    %33 = arith.subf %31, %32 : vector<1x256xf32>
    %34 = vector.broadcast %30 : vector<1x256xf32> to vector<8x256xf32>
    %35 = arith.mulf %14, %34 : vector<8x256xf32>
    %36 = vector.broadcast %33 : vector<1x256xf32> to vector<8x256xf32>
    %37 = arith.addf %35, %36 : vector<8x256xf32>
    %cst_19 = arith.constant 0.000000e+00 : f32
    %38 = vector.broadcast %cst_19 : f32 to vector<8x256xf32>
    %39 = arith.cmpf ogt, %37, %38 : vector<8x256xf32>
    %cst_20 = arith.constant 2.000000e-01 : f32
    %40 = vector.broadcast %cst_20 : f32 to vector<8x256xf32>
    %41 = arith.mulf %40, %37 : vector<8x256xf32>
    %42 = arith.select %39, %37, %41 : vector<8x256xi1>, vector<8x256xf32>
    %43 = arith.truncf %42 : vector<8x256xf32> to vector<8x256xbf16>
    %c0_21 = arith.constant 0 : index
    %c0_22 = arith.constant 0 : index
    %44 = vector.load %arg6[%c0_21, %c0_22] : memref<256x512xbf16, #tpu.memory_space<vmem>>, vector<256x512xbf16>
    %cst_23 = arith.constant dense<0.000000e+00> : vector<8x512xf32>
    %45 = tpu.matmul %43, %44, %cst_23 {dimension_numbers = #tpu.dot_dimension_numbers<[1], [0], [0], [1], [0, 0, 1, 1], [], []>} : vector<8x256xbf16>, vector<256x512xbf16>, vector<8x512xf32> -> vector<8x512xf32>
    %cst_24 = arith.constant dense<0.000000e+00> : vector<512xf32>
    %46 = vector.multi_reduction <add>, %45, %cst_24 [0] : vector<8x512xf32> to vector<512xf32>
    %47 = vector.shape_cast %46 : vector<512xf32> to vector<1x512xf32>
    %cst_25 = arith.constant 8.000000e+00 : f32
    %48 = vector.broadcast %cst_25 : f32 to vector<1x512xf32>
    %49 = arith.divf %47, %48 : vector<1x512xf32>
    %50 = vector.broadcast %49 : vector<1x512xf32> to vector<8x512xf32>
    %51 = arith.subf %45, %50 : vector<8x512xf32>
    %52 = arith.mulf %51, %51 : vector<8x512xf32>
    %cst_26 = arith.constant dense<0.000000e+00> : vector<512xf32>
    %53 = vector.multi_reduction <add>, %52, %cst_26 [0] : vector<8x512xf32> to vector<512xf32>
    %54 = vector.shape_cast %53 : vector<512xf32> to vector<1x512xf32>
    %cst_27 = arith.constant 8.000000e+00 : f32
    %55 = vector.broadcast %cst_27 : f32 to vector<1x512xf32>
    %56 = arith.divf %54, %55 : vector<1x512xf32>
    %c0_28 = arith.constant 0 : index
    %c0_29 = arith.constant 0 : index
    %57 = vector.load %arg7[%c0_28, %c0_29] : memref<1x512xf32, #tpu.memory_space<vmem>>, vector<1x512xf32>
    %cst_30 = arith.constant 8.000000e-01 : f32
    %58 = vector.broadcast %cst_30 : f32 to vector<1x512xf32>
    %59 = arith.addf %56, %58 : vector<1x512xf32>
    %60 = math.rsqrt %59 : vector<1x512xf32>
    %61 = arith.mulf %57, %60 : vector<1x512xf32>
    %c0_31 = arith.constant 0 : index
    %c0_32 = arith.constant 0 : index
    %62 = vector.load %arg8[%c0_31, %c0_32] : memref<1x512xf32, #tpu.memory_space<vmem>>, vector<1x512xf32>
    %63 = arith.mulf %49, %61 : vector<1x512xf32>
    %64 = arith.subf %62, %63 : vector<1x512xf32>
    %65 = vector.broadcast %61 : vector<1x512xf32> to vector<8x512xf32>
    %66 = arith.mulf %45, %65 : vector<8x512xf32>
    %67 = vector.broadcast %64 : vector<1x512xf32> to vector<8x512xf32>
    %68 = arith.addf %66, %67 : vector<8x512xf32>
    %cst_33 = arith.constant 0.000000e+00 : f32
    %69 = vector.broadcast %cst_33 : f32 to vector<8x512xf32>
    %70 = arith.cmpf ogt, %68, %69 : vector<8x512xf32>
    %cst_34 = arith.constant 2.000000e-01 : f32
    %71 = vector.broadcast %cst_34 : f32 to vector<8x512xf32>
    %72 = arith.mulf %71, %68 : vector<8x512xf32>
    %73 = arith.select %70, %68, %72 : vector<8x512xi1>, vector<8x512xf32>
    %74 = arith.truncf %73 : vector<8x512xf32> to vector<8x512xbf16>
    %c0_35 = arith.constant 0 : index
    %c0_36 = arith.constant 0 : index
    %75 = vector.load %arg9[%c0_35, %c0_36] : memref<512x1024xbf16, #tpu.memory_space<vmem>>, vector<512x1024xbf16>
    %cst_37 = arith.constant dense<0.000000e+00> : vector<8x1024xf32>
    %76 = tpu.matmul %74, %75, %cst_37 {dimension_numbers = #tpu.dot_dimension_numbers<[1], [0], [0], [1], [0, 0, 1, 1], [], []>} : vector<8x512xbf16>, vector<512x1024xbf16>, vector<8x1024xf32> -> vector<8x1024xf32>
    %cst_38 = arith.constant dense<0.000000e+00> : vector<1024xf32>
    %77 = vector.multi_reduction <add>, %76, %cst_38 [0] : vector<8x1024xf32> to vector<1024xf32>
    %78 = vector.shape_cast %77 : vector<1024xf32> to vector<1x1024xf32>
    %cst_39 = arith.constant 8.000000e+00 : f32
    %79 = vector.broadcast %cst_39 : f32 to vector<1x1024xf32>
    %80 = arith.divf %78, %79 : vector<1x1024xf32>
    %81 = vector.broadcast %80 : vector<1x1024xf32> to vector<8x1024xf32>
    %82 = arith.subf %76, %81 : vector<8x1024xf32>
    %83 = arith.mulf %82, %82 : vector<8x1024xf32>
    %cst_40 = arith.constant dense<0.000000e+00> : vector<1024xf32>
    %84 = vector.multi_reduction <add>, %83, %cst_40 [0] : vector<8x1024xf32> to vector<1024xf32>
    %85 = vector.shape_cast %84 : vector<1024xf32> to vector<1x1024xf32>
    %cst_41 = arith.constant 8.000000e+00 : f32
    %86 = vector.broadcast %cst_41 : f32 to vector<1x1024xf32>
    %87 = arith.divf %85, %86 : vector<1x1024xf32>
    %c0_42 = arith.constant 0 : index
    %c0_43 = arith.constant 0 : index
    %88 = vector.load %arg10[%c0_42, %c0_43] : memref<1x1024xf32, #tpu.memory_space<vmem>>, vector<1x1024xf32>
    %cst_44 = arith.constant 8.000000e-01 : f32
    %89 = vector.broadcast %cst_44 : f32 to vector<1x1024xf32>
    %90 = arith.addf %87, %89 : vector<1x1024xf32>
    %91 = math.rsqrt %90 : vector<1x1024xf32>
    %92 = arith.mulf %88, %91 : vector<1x1024xf32>
    %c0_45 = arith.constant 0 : index
    %c0_46 = arith.constant 0 : index
    %93 = vector.load %arg11[%c0_45, %c0_46] : memref<1x1024xf32, #tpu.memory_space<vmem>>, vector<1x1024xf32>
    %94 = arith.mulf %80, %92 : vector<1x1024xf32>
    %95 = arith.subf %93, %94 : vector<1x1024xf32>
    %96 = vector.broadcast %92 : vector<1x1024xf32> to vector<8x1024xf32>
    %97 = arith.mulf %76, %96 : vector<8x1024xf32>
    %98 = vector.broadcast %95 : vector<1x1024xf32> to vector<8x1024xf32>
    %99 = arith.addf %97, %98 : vector<8x1024xf32>
    %cst_47 = arith.constant 0.000000e+00 : f32
    %100 = vector.broadcast %cst_47 : f32 to vector<8x1024xf32>
    %101 = arith.cmpf ogt, %99, %100 : vector<8x1024xf32>
    %cst_48 = arith.constant 2.000000e-01 : f32
    %102 = vector.broadcast %cst_48 : f32 to vector<8x1024xf32>
    %103 = arith.mulf %102, %99 : vector<8x1024xf32>
    %104 = arith.select %101, %99, %103 : vector<8x1024xi1>, vector<8x1024xf32>
    %105 = arith.truncf %104 : vector<8x1024xf32> to vector<8x1024xbf16>
    %c0_49 = arith.constant 0 : index
    %c0_50 = arith.constant 0 : index
    %106 = vector.load %arg12[%c0_49, %c0_50] : memref<1024x896xbf16, #tpu.memory_space<vmem>>, vector<1024x896xbf16>
    %cst_51 = arith.constant dense<0.000000e+00> : vector<8x896xf32>
    %107 = tpu.matmul %105, %106, %cst_51 {dimension_numbers = #tpu.dot_dimension_numbers<[1], [0], [0], [1], [0, 0, 1, 1], [], []>} : vector<8x1024xbf16>, vector<1024x896xbf16>, vector<8x896xf32> -> vector<8x896xf32>
    %c0_52 = arith.constant 0 : index
    %c0_53 = arith.constant 0 : index
    %108 = vector.load %arg13[%c0_52, %c0_53] : memref<1x896xf32, #tpu.memory_space<vmem>>, vector<1x896xf32>
    %109 = vector.broadcast %108 : vector<1x896xf32> to vector<8x896xf32>
    %110 = arith.addf %107, %109 : vector<8x896xf32>
    %111 = math.tanh %110 : vector<8x896xf32>
    %c0_54 = arith.constant 0 : index
    %c0_55 = arith.constant 0 : index
    %112 = vector.load %arg14[%c0_54, %c0_55] : memref<8x896xf32, #tpu.memory_space<vmem>>, vector<8x896xf32>
    tpu.vector_store %arg14[%c0_54, %c0_55], %111 {strides = array<i32>} : memref<8x896xf32, #tpu.memory_space<vmem>>, vector<8x896xf32>,
    return
  }
}

</mosaic_0001>

<llo_original>
// kernel: generator_forward.1
$region0: #{generator_forward.1}
  #allocation0 [shape = 'u32[]', space=smem, size = 0x4, offset = 0x4, fixed_abs, tag = 'smem constant byte address 0x4 - core index']
  #allocation1 [shape = 'u32[144,128]{1,0:T(1,128)}', space=vmem, size = 0x12000, scoped, tag = 'internal scratch']
  %s0 = inlined_call_operand.hbm [shape: f32[8,100], index: 0, kind: input, shape index: {}]
  %s1 = inlined_call_operand.hbm [shape: bf16[100,128], index: 1, kind: input, shape index: {}]
  %s2 = inlined_call_operand.hbm [shape: f32[1,128], index: 2, kind: input, shape index: {}]
  %s3 = inlined_call_operand.hbm [shape: bf16[128,256], index: 3, kind: input, shape index: {}]
  %s4 = inlined_call_operand.hbm [shape: f32[1,256], index: 4, kind: input, shape index: {}]
  %s5 = inlined_call_operand.hbm [shape: f32[1,256], index: 5, kind: input, shape index: {}]
  %s6 = inlined_call_operand.hbm [shape: bf16[256,512], index: 6, kind: input, shape index: {}]
  %s7 = inlined_call_operand.hbm [shape: f32[1,512], index: 7, kind: input, shape index: {}]
  %s8 = inlined_call_operand.hbm [shape: f32[1,512], index: 8, kind: input, shape index: {}]
  %s9 = inlined_call_operand.hbm [shape: bf16[512,1024], index: 9, kind: input, shape index: {}]
  %s10 = inlined_call_operand.hbm [shape: f32[1,1024], index: 10, kind: input, shape index: {}]
  %s11 = inlined_call_operand.hbm [shape: f32[1,1024], index: 11, kind: input, shape index: {}]
  %s12 = inlined_call_operand.hbm [shape: bf16[1024,896], index: 12, kind: input, shape index: {}]
  %s13 = inlined_call_operand.hbm [shape: f32[1,896], index: 13, kind: input, shape index: {}]
  %s14 = inlined_call_operand.vmem [shape: f32[8,896], index: 14, kind: output, shape index: {}]
  %s15 = sld [smem:[#allocation0]]
  $region122: #{generator_forward.1} parent=0
    _
  %s17 = ssub.s32 1, %s15
  %s18 = scalar_select 0, %s17, %s15
  $region1: #{generator_forward.1} parent=0
    #allocation2 [shape = 'u8[4096]{0}', space=vmem, size = 0x1000, scoped, tag = 'input window, operand 0, single buffered']
    #allocation3 [shape = 's32[1]{0}', space=sflag, size = 0x4, scoped, tag = 'scoped memory for generator_forward.1']
    #allocation4 [shape = 'u8[26624]{0}', space=vmem, size = 0x6800, scoped, tag = 'input window, operand 1, single buffered']
    #allocation5 [shape = 's32[1]{0}', space=sflag, size = 0x4, scoped, tag = 'scoped memory for generator_forward.1']
    #allocation6 [shape = 'u8[512]{0}', space=vmem, size = 0x400, scoped, tag = 'input window, operand 2, single buffered']
    #allocation7 [shape = 'u8[65536]{0}', space=vmem, size = 0x10000, scoped, tag = 'input window, operand 3, single buffered']
    #allocation8 [shape = 's32[1]{0}', space=sflag, size = 0x4, scoped, tag = 'scoped memory for generator_forward.1']
    #allocation9 [shape = 'u8[1024]{0}', space=vmem, size = 0x400, scoped, tag = 'input window, operand 4, single buffered']
    #allocation10 [shape = 'u8[1024]{0}', space=vmem, size = 0x400, scoped, tag = 'input window, operand 5, single buffered']
    #allocation11 [shape = 's32[1]{0}', space=sflag, size = 0x4, scoped, tag = 'scoped memory for generator_forward.1']
    #allocation12 [shape = 'u8[262144]{0}', space=vmem, size = 0x40000, scoped, tag = 'input window, operand 6, single buffered']
    #allocation13 [shape = 'u8[2048]{0}', space=vmem, size = 0x800, scoped, tag = 'input window, operand 7, single buffered']
    #allocation14 [shape = 's32[1]{0}', space=sflag, size = 0x4, scoped, tag = 'scoped memory for generator_forward.1']
    #allocation15 [shape = 'u8[2048]{0}', space=vmem, size = 0x800, scoped, tag = 'input window, operand 8, single buffered']
    #allocation16 [shape = 'u8[1048576]{0}', space=vmem, size = 0x100000, scoped, tag = 'input window, operand 9, single buffered']
    #allocation17 [shape = 's32[1]{0}', space=sflag, size = 0x4, scoped, tag = 'scoped memory for generator_forward.1']
    #allocation18 [shape = 'u8[4096]{0}', space=vmem, size = 0x1000, scoped, tag = 'input window, operand 10, single buffered']
    #allocation19 [shape = 'u8[4096]{0}', space=vmem, size = 0x1000, scoped, tag = 'input window, operand 11, single buffered']
    #allocation20 [shape = 's32[1]{0}', space=sflag, size = 0x4, scoped, tag = 'scoped memory for generator_forward.1']
    #allocation21 [shape = 'u8[1835008]{0}', space=vmem, size = 0x1c0000, scoped, tag = 'input window, operand 12, single buffered']
    #allocation22 [shape = 'u8[3584]{0}', space=vmem, size = 0x1000, scoped, tag = 'input window, operand 13, single buffered']
    #allocation23 [shape = 's32[1]{0}', space=sflag, size = 0x4, scoped, tag = 'scoped memory for generator_forward.1']
    %19 = vsyncpa [#allocation3], 0
    %20 = vsyncpa [#allocation5], 0
    %21 = vsyncpa [#allocation8], 0
    %22 = vsyncpa [#allocation11], 0
    %23 = vsyncpa [#allocation14], 0
    %24 = vsyncpa [#allocation17], 0
    %25 = vsyncpa [#allocation20], 0
    %26 = vsyncpa [#allocation23], 0
    // Predicated region
    $region2: #{generator_forward.1} parent=1 // pred_check
      _
    $region3: #{generator_forward.1} parent=1 // pred_check_branch
      %28 = sbr.rel (0) target = $region5
    $region4: #{generator_forward.1} parent=1 // pred_region
      %s30 = ssub.s32 128, 128
      %31 = vsyncadd [#allocation3], %s30
      %s33 = sshll.u32 [#allocation2], 4
      %s34 = int_to_ptr.vmem [resolvable:$true] %s33
      %36 = dma.hbm_to_vmem [thread:$0]  %s0, 128, %s34, [#allocation3]
    $region5: #{generator_forward.1} parent=1 // pred_fallthru
      _
    // Predicated region
    $region6: #{generator_forward.1} parent=1 // pred_check
      _
    $region7: #{generator_forward.1} parent=1 // pred_check_branch
      %38 = sbr.rel (0) target = $region9
    $region8: #{generator_forward.1} parent=1 // pred_region
      %s40 = ssub.s32 832, 832
      %41 = vsyncadd [#allocation5], %s40
      %s42 = sshll.u32 [#allocation4], 4
      %s43 = int_to_ptr.vmem [resolvable:$true] %s42
      %48 = dma.hbm_to_vmem [thread:$0]  %s1, 832, %s43, [#allocation5], 64, 64, 4
    $region9: #{generator_forward.1} parent=1 // pred_fallthru
      _
    // Predicated region
    $region10: #{generator_forward.1} parent=1 // pred_check
      _
    $region11: #{generator_forward.1} parent=1 // pred_check_branch
      %50 = sbr.rel (0) target = $region13
    $region12: #{generator_forward.1} parent=1 // pred_region
      %s52 = ssub.s32 16, 16
      %53 = vsyncadd [#allocation5], %s52
      %s55 = sshll.u32 [#allocation6], 4
      %s56 = int_to_ptr.vmem [resolvable:$true] %s55
      %58 = dma.hbm_to_vmem [thread:$0]  %s2, 16, %s56, [#allocation5]
    $region13: #{generator_forward.1} parent=1 // pred_fallthru
      _
    // Predicated region
    $region14: #{generator_forward.1} parent=1 // pred_check
      _
    $region15: #{generator_forward.1} parent=1 // pred_check_branch
      %60 = sbr.rel (0) target = $region17
    $region16: #{generator_forward.1} parent=1 // pred_region
      %s62 = ssub.s32 2048, 2048
      %63 = vsyncadd [#allocation8], %s62
      %s64 = sshll.u32 [#allocation7], 4
      %s65 = int_to_ptr.vmem [resolvable:$true] %s64
      %70 = dma.hbm_to_vmem [thread:$0]  %s3, 2048, %s65, [#allocation8], 128, 128, 8
    $region17: #{generator_forward.1} parent=1 // pred_fallthru
      _
    // Predicated region
    $region18: #{generator_forward.1} parent=1 // pred_check
      _
    $region19: #{generator_forward.1} parent=1 // pred_check_branch
      %72 = sbr.rel (0) target = $region21
    $region20: #{generator_forward.1} parent=1 // pred_region
      %s74 = ssub.s32 32, 32
      %75 = vsyncadd [#allocation8], %s74
      %s77 = sshll.u32 [#allocation9], 4
      %s78 = int_to_ptr.vmem [resolvable:$true] %s77
      %80 = dma.hbm_to_vmem [thread:$0]  %s4, 32, %s78, [#allocation8]
    $region21: #{generator_forward.1} parent=1 // pred_fallthru
      _
    // Predicated region
    $region22: #{generator_forward.1} parent=1 // pred_check
      _
    $region23: #{generator_forward.1} parent=1 // pred_check_branch
      %82 = sbr.rel (0) target = $region25
    $region24: #{generator_forward.1} parent=1 // pred_region
      %s84 = ssub.s32 32, 32
      %85 = vsyncadd [#allocation11], %s84
      %s87 = sshll.u32 [#allocation10], 4
      %s88 = int_to_ptr.vmem [resolvable:$true] %s87
      %90 = dma.hbm_to_vmem [thread:$0]  %s5, 32, %s88, [#allocation11]
    $region25: #{generator_forward.1} parent=1 // pred_fallthru
      _
    // Predicated region
    $region26: #{generator_forward.1} parent=1 // pred_check
      _
    $region27: #{generator_forward.1} parent=1 // pred_check_branch
      %92 = sbr.rel (0) target = $region29
    $region28: #{generator_forward.1} parent=1 // pred_region
      %s94 = ssub.s32 8192, 8192
      %95 = vsyncadd [#allocation11], %s94
      %s96 = sshll.u32 [#allocation12], 4
      %s97 = int_to_ptr.vmem [resolvable:$true] %s96
      %102 = dma.hbm_to_vmem [thread:$0]  %s6, 8192, %s97, [#allocation11], 256, 256, 16
    $region29: #{generator_forward.1} parent=1 // pred_fallthru
      _
    // Predicated region
    $region30: #{generator_forward.1} parent=1 // pred_check
      _
    $region31: #{generator_forward.1} parent=1 // pred_check_branch
      %104 = sbr.rel (0) target = $region33
    $region32: #{generator_forward.1} parent=1 // pred_region
      %s106 = ssub.s32 64, 64
      %107 = vsyncadd [#allocation14], %s106
      %s109 = sshll.u32 [#allocation13], 4
      %s110 = int_to_ptr.vmem [resolvable:$true] %s109
      %112 = dma.hbm_to_vmem [thread:$0]  %s7, 64, %s110, [#allocation14]
    $region33: #{generator_forward.1} parent=1 // pred_fallthru
      _
    // Predicated region
    $region34: #{generator_forward.1} parent=1 // pred_check
      _
    $region35: #{generator_forward.1} parent=1 // pred_check_branch
      %114 = sbr.rel (0) target = $region37
    $region36: #{generator_forward.1} parent=1 // pred_region
      %s116 = ssub.s32 64, 64
      %117 = vsyncadd [#allocation14], %s116
      %s119 = sshll.u32 [#allocation15], 4
      %s120 = int_to_ptr.vmem [resolvable:$true] %s119
      %122 = dma.hbm_to_vmem [thread:$0]  %s8, 64, %s120, [#allocation14]
    $region37: #{generator_forward.1} parent=1 // pred_fallthru
      _
    // Predicated region
    $region38: #{generator_forward.1} parent=1 // pred_check
      _
    $region39: #{generator_forward.1} parent=1 // pred_check_branch
      %124 = sbr.rel (0) target = $region41
    $region40: #{generator_forward.1} parent=1 // pred_region
      %s126 = ssub.s32 32768, 32768
      %127 = vsyncadd [#allocation17], %s126
      %s128 = sshll.u32 [#allocation16], 4
      %s129 = int_to_ptr.vmem [resolvable:$true] %s128
      %134 = dma.hbm_to_vmem [thread:$0]  %s9, 32768, %s129, [#allocation17], 512, 512, 32
    $region41: #{generator_forward.1} parent=1 // pred_fallthru
      _
    // Predicated region
    $region42: #{generator_forward.1} parent=1 // pred_check
      _
    $region43: #{generator_forward.1} parent=1 // pred_check_branch
      %136 = sbr.rel (0) target = $region45
    $region44: #{generator_forward.1} parent=1 // pred_region
      %s138 = ssub.s32 128, 128
      %139 = vsyncadd [#allocation17], %s138
      %s141 = sshll.u32 [#allocation18], 4
      %s142 = int_to_ptr.vmem [resolvable:$true] %s141
      %144 = dma.hbm_to_vmem [thread:$0]  %s10, 128, %s142, [#allocation17]
    $region45: #{generator_forward.1} parent=1 // pred_fallthru
      _
    // Predicated region
    $region46: #{generator_forward.1} parent=1 // pred_check
      _
    $region47: #{generator_forward.1} parent=1 // pred_check_branch
      %146 = sbr.rel (0) target = $region49
    $region48: #{generator_forward.1} parent=1 // pred_region
      %s148 = ssub.s32 128, 128
      %149 = vsyncadd [#allocation20], %s148
      %s151 = sshll.u32 [#allocation19], 4
      %s152 = int_to_ptr.vmem [resolvable:$true] %s151
      %154 = dma.hbm_to_vmem [thread:$0]  %s11, 128, %s152, [#allocation20]
    $region49: #{generator_forward.1} parent=1 // pred_fallthru
      _
    // Predicated region
    $region50: #{generator_forward.1} parent=1 // pred_check
      _
    $region51: #{generator_forward.1} parent=1 // pred_check_branch
      %156 = sbr.rel (0) target = $region53
    $region52: #{generator_forward.1} parent=1 // pred_region
      %s158 = ssub.s32 57344, 57344
      %159 = vsyncadd [#allocation20], %s158
      %s160 = sshll.u32 [#allocation21], 4
      %s161 = int_to_ptr.vmem [resolvable:$true] %s160
      %166 = dma.hbm_to_vmem [thread:$0]  %s12, 57344, %s161, [#allocation20], 448, 448, 28
    $region53: #{generator_forward.1} parent=1 // pred_fallthru
      _
    // Predicated region
    $region54: #{generator_forward.1} parent=1 // pred_check
      _
    $region55: #{generator_forward.1} parent=1 // pred_check_branch
      %168 = sbr.rel (0) target = $region57
    $region56: #{generator_forward.1} parent=1 // pred_region
      %s170 = ssub.s32 112, 112
      %171 = vsyncadd [#allocation23], %s170
      %s173 = sshll.u32 [#allocation22], 4
      %s174 = int_to_ptr.vmem [resolvable:$true] %s173
      %176 = dma.hbm_to_vmem [thread:$0]  %s13, 112, %s174, [#allocation23]
    $region57: #{generator_forward.1} parent=1 // pred_fallthru
      _
    // Predicated region
    $region58: #{generator_forward.1} parent=1 // pred_check
      _
    $region59: #{generator_forward.1} parent=1 // pred_check_branch
      %178 = sbr.rel (0) target = $region61
    $region60: #{generator_forward.1} parent=1 // pred_region
      %179 = dma.done [#allocation3], 128
    $region61: #{generator_forward.1} parent=1 // pred_fallthru
      _
    // Predicated region
    $region62: #{generator_forward.1} parent=1 // pred_check
      _
    $region63: #{generator_forward.1} parent=1 // pred_check_branch
      %181 = sbr.rel (0) target = $region65
    $region64: #{generator_forward.1} parent=1 // pred_region
      %182 = dma.done [#allocation5], 832
    $region65: #{generator_forward.1} parent=1 // pred_fallthru
      _
    // Predicated region
    $region66: #{generator_forward.1} parent=1 // pred_check
      _
    $region67: #{generator_forward.1} parent=1 // pred_check_branch
      %184 = sbr.rel (0) target = $region69
    $region68: #{generator_forward.1} parent=1 // pred_region
      %185 = dma.done [#allocation5], 16
    $region69: #{generator_forward.1} parent=1 // pred_fallthru
      _
    // Predicated region
    $region70: #{generator_forward.1} parent=1 // pred_check
      _
    $region71: #{generator_forward.1} parent=1 // pred_check_branch
      %187 = sbr.rel (0) target = $region73
    $region72: #{generator_forward.1} parent=1 // pred_region
      %188 = dma.done [#allocation8], 2048
    $region73: #{generator_forward.1} parent=1 // pred_fallthru
      _
    // Predicated region
    $region74: #{generator_forward.1} parent=1 // pred_check
      _
    $region75: #{generator_forward.1} parent=1 // pred_check_branch
      %190 = sbr.rel (0) target = $region77
    $region76: #{generator_forward.1} parent=1 // pred_region
      %191 = dma.done [#allocation8], 32
    $region77: #{generator_forward.1} parent=1 // pred_fallthru
      _
    // Predicated region
    $region78: #{generator_forward.1} parent=1 // pred_check
      _
    $region79: #{generator_forward.1} parent=1 // pred_check_branch
      %193 = sbr.rel (0) target = $region81
    $region80: #{generator_forward.1} parent=1 // pred_region
      %194 = dma.done [#allocation11], 32
    $region81: #{generator_forward.1} parent=1 // pred_fallthru
      _
    // Predicated region
    $region82: #{generator_forward.1} parent=1 // pred_check
      _
    $region83: #{generator_forward.1} parent=1 // pred_check_branch
      %196 = sbr.rel (0) target = $region85
    $region84: #{generator_forward.1} parent=1 // pred_region
      %197 = dma.done [#allocation11], 8192
    $region85: #{generator_forward.1} parent=1 // pred_fallthru
      _
    // Predicated region
    $region86: #{generator_forward.1} parent=1 // pred_check
      _
    $region87: #{generator_forward.1} parent=1 // pred_check_branch
      %199 = sbr.rel (0) target = $region89
    $region88: #{generator_forward.1} parent=1 // pred_region
      %200 = dma.done [#allocation14], 64
    $region89: #{generator_forward.1} parent=1 // pred_fallthru
      _
    // Predicated region
    $region90: #{generator_forward.1} parent=1 // pred_check
      _
    $region91: #{generator_forward.1} parent=1 // pred_check_branch
      %202 = sbr.rel (0) target = $region93
    $region92: #{generator_forward.1} parent=1 // pred_region
      %203 = dma.done [#allocation14], 64
    $region93: #{generator_forward.1} parent=1 // pred_fallthru
      _
    // Predicated region
    $region94: #{generator_forward.1} parent=1 // pred_check
      _
    $region95: #{generator_forward.1} parent=1 // pred_check_branch
      %205 = sbr.rel (0) target = $region97
    $region96: #{generator_forward.1} parent=1 // pred_region
      %206 = dma.done [#allocation17], 32768
    $region97: #{generator_forward.1} parent=1 // pred_fallthru
      _
    // Predicated region
    $region98: #{generator_forward.1} parent=1 // pred_check
      _
    $region99: #{generator_forward.1} parent=1 // pred_check_branch
      %208 = sbr.rel (0) target = $region101
    $region100: #{generator_forward.1} parent=1 // pred_region
      %209 = dma.done [#allocation17], 128
    $region101: #{generator_forward.1} parent=1 // pred_fallthru
      _
    // Predicated region
    $region102: #{generator_forward.1} parent=1 // pred_check
      _
    $region103: #{generator_forward.1} parent=1 // pred_check_branch
      %211 = sbr.rel (0) target = $region105
    $region104: #{generator_forward.1} parent=1 // pred_region
      %212 = dma.done [#allocation20], 128
    $region105: #{generator_forward.1} parent=1 // pred_fallthru
      _
    // Predicated region
    $region106: #{generator_forward.1} parent=1 // pred_check
      _
    $region107: #{generator_forward.1} parent=1 // pred_check_branch
      %214 = sbr.rel (0) target = $region109
    $region108: #{generator_forward.1} parent=1 // pred_region
      %215 = dma.done [#allocation20], 57344
    $region109: #{generator_forward.1} parent=1 // pred_fallthru
      _
    // Predicated region
    $region110: #{generator_forward.1} parent=1 // pred_check
      _
    $region111: #{generator_forward.1} parent=1 // pred_check_branch
      %217 = sbr.rel (0) target = $region113
    $region112: #{generator_forward.1} parent=1 // pred_region
      %218 = dma.done [#allocation23], 112
    $region113: #{generator_forward.1} parent=1 // pred_fallthru
      _
    %v220 = vld [vmem:[#allocation2] sm:$0xff]
    %v221 = vpack.c.bf16 %v220, %v220
    %v222 = vld [vmem:[#allocation4] sm:$0xf]
    %v223 = vld [vmem:[#allocation4 + $0x4] sm:$0xf]
    %v224 = vld [vmem:[#allocation4 + $0x8] sm:$0xf]
    %v225 = vld [vmem:[#allocation4 + $0xc] sm:$0xf]
    %v226 = vld [vmem:[#allocation4 + $0x10] sm:$0xf]
    %v227 = vld [vmem:[#allocation4 + $0x14] sm:$0xf]
    %v228 = vld [vmem:[#allocation4 + $0x18] sm:$0xf]
    %v229 = vld [vmem:[#allocation4 + $0x1c] sm:$0xf]
    %v230 = vld [vmem:[#allocation4 + $0x20] sm:$0xf]
    %v231 = vld [vmem:[#allocation4 + $0x24] sm:$0xf]
    %v232 = vld [vmem:[#allocation4 + $0x28] sm:$0xf]
    %v233 = vld [vmem:[#allocation4 + $0x2c] sm:$0xf]
    %v234 = vld [vmem:[#allocation4 + $0x30] sm:$0x3]
    %v235 = vld [vmem:[#allocation6] sm:$0x1]
    %v237 = vlaneseq
    %v238 = vshrl.u32 %v237, 7
    %v239 = vsub.s32 0, %v238
    %v240 = vrot.slane %v235, %v239
    %v255 = vunpack.c.l.b16 %v222
    %v256 = vunpack.c.l.b16 %v223
    %v257 = vunpack.c.l.b16 %v224
    %v258 = vunpack.c.l.b16 %v225
    %v259 = vunpack.c.l.b16 %v226
    %v260 = vunpack.c.l.b16 %v227
    %v261 = vunpack.c.l.b16 %v228
    %v262 = vunpack.c.l.b16 %v229
    %v263 = vunpack.c.l.b16 %v230
    %v264 = vunpack.c.l.b16 %v231
    %v265 = vunpack.c.l.b16 %v232
    %v266 = vunpack.c.l.b16 %v233
    %v267 = vunpack.c.l.b16 %v234
    %v268 = vpack.c.b16 %v256, %v255
    %v269 = vpack.c.b16 %v258, %v257
    %v270 = vpack.c.b16 %v260, %v259
    %v271 = vpack.c.b16 %v262, %v261
    %v272 = vpack.c.b16 %v264, %v263
    %v273 = vpack.c.b16 %v266, %v265
    %v274 = vpack.c.b16 %v267, %v267
    %vm281 = vcmask 818176
    %v283 = vsel %vm281, %v221, 0
    %vm285 = vcmask 1041408
    %v287 = vsel %vm285, %v274, 0
    %289 = vmatprep.subr.bf16.mxu0 0
    %290 = vmatpush1.bf16.msra.mxu0 %v268
    %291 = vmatprep.subr.bf16.mxu0 0
    %292 = vmatpush1.bf16.msra.mxu0 %v269
    %293 = vmatprep.subr.bf16.mxu0 0
    %294 = vmatpush1.bf16.msra.mxu0 %v270
    %295 = vmatprep.subr.bf16.mxu0 0
    %296 = vmatpush1.bf16.msra.mxu0 %v271
    %297 = vmatprep.subr.bf16.mxu0 0
    %298 = vmatpush1.bf16.msra.mxu0 %v272
    %299 = vmatprep.subr.bf16.mxu0 0
    %300 = vmatpush1.bf16.msra.mxu0 %v273
    %301 = vmatprep.subr.bf16.mxu0 0
    %302 = vmatpush1.bf16.msra.mxu0 %v287
    %303 = vmatprep.subr.bf16.mxu0 0
    %304 = vmatpush1.bf16.msra.mxu0 0
    %305 = vmatprep.subr.bf16.mxu0 0
    %306 = vmatpush1.bf16.msra.mxu0 0
    %307 = vmatprep.subr.bf16.mxu0 0
    %308 = vmatpush1.bf16.msra.mxu0 0
    %309 = vmatprep.subr.bf16.mxu0 0
    %310 = vmatpush1.bf16.msra.mxu0 0
    %311 = vmatprep.subr.bf16.mxu0 0
    %312 = vmatpush1.bf16.msra.mxu0 0
    %313 = vmatprep.subr.bf16.mxu0 0
    %314 = vmatpush1.bf16.msra.mxu0 0
    %315 = vmatprep.subr.bf16.mxu0 0
    %316 = vmatpush1.bf16.msra.mxu0 0
    %317 = vmatprep.subr.bf16.mxu0 0
    %318 = vmatpush1.bf16.msra.mxu0 0
    %319 = vmatprep.subr.bf16.mxu0 0
    %320 = vmatpush1.bf16.msra.mxu0 0
    %321 = vmatprep.mubr.bf16.mxu0 0
    %322 = vmatmul.mubr.bf16.gmra.mrb[0].mxu0 %v283
    %v323 = vpop.f32.mrb[0].mxu0
    %v324 = vadd.f32 %v240, %v323
    %v325 = vpop.f32.mrb[0].mxu0
    %v326 = vpop.f32.mrb[0].mxu0
    %v327 = vpop.f32.mrb[0].mxu0
    %328 = vdwg.mxu0
    %vm329 = vcmp.gt.f32.partialorder %v324, 0.0
    %v330 = vmul.f32 %v324, 0.2
    %v331 = vsel %vm329, %v324, %v330
    %v332 = vpack.c.bf16 %v331, %v331
    %v333 = vld [vmem:[#allocation7] sm:$0xff]
    %v334 = vld [vmem:[#allocation7 + $0x8] sm:$0xff]
    %v335 = vld [vmem:[#allocation7 + $0x10] sm:$0xff]
    %v336 = vld [vmem:[#allocation7 + $0x18] sm:$0xff]
    %v337 = vld [vmem:[#allocation7 + $0x20] sm:$0xff]
    %v338 = vld [vmem:[#allocation7 + $0x28] sm:$0xff]
    %v339 = vld [vmem:[#allocation7 + $0x30] sm:$0xff]
    %v340 = vld [vmem:[#allocation7 + $0x38] sm:$0xff]
    %v341 = vld [vmem:[#allocation7 + $0x40] sm:$0xff]
    %v342 = vld [vmem:[#allocation7 + $0x48] sm:$0xff]
    %v343 = vld [vmem:[#allocation7 + $0x50] sm:$0xff]
    %v344 = vld [vmem:[#allocation7 + $0x58] sm:$0xff]
    %v345 = vld [vmem:[#allocation7 + $0x60] sm:$0xff]
    %v346 = vld [vmem:[#allocation7 + $0x68] sm:$0xff]
    %v347 = vld [vmem:[#allocation7 + $0x70] sm:$0xff]
    %v348 = vld [vmem:[#allocation7 + $0x78] sm:$0xff]
    %v365 = vunpack.c.l.b16 %v333
    %v366 = vunpack.c.h.b16 %v333
    %v367 = vunpack.c.l.b16 %v334
    %v368 = vunpack.c.h.b16 %v334
    %v369 = vunpack.c.l.b16 %v335
    %v370 = vunpack.c.h.b16 %v335
    %v371 = vunpack.c.l.b16 %v336
    %v372 = vunpack.c.h.b16 %v336
    %v373 = vunpack.c.l.b16 %v337
    %v374 = vunpack.c.h.b16 %v337
    %v375 = vunpack.c.l.b16 %v338
    %v376 = vunpack.c.h.b16 %v338
    %v377 = vunpack.c.l.b16 %v339
    %v378 = vunpack.c.h.b16 %v339
    %v379 = vunpack.c.l.b16 %v340
    %v380 = vunpack.c.h.b16 %v340
    %v381 = vunpack.c.l.b16 %v341
    %v382 = vunpack.c.h.b16 %v341
    %v383 = vunpack.c.l.b16 %v342
    %v384 = vunpack.c.h.b16 %v342
    %v385 = vunpack.c.l.b16 %v343
    %v386 = vunpack.c.h.b16 %v343
    %v387 = vunpack.c.l.b16 %v344
    %v388 = vunpack.c.h.b16 %v344
    %v389 = vunpack.c.l.b16 %v345
    %v390 = vunpack.c.h.b16 %v345
    %v391 = vunpack.c.l.b16 %v346
    %v392 = vunpack.c.h.b16 %v346
    %v393 = vunpack.c.l.b16 %v347
    %v394 = vunpack.c.h.b16 %v347
    %v395 = vunpack.c.l.b16 %v348
    %v396 = vunpack.c.h.b16 %v348
    %v397 = vpack.c.b16 %v367, %v365
    %v398 = vpack.c.b16 %v368, %v366
    %v399 = vpack.c.b16 %v371, %v369
    %v400 = vpack.c.b16 %v372, %v370
    %v401 = vpack.c.b16 %v375, %v373
    %v402 = vpack.c.b16 %v376, %v374
    %v403 = vpack.c.b16 %v379, %v377
    %v404 = vpack.c.b16 %v380, %v378
    %v405 = vpack.c.b16 %v383, %v381
    %v406 = vpack.c.b16 %v384, %v382
    %v407 = vpack.c.b16 %v387, %v385
    %v408 = vpack.c.b16 %v388, %v386
    %v409 = vpack.c.b16 %v391, %v389
    %v410 = vpack.c.b16 %v392, %v390
    %v411 = vpack.c.b16 %v395, %v393
    %v412 = vpack.c.b16 %v396, %v394
    %429 = vmatprep.subr.bf16.mxu0 %v398
    %430 = vmatpush1.bf16.msra.mxu0 %v397
    %431 = vmatprep.subr.bf16.mxu0 %v400
    %432 = vmatpush1.bf16.msra.mxu0 %v399
    %433 = vmatprep.subr.bf16.mxu0 %v402
    %434 = vmatpush1.bf16.msra.mxu0 %v401
    %435 = vmatprep.subr.bf16.mxu0 %v404
    %436 = vmatpush1.bf16.msra.mxu0 %v403
    %437 = vmatprep.subr.bf16.mxu0 %v406
    %438 = vmatpush1.bf16.msra.mxu0 %v405
    %439 = vmatprep.subr.bf16.mxu0 %v408
    %440 = vmatpush1.bf16.msra.mxu0 %v407
    %441 = vmatprep.subr.bf16.mxu0 %v410
    %442 = vmatpush1.bf16.msra.mxu0 %v409
    %443 = vmatprep.subr.bf16.mxu0 %v412
    %444 = vmatpush1.bf16.msra.mxu0 %v411
    %445 = vmatprep.subr.bf16.mxu0 0
    %446 = vmatpush1.bf16.msra.mxu0 0
    %447 = vmatprep.subr.bf16.mxu0 0
    %448 = vmatpush1.bf16.msra.mxu0 0
    %449 = vmatprep.subr.bf16.mxu0 0
    %450 = vmatpush1.bf16.msra.mxu0 0
    %451 = vmatprep.subr.bf16.mxu0 0
    %452 = vmatpush1.bf16.msra.mxu0 0
    %453 = vmatprep.subr.bf16.mxu0 0
    %454 = vmatpush1.bf16.msra.mxu0 0
    %455 = vmatprep.subr.bf16.mxu0 0
    %456 = vmatpush1.bf16.msra.mxu0 0
    %457 = vmatprep.subr.bf16.mxu0 0
    %458 = vmatpush1.bf16.msra.mxu0 0
    %459 = vmatprep.subr.bf16.mxu0 0
    %460 = vmatpush1.bf16.msra.mxu0 0
    %461 = vmatprep.mubr.bf16.mxu0 0
    %462 = vmatmul.mubr.bf16.gmra.mrb[0].mxu0 %v332
    %v463 = vpop.f32.mrb[0].mxu0
    %v464 = vadd.f32 0.0, %v463
    %v465 = vpop.f32.mrb[0].mxu0
    %v466 = vadd.f32 0.0, %v465
    %v467 = vpop.f32.mrb[0].mxu0
    %v468 = vpop.f32.mrb[0].mxu0
    %469 = vdwg.mxu0
    %v470 = vrot.slane %v464, 4
    %v471 = vadd.f32 %v464, %v470
    %v472 = vrot.slane %v471, 2
    %v473 = vadd.f32 %v471, %v472
    %v474 = vrot.slane %v473, 1
    %v475 = vadd.f32 %v473, %v474
    %v476 = vrot.slane %v466, 4
    %v477 = vadd.f32 %v466, %v476
    %v478 = vrot.slane %v477, 2
    %v479 = vadd.f32 %v477, %v478
    %v480 = vrot.slane %v479, 1
    %v481 = vadd.f32 %v479, %v480
    %v482 = vrcp.pop 8.0
    %v483 = vmul.f32 %v475, %v482
    %v484 = vmul.f32 %v481, %v482
    %v485 = vsub.f32 %v464, %v483
    %v486 = vsub.f32 %v466, %v484
    %v487 = vmul.f32 %v485, %v485
    %v488 = vmul.f32 %v486, %v486
    %v489 = vrot.slane %v487, 4
    %v490 = vadd.f32 %v487, %v489
    %v491 = vrot.slane %v490, 2
    %v492 = vadd.f32 %v490, %v491
    %v493 = vrot.slane %v492, 1
    %v494 = vadd.f32 %v492, %v493
    %v495 = vrot.slane %v488, 4
    %v496 = vadd.f32 %v488, %v495
    %v497 = vrot.slane %v496, 2
    %v498 = vadd.f32 %v496, %v497
    %v499 = vrot.slane %v498, 1
    %v500 = vadd.f32 %v498, %v499
    %v501 = vmul.f32 %v494, %v482
    %v502 = vmul.f32 %v500, %v482
    %v503 = vld [vmem:[#allocation9] sm:$0x3]
    %v504 = vadd.f32 %v501, 0.8
    %v505 = vadd.f32 %v502, 0.8
    %v506 = vrsqrt.pop %v504
    %v507 = vrsqrt.pop %v505
    %v510 = vcombine.low %v506, %v507
    %v512 = vunpack.c.l.s4 1966171168
    %v513 = vunpack.c.0.s8 %v512
    %v514 = vlaneseq
    %v515 = vshrl.u32 %v514, 7
    %v516 = vsub.s32 %v513, %v515
    %v517 = vrot.slane %v510, %v516
    %v519 = vunpack.c.l.s4 1966171168
    %v520 = vunpack.c.0.s8 %v519
    %v521 = vlaneseq
    %v522 = vshrl.u32 %v521, 7
    %v523 = vsub.s32 %v520, %v522
    %v524 = vrot.slane %v517, %v523
    %v526 = vmul.f32 %v503, %v524
    %v527 = vld [vmem:[#allocation10] sm:$0x3]
    %v529 = vlaneseq
    %v530 = vshrl.u32 %v529, 7
    %v531 = vsub.s32 0, %v530
    %v532 = vrot.slane %v526, %v531
    %v533 = vlaneseq
    %v534 = vshrl.u32 %v533, 7
    %v535 = vsub.s32 1, %v534
    %v536 = vrot.slane %v526, %v535
    %v539 = vmul.f32 %v483, %v532
    %v540 = vmul.f32 %v484, %v536
    %v543 = vcombine.low %v539, %v540
    %v545 = vunpack.c.l.s4 1966171168
    %v546 = vunpack.c.0.s8 %v545
    %v547 = vlaneseq
    %v548 = vshrl.u32 %v547, 7
    %v549 = vsub.s32 %v546, %v548
    %v550 = vrot.slane %v543, %v549
    %v552 = vunpack.c.l.s4 1966171168
    %v553 = vunpack.c.0.s8 %v552
    %v554 = vlaneseq
    %v555 = vshrl.u32 %v554, 7
    %v556 = vsub.s32 %v553, %v555
    %v557 = vrot.slane %v550, %v556
    %v559 = vsub.f32 %v527, %v557
    %v560 = vmul.f32 %v464, %v532
    %v561 = vmul.f32 %v466, %v536
    %v563 = vlaneseq
    %v564 = vshrl.u32 %v563, 7
    %v565 = vsub.s32 0, %v564
    %v566 = vrot.slane %v559, %v565
    %v567 = vlaneseq
    %v568 = vshrl.u32 %v567, 7
    %v569 = vsub.s32 1, %v568
    %v570 = vrot.slane %v559, %v569
    %v573 = vadd.f32 %v560, %v566
    %v574 = vadd.f32 %v561, %v570
    %vm575 = vcmp.gt.f32.partialorder %v573, 0.0
    %vm576 = vcmp.gt.f32.partialorder %v574, 0.0
    %v577 = vmul.f32 %v573, 0.2
    %v578 = vmul.f32 %v574, 0.2
    %v579 = vsel %vm575, %v573, %v577
    %v580 = vsel %vm576, %v574, %v578
    %v581 = vpack.c.bf16 %v579, %v579
    %v582 = vpack.c.bf16 %v580, %v580
    %v583 = vld [vmem:[#allocation12] sm:$0xff]
    %v584 = vld [vmem:[#allocation12 + $0x8] sm:$0xff]
    %v585 = vld [vmem:[#allocation12 + $0x10] sm:$0xff]
    %v586 = vld [vmem:[#allocation12 + $0x18] sm:$0xff]
    %v587 = vld [vmem:[#allocation12 + $0x20] sm:$0xff]
    %v588 = vld [vmem:[#allocation12 + $0x28] sm:$0xff]
    %v589 = vld [vmem:[#allocation12 + $0x30] sm:$0xff]
    %v590 = vld [vmem:[#allocation12 + $0x38] sm:$0xff]
    %v591 = vld [vmem:[#allocation12 + $0x40] sm:$0xff]
    %v592 = vld [vmem:[#allocation12 + $0x48] sm:$0xff]
    %v593 = vld [vmem:[#allocation12 + $0x50] sm:$0xff]
    %v594 = vld [vmem:[#allocation12 + $0x58] sm:$0xff]
    %v595 = vld [vmem:[#allocation12 + $0x60] sm:$0xff]
    %v596 = vld [vmem:[#allocation12 + $0x68] sm:$0xff]
    %v597 = vld [vmem:[#allocation12 + $0x70] sm:$0xff]
    %v598 = vld [vmem:[#allocation12 + $0x78] sm:$0xff]
    %v599 = vld [vmem:[#allocation12 + $0x80] sm:$0xff]
    %v600 = vld [vmem:[#allocation12 + $0x88] sm:$0xff]
    %v601 = vld [vmem:[#allocation12 + $0x90] sm:$0xff]
    %v602 = vld [vmem:[#allocation12 + $0x98] sm:$0xff]
    %v603 = vld [vmem:[#allocation12 + $0xa0] sm:$0xff]
    %v604 = vld [vmem:[#allocation12 + $0xa8] sm:$0xff]
    %v605 = vld [vmem:[#allocation12 + $0xb0] sm:$0xff]
    %v606 = vld [vmem:[#allocation12 + $0xb8] sm:$0xff]
    %v607 = vld [vmem:[#allocation12 + $0xc0] sm:$0xff]
    %v608 = vld [vmem:[#allocation12 + $0xc8] sm:$0xff]
    %v609 = vld [vmem:[#allocation12 + $0xd0] sm:$0xff]
    %v610 = vld [vmem:[#allocation12 + $0xd8] sm:$0xff]
    %v611 = vld [vmem:[#allocation12 + $0xe0] sm:$0xff]
    %v612 = vld [vmem:[#allocation12 + $0xe8] sm:$0xff]
    %v613 = vld [vmem:[#allocation12 + $0xf0] sm:$0xff]
    %v614 = vld [vmem:[#allocation12 + $0xf8] sm:$0xff]
    %v615 = vld [vmem:[#allocation12 + $0x100] sm:$0xff]
    %v616 = vld [vmem:[#allocation12 + $0x108] sm:$0xff]
    %v617 = vld [vmem:[#allocation12 + $0x110] sm:$0xff]
    %v618 = vld [vmem:[#allocation12 + $0x118] sm:$0xff]
    %v619 = vld [vmem:[#allocation12 + $0x120] sm:$0xff]
    %v620 = vld [vmem:[#allocation12 + $0x128] sm:$0xff]
    %v621 = vld [vmem:[#allocation12 + $0x130] sm:$0xff]
    %v622 = vld [vmem:[#allocation12 + $0x138] sm:$0xff]
    %v623 = vld [vmem:[#allocation12 + $0x140] sm:$0xff]
    %v624 = vld [vmem:[#allocation12 + $0x148] sm:$0xff]
    %v625 = vld [vmem:[#allocation12 + $0x150] sm:$0xff]
    %v626 = vld [vmem:[#allocation12 + $0x158] sm:$0xff]
    %v627 = vld [vmem:[#allocation12 + $0x160] sm:$0xff]
    %v628 = vld [vmem:[#allocation12 + $0x168] sm:$0xff]
    %v629 = vld [vmem:[#allocation12 + $0x170] sm:$0xff]
    %v630 = vld [vmem:[#allocation12 + $0x178] sm:$0xff]
    %v631 = vld [vmem:[#allocation12 + $0x180] sm:$0xff]
    %v632 = vld [vmem:[#allocation12 + $0x188] sm:$0xff]
    %v633 = vld [vmem:[#allocation12 + $0x190] sm:$0xff]
    %v634 = vld [vmem:[#allocation12 + $0x198] sm:$0xff]
    %v635 = vld [vmem:[#allocation12 + $0x1a0] sm:$0xff]
    %v636 = vld [vmem:[#allocation12 + $0x1a8] sm:$0xff]
    %v637 = vld [vmem:[#allocation12 + $0x1b0] sm:$0xff]
    %v638 = vld [vmem:[#allocation12 + $0x1b8] sm:$0xff]
    %v639 = vld [vmem:[#allocation12 + $0x1c0] sm:$0xff]
    %v640 = vld [vmem:[#allocation12 + $0x1c8] sm:$0xff]
    %v641 = vld [vmem:[#allocation12 + $0x1d0] sm:$0xff]
    %v642 = vld [vmem:[#allocation12 + $0x1d8] sm:$0xff]
    %v643 = vld [vmem:[#allocation12 + $0x1e0] sm:$0xff]
    %v644 = vld [vmem:[#allocation12 + $0x1e8] sm:$0xff]
    %v645 = vld [vmem:[#allocation12 + $0x1f0] sm:$0xff]
    %v646 = vld [vmem:[#allocation12 + $0x1f8] sm:$0xff]
    %v711 = vunpack.c.l.b16 %v583
    %v712 = vunpack.c.h.b16 %v583
    %v713 = vunpack.c.l.b16 %v584
    %v714 = vunpack.c.h.b16 %v584
    %v715 = vunpack.c.l.b16 %v585
    %v716 = vunpack.c.h.b16 %v585
    %v717 = vunpack.c.l.b16 %v586
    %v718 = vunpack.c.h.b16 %v586
    %v719 = vunpack.c.l.b16 %v587
    %v720 = vunpack.c.h.b16 %v587
    %v721 = vunpack.c.l.b16 %v588
    %v722 = vunpack.c.h.b16 %v588
    %v723 = vunpack.c.l.b16 %v589
    %v724 = vunpack.c.h.b16 %v589
    %v725 = vunpack.c.l.b16 %v590
    %v726 = vunpack.c.h.b16 %v590
    %v727 = vunpack.c.l.b16 %v591
    %v728 = vunpack.c.h.b16 %v591
    %v729 = vunpack.c.l.b16 %v592
    %v730 = vunpack.c.h.b16 %v592
    %v731 = vunpack.c.l.b16 %v593
    %v732 = vunpack.c.h.b16 %v593
    %v733 = vunpack.c.l.b16 %v594
    %v734 = vunpack.c.h.b16 %v594
    %v735 = vunpack.c.l.b16 %v595
    %v736 = vunpack.c.h.b16 %v595
    %v737 = vunpack.c.l.b16 %v596
    %v738 = vunpack.c.h.b16 %v596
    %v739 = vunpack.c.l.b16 %v597
    %v740 = vunpack.c.h.b16 %v597
    %v741 = vunpack.c.l.b16 %v598
    %v742 = vunpack.c.h.b16 %v598
    %v743 = vunpack.c.l.b16 %v599
    %v744 = vunpack.c.h.b16 %v599
    %v745 = vunpack.c.l.b16 %v600
    %v746 = vunpack.c.h.b16 %v600
    %v747 = vunpack.c.l.b16 %v601
    %v748 = vunpack.c.h.b16 %v601
    %v749 = vunpack.c.l.b16 %v602
    %v750 = vunpack.c.h.b16 %v602
    %v751 = vunpack.c.l.b16 %v603
    %v752 = vunpack.c.h.b16 %v603
    %v753 = vunpack.c.l.b16 %v604
    %v754 = vunpack.c.h.b16 %v604
    %v755 = vunpack.c.l.b16 %v605
    %v756 = vunpack.c.h.b16 %v605
    %v757 = vunpack.c.l.b16 %v606
    %v758 = vunpack.c.h.b16 %v606
    %v759 = vunpack.c.l.b16 %v607
    %v760 = vunpack.c.h.b16 %v607
    %v761 = vunpack.c.l.b16 %v608
    %v762 = vunpack.c.h.b16 %v608
    %v763 = vunpack.c.l.b16 %v609
    %v764 = vunpack.c.h.b16 %v609
    %v765 = vunpack.c.l.b16 %v610
    %v766 = vunpack.c.h.b16 %v610
    %v767 = vunpack.c.l.b16 %v611
    %v768 = vunpack.c.h.b16 %v611
    %v769 = vunpack.c.l.b16 %v612
    %v770 = vunpack.c.h.b16 %v612
    %v771 = vunpack.c.l.b16 %v613
    %v772 = vunpack.c.h.b16 %v613
    %v773 = vunpack.c.l.b16 %v614
    %v774 = vunpack.c.h.b16 %v614
    %v775 = vunpack.c.l.b16 %v615
    %v776 = vunpack.c.h.b16 %v615
    %v777 = vunpack.c.l.b16 %v616
    %v778 = vunpack.c.h.b16 %v616
    %v779 = vunpack.c.l.b16 %v617
    %v780 = vunpack.c.h.b16 %v617
    %v781 = vunpack.c.l.b16 %v618
    %v782 = vunpack.c.h.b16 %v618
    %v783 = vunpack.c.l.b16 %v619
    %v784 = vunpack.c.h.b16 %v619
    %v785 = vunpack.c.l.b16 %v620
    %v786 = vunpack.c.h.b16 %v620
    %v787 = vunpack.c.l.b16 %v621
    %v788 = vunpack.c.h.b16 %v621
    %v789 = vunpack.c.l.b16 %v622
    %v790 = vunpack.c.h.b16 %v622
    %v791 = vunpack.c.l.b16 %v623
    %v792 = vunpack.c.h.b16 %v623
    %v793 = vunpack.c.l.b16 %v624
    %v794 = vunpack.c.h.b16 %v624
    %v795 = vunpack.c.l.b16 %v625
    %v796 = vunpack.c.h.b16 %v625
    %v797 = vunpack.c.l.b16 %v626
    %v798 = vunpack.c.h.b16 %v626
    %v799 = vunpack.c.l.b16 %v627
    %v800 = vunpack.c.h.b16 %v627
    %v801 = vunpack.c.l.b16 %v628
    %v802 = vunpack.c.h.b16 %v628
    %v803 = vunpack.c.l.b16 %v629
    %v804 = vunpack.c.h.b16 %v629
    %v805 = vunpack.c.l.b16 %v630
    %v806 = vunpack.c.h.b16 %v630
    %v807 = vunpack.c.l.b16 %v631
    %v808 = vunpack.c.h.b16 %v631
    %v809 = vunpack.c.l.b16 %v632
    %v810 = vunpack.c.h.b16 %v632
    %v811 = vunpack.c.l.b16 %v633
    %v812 = vunpack.c.h.b16 %v633
    %v813 = vunpack.c.l.b16 %v634
    %v814 = vunpack.c.h.b16 %v634
    %v815 = vunpack.c.l.b16 %v635
    %v816 = vunpack.c.h.b16 %v635
    %v817 = vunpack.c.l.b16 %v636
    %v818 = vunpack.c.h.b16 %v636
    %v819 = vunpack.c.l.b16 %v637
    %v820 = vunpack.c.h.b16 %v637
    %v821 = vunpack.c.l.b16 %v638
    %v822 = vunpack.c.h.b16 %v638
    %v823 = vunpack.c.l.b16 %v639
    %v824 = vunpack.c.h.b16 %v639
    %v825 = vunpack.c.l.b16 %v640
    %v826 = vunpack.c.h.b16 %v640
    %v827 = vunpack.c.l.b16 %v641
    %v828 = vunpack.c.h.b16 %v641
    %v829 = vunpack.c.l.b16 %v642
    %v830 = vunpack.c.h.b16 %v642
    %v831 = vunpack.c.l.b16 %v643
    %v832 = vunpack.c.h.b16 %v643
    %v833 = vunpack.c.l.b16 %v644
    %v834 = vunpack.c.h.b16 %v644
    %v835 = vunpack.c.l.b16 %v645
    %v836 = vunpack.c.h.b16 %v645
    %v837 = vunpack.c.l.b16 %v646
    %v838 = vunpack.c.h.b16 %v646
    %v839 = vpack.c.b16 %v715, %v711
    %v840 = vpack.c.b16 %v716, %v712
    %v841 = vpack.c.b16 %v717, %v713
    %v842 = vpack.c.b16 %v718, %v714
    %v843 = vpack.c.b16 %v723, %v719
    %v844 = vpack.c.b16 %v724, %v720
    %v845 = vpack.c.b16 %v725, %v721
    %v846 = vpack.c.b16 %v726, %v722
    %v847 = vpack.c.b16 %v731, %v727
    %v848 = vpack.c.b16 %v732, %v728
    %v849 = vpack.c.b16 %v733, %v729
    %v850 = vpack.c.b16 %v734, %v730
    %v851 = vpack.c.b16 %v739, %v735
    %v852 = vpack.c.b16 %v740, %v736
    %v853 = vpack.c.b16 %v741, %v737
    %v854 = vpack.c.b16 %v742, %v738
    %v855 = vpack.c.b16 %v747, %v743
    %v856 = vpack.c.b16 %v748, %v744
    %v857 = vpack.c.b16 %v749, %v745
    %v858 = vpack.c.b16 %v750, %v746
    %v859 = vpack.c.b16 %v755, %v751
    %v860 = vpack.c.b16 %v756, %v752
    %v861 = vpack.c.b16 %v757, %v753
    %v862 = vpack.c.b16 %v758, %v754
    %v863 = vpack.c.b16 %v763, %v759
    %v864 = vpack.c.b16 %v764, %v760
    %v865 = vpack.c.b16 %v765, %v761
    %v866 = vpack.c.b16 %v766, %v762
    %v867 = vpack.c.b16 %v771, %v767
    %v868 = vpack.c.b16 %v772, %v768
    %v869 = vpack.c.b16 %v773, %v769
    %v870 = vpack.c.b16 %v774, %v770
    %v871 = vpack.c.b16 %v779, %v775
    %v872 = vpack.c.b16 %v780, %v776
    %v873 = vpack.c.b16 %v781, %v777
    %v874 = vpack.c.b16 %v782, %v778
    %v875 = vpack.c.b16 %v787, %v783
    %v876 = vpack.c.b16 %v788, %v784
    %v877 = vpack.c.b16 %v789, %v785
    %v878 = vpack.c.b16 %v790, %v786
    %v879 = vpack.c.b16 %v795, %v791
    %v880 = vpack.c.b16 %v796, %v792
    %v881 = vpack.c.b16 %v797, %v793
    %v882 = vpack.c.b16 %v798, %v794
    %v883 = vpack.c.b16 %v803, %v799
    %v884 = vpack.c.b16 %v804, %v800
    %v885 = vpack.c.b16 %v805, %v801
    %v886 = vpack.c.b16 %v806, %v802
    %v887 = vpack.c.b16 %v811, %v807
    %v888 = vpack.c.b16 %v812, %v808
    %v889 = vpack.c.b16 %v813, %v809
    %v890 = vpack.c.b16 %v814, %v810
    %v891 = vpack.c.b16 %v819, %v815
    %v892 = vpack.c.b16 %v820, %v816
    %v893 = vpack.c.b16 %v821, %v817
    %v894 = vpack.c.b16 %v822, %v818
    %v895 = vpack.c.b16 %v827, %v823
    %v896 = vpack.c.b16 %v828, %v824
    %v897 = vpack.c.b16 %v829, %v825
    %v898 = vpack.c.b16 %v830, %v826
    %v899 = vpack.c.b16 %v835, %v831
    %v900 = vpack.c.b16 %v836, %v832
    %v901 = vpack.c.b16 %v837, %v833
    %v902 = vpack.c.b16 %v838, %v834
    %967 = vmatprep.subr.bf16.mxu0 %v840
    %968 = vmatpush1.bf16.msra.mxu0 %v839
    %969 = vmatprep.subr.bf16.mxu0 %v844
    %970 = vmatpush1.bf16.msra.mxu0 %v843
    %971 = vmatprep.subr.bf16.mxu0 %v848
    %972 = vmatpush1.bf16.msra.mxu0 %v847
    %973 = vmatprep.subr.bf16.mxu0 %v852
    %974 = vmatpush1.bf16.msra.mxu0 %v851
    %975 = vmatprep.subr.bf16.mxu0 %v856
    %976 = vmatpush1.bf16.msra.mxu0 %v855
    %977 = vmatprep.subr.bf16.mxu0 %v860
    %978 = vmatpush1.bf16.msra.mxu0 %v859
    %979 = vmatprep.subr.bf16.mxu0 %v864
    %980 = vmatpush1.bf16.msra.mxu0 %v863
    %981 = vmatprep.subr.bf16.mxu0 %v868
    %982 = vmatpush1.bf16.msra.mxu0 %v867
    %983 = vmatprep.subr.bf16.mxu0 %v872
    %984 = vmatpush1.bf16.msra.mxu0 %v871
    %985 = vmatprep.subr.bf16.mxu0 %v876
    %986 = vmatpush1.bf16.msra.mxu0 %v875
    %987 = vmatprep.subr.bf16.mxu0 %v880
    %988 = vmatpush1.bf16.msra.mxu0 %v879
    %989 = vmatprep.subr.bf16.mxu0 %v884
    %990 = vmatpush1.bf16.msra.mxu0 %v883
    %991 = vmatprep.subr.bf16.mxu0 %v888
    %992 = vmatpush1.bf16.msra.mxu0 %v887
    %993 = vmatprep.subr.bf16.mxu0 %v892
    %994 = vmatpush1.bf16.msra.mxu0 %v891
    %995 = vmatprep.subr.bf16.mxu0 %v896
    %996 = vmatpush1.bf16.msra.mxu0 %v895
    %997 = vmatprep.subr.bf16.mxu0 %v900
    %998 = vmatpush1.bf16.msra.mxu0 %v899
    %999 = vmatprep.mubr.bf16.mxu0 %v582
    %1000 = vmatmul.mubr.bf16.gmra.mrb[0].mxu0 %v581
    %v1001 = vpop.f32.mrb[0].mxu0
    %v1002 = vadd.f32 0.0, %v1001
    %v1003 = vpop.f32.mrb[0].mxu0
    %v1004 = vadd.f32 0.0, %v1003
    %v1005 = vpop.f32.mrb[0].mxu0
    %v1006 = vpop.f32.mrb[0].mxu0
    %1007 = vdwg.mxu0
    %1008 = vmatprep.subr.bf16.mxu0 %v842
    %1009 = vmatpush1.bf16.msra.mxu0 %v841
    %1010 = vmatprep.subr.bf16.mxu0 %v846
    %1011 = vmatpush1.bf16.msra.mxu0 %v845
    %1012 = vmatprep.subr.bf16.mxu0 %v850
    %1013 = vmatpush1.bf16.msra.mxu0 %v849
    %1014 = vmatprep.subr.bf16.mxu0 %v854
    %1015 = vmatpush1.bf16.msra.mxu0 %v853
    %1016 = vmatprep.subr.bf16.mxu0 %v858
    %1017 = vmatpush1.bf16.msra.mxu0 %v857
    %1018 = vmatprep.subr.bf16.mxu0 %v862
    %1019 = vmatpush1.bf16.msra.mxu0 %v861
    %1020 = vmatprep.subr.bf16.mxu0 %v866
    %1021 = vmatpush1.bf16.msra.mxu0 %v865
    %1022 = vmatprep.subr.bf16.mxu0 %v870
    %1023 = vmatpush1.bf16.msra.mxu0 %v869
    %1024 = vmatprep.subr.bf16.mxu0 %v874
    %1025 = vmatpush1.bf16.msra.mxu0 %v873
    %1026 = vmatprep.subr.bf16.mxu0 %v878
    %1027 = vmatpush1.bf16.msra.mxu0 %v877
    %1028 = vmatprep.subr.bf16.mxu0 %v882
    %1029 = vmatpush1.bf16.msra.mxu0 %v881
    %1030 = vmatprep.subr.bf16.mxu0 %v886
    %1031 = vmatpush1.bf16.msra.mxu0 %v885
    %1032 = vmatprep.subr.bf16.mxu0 %v890
    %1033 = vmatpush1.bf16.msra.mxu0 %v889
    %1034 = vmatprep.subr.bf16.mxu0 %v894
    %1035 = vmatpush1.bf16.msra.mxu0 %v893
    %1036 = vmatprep.subr.bf16.mxu0 %v898
    %1037 = vmatpush1.bf16.msra.mxu0 %v897
    %1038 = vmatprep.subr.bf16.mxu0 %v902
    %1039 = vmatpush1.bf16.msra.mxu0 %v901
    %1040 = vmatprep.mubr.bf16.mxu0 %v582
    %1041 = vmatmul.mubr.bf16.gmra.mrb[0].mxu0 %v581
    %v1042 = vpop.f32.mrb[0].mxu0
    %v1043 = vadd.f32 0.0, %v1042
    %v1044 = vpop.f32.mrb[0].mxu0
    %v1045 = vadd.f32 0.0, %v1044
    %v1046 = vpop.f32.mrb[0].mxu0
    %v1047 = vpop.f32.mrb[0].mxu0
    %1048 = vdwg.mxu0
    %v1049 = vrot.slane %v1002, 4
    %v1050 = vadd.f32 %v1002, %v1049
    %v1051 = vrot.slane %v1050, 2
    %v1052 = vadd.f32 %v1050, %v1051
    %v1053 = vrot.slane %v1052, 1
    %v1054 = vadd.f32 %v1052, %v1053
    %v1055 = vrot.slane %v1004, 4
    %v1056 = vadd.f32 %v1004, %v1055
    %v1057 = vrot.slane %v1056, 2
    %v1058 = vadd.f32 %v1056, %v1057
    %v1059 = vrot.slane %v1058, 1
    %v1060 = vadd.f32 %v1058, %v1059
    %v1061 = vrot.slane %v1043, 4
    %v1062 = vadd.f32 %v1043, %v1061
    %v1063 = vrot.slane %v1062, 2
    %v1064 = vadd.f32 %v1062, %v1063
    %v1065 = vrot.slane %v1064, 1
    %v1066 = vadd.f32 %v1064, %v1065
    %v1067 = vrot.slane %v1045, 4
    %v1068 = vadd.f32 %v1045, %v1067
    %v1069 = vrot.slane %v1068, 2
    %v1070 = vadd.f32 %v1068, %v1069
    %v1071 = vrot.slane %v1070, 1
    %v1072 = vadd.f32 %v1070, %v1071
    %v1073 = vmul.f32 %v1054, %v482
    %v1074 = vmul.f32 %v1060, %v482
    %v1075 = vmul.f32 %v1066, %v482
    %v1076 = vmul.f32 %v1072, %v482
    %v1077 = vsub.f32 %v1002, %v1073
    %v1078 = vsub.f32 %v1004, %v1074
    %v1079 = vsub.f32 %v1043, %v1075
    %v1080 = vsub.f32 %v1045, %v1076
    %v1081 = vmul.f32 %v1077, %v1077
    %v1082 = vmul.f32 %v1078, %v1078
    %v1083 = vmul.f32 %v1079, %v1079
    %v1084 = vmul.f32 %v1080, %v1080
    %v1085 = vrot.slane %v1081, 4
    %v1086 = vadd.f32 %v1081, %v1085
    %v1087 = vrot.slane %v1086, 2
    %v1088 = vadd.f32 %v1086, %v1087
    %v1089 = vrot.slane %v1088, 1
    %v1090 = vadd.f32 %v1088, %v1089
    %v1091 = vrot.slane %v1082, 4
    %v1092 = vadd.f32 %v1082, %v1091
    %v1093 = vrot.slane %v1092, 2
    %v1094 = vadd.f32 %v1092, %v1093
    %v1095 = vrot.slane %v1094, 1
    %v1096 = vadd.f32 %v1094, %v1095
    %v1097 = vrot.slane %v1083, 4
    %v1098 = vadd.f32 %v1083, %v1097
    %v1099 = vrot.slane %v1098, 2
    %v1100 = vadd.f32 %v1098, %v1099
    %v1101 = vrot.slane %v1100, 1
    %v1102 = vadd.f32 %v1100, %v1101
    %v1103 = vrot.slane %v1084, 4
    %v1104 = vadd.f32 %v1084, %v1103
    %v1105 = vrot.slane %v1104, 2
    %v1106 = vadd.f32 %v1104, %v1105
    %v1107 = vrot.slane %v1106, 1
    %v1108 = vadd.f32 %v1106, %v1107
    %v1109 = vmul.f32 %v1090, %v482
    %v1110 = vmul.f32 %v1096, %v482
    %v1111 = vmul.f32 %v1102, %v482
    %v1112 = vmul.f32 %v1108, %v482
    %v1113 = vld [vmem:[#allocation13] sm:$0xf]
    %v1114 = vadd.f32 %v1109, 0.8
    %v1115 = vadd.f32 %v1110, 0.8
    %v1116 = vadd.f32 %v1111, 0.8
    %v1117 = vadd.f32 %v1112, 0.8
    %v1118 = vrsqrt.pop %v1114
    %v1119 = vrsqrt.pop %v1115
    %v1120 = vrsqrt.pop %v1116
    %v1121 = vrsqrt.pop %v1117
    %v1126 = vcombine.low %v1118, %v1119
    %v1127 = vcombine.low %v1120, %v1121
    %v1129 = vunpack.c.l.s4 1966171168
    %v1130 = vunpack.c.0.s8 %v1129
    %v1131 = vlaneseq
    %v1132 = vshrl.u32 %v1131, 7
    %v1133 = vsub.s32 %v1130, %v1132
    %v1134 = vrot.slane %v1126, %v1133
    %v1136 = vunpack.c.l.s4 1966171168
    %v1137 = vunpack.c.0.s8 %v1136
    %v1138 = vlaneseq
    %v1139 = vshrl.u32 %v1138, 7
    %v1140 = vsub.s32 %v1137, %v1139
    %v1141 = vrot.slane %v1127, %v1140
    %v1142 = vcombine.low %v1134, %v1141
    %v1144 = vunpack.c.l.s4 1966171168
    %v1145 = vunpack.c.0.s8 %v1144
    %v1146 = vlaneseq
    %v1147 = vshrl.u32 %v1146, 7
    %v1148 = vsub.s32 %v1145, %v1147
    %v1149 = vrot.slane %v1142, %v1148
    %v1151 = vmul.f32 %v1113, %v1149
    %v1152 = vld [vmem:[#allocation15] sm:$0xf]
    %v1154 = vlaneseq
    %v1155 = vshrl.u32 %v1154, 7
    %v1156 = vsub.s32 0, %v1155
    %v1157 = vrot.slane %v1151, %v1156
    %v1158 = vlaneseq
    %v1159 = vshrl.u32 %v1158, 7
    %v1160 = vsub.s32 1, %v1159
    %v1161 = vrot.slane %v1151, %v1160
    %v1162 = vlaneseq
    %v1163 = vshrl.u32 %v1162, 7
    %v1164 = vsub.s32 2, %v1163
    %v1165 = vrot.slane %v1151, %v1164
    %v1166 = vlaneseq
    %v1167 = vshrl.u32 %v1166, 7
    %v1168 = vsub.s32 3, %v1167
    %v1169 = vrot.slane %v1151, %v1168
    %v1174 = vmul.f32 %v1073, %v1157
    %v1175 = vmul.f32 %v1074, %v1161
    %v1176 = vmul.f32 %v1075, %v1165
    %v1177 = vmul.f32 %v1076, %v1169
    %v1182 = vcombine.low %v1174, %v1175
    %v1183 = vcombine.low %v1176, %v1177
    %v1185 = vunpack.c.l.s4 1966171168
    %v1186 = vunpack.c.0.s8 %v1185
    %v1187 = vlaneseq
    %v1188 = vshrl.u32 %v1187, 7
    %v1189 = vsub.s32 %v1186, %v1188
    %v1190 = vrot.slane %v1182, %v1189
    %v1192 = vunpack.c.l.s4 1966171168
    %v1193 = vunpack.c.0.s8 %v1192
    %v1194 = vlaneseq
    %v1195 = vshrl.u32 %v1194, 7
    %v1196 = vsub.s32 %v1193, %v1195
    %v1197 = vrot.slane %v1183, %v1196
    %v1198 = vcombine.low %v1190, %v1197
    %v1200 = vunpack.c.l.s4 1966171168
    %v1201 = vunpack.c.0.s8 %v1200
    %v1202 = vlaneseq
    %v1203 = vshrl.u32 %v1202, 7
    %v1204 = vsub.s32 %v1201, %v1203
    %v1205 = vrot.slane %v1198, %v1204
    %v1207 = vsub.f32 %v1152, %v1205
    %v1208 = vmul.f32 %v1002, %v1157
    %v1209 = vmul.f32 %v1004, %v1161
    %v1210 = vmul.f32 %v1043, %v1165
    %v1211 = vmul.f32 %v1045, %v1169
    %v1213 = vlaneseq
    %v1214 = vshrl.u32 %v1213, 7
    %v1215 = vsub.s32 0, %v1214
    %v1216 = vrot.slane %v1207, %v1215
    %v1217 = vlaneseq
    %v1218 = vshrl.u32 %v1217, 7
    %v1219 = vsub.s32 1, %v1218
    %v1220 = vrot.slane %v1207, %v1219
    %v1221 = vlaneseq
    %v1222 = vshrl.u32 %v1221, 7
    %v1223 = vsub.s32 2, %v1222
    %v1224 = vrot.slane %v1207, %v1223
    %v1225 = vlaneseq
    %v1226 = vshrl.u32 %v1225, 7
    %v1227 = vsub.s32 3, %v1226
    %v1228 = vrot.slane %v1207, %v1227
    %v1233 = vadd.f32 %v1208, %v1216
    %v1234 = vadd.f32 %v1209, %v1220
    %v1235 = vadd.f32 %v1210, %v1224
    %v1236 = vadd.f32 %v1211, %v1228
    %vm1237 = vcmp.gt.f32.partialorder %v1233, 0.0
    %vm1238 = vcmp.gt.f32.partialorder %v1234, 0.0
    %vm1239 = vcmp.gt.f32.partialorder %v1235, 0.0
    %vm1240 = vcmp.gt.f32.partialorder %v1236, 0.0
    %v1241 = vmul.f32 %v1233, 0.2
    %v1242 = vmul.f32 %v1234, 0.2
    %v1243 = vmul.f32 %v1235, 0.2
    %v1244 = vmul.f32 %v1236, 0.2
    %v1245 = vsel %vm1237, %v1233, %v1241
    %v1246 = vsel %vm1238, %v1234, %v1242
    %v1247 = vsel %vm1239, %v1235, %v1243
    %v1248 = vsel %vm1240, %v1236, %v1244
    %v1249 = vpack.c.bf16 %v1245, %v1245
    %v1250 = vpack.c.bf16 %v1246, %v1246
    %v1251 = vpack.c.bf16 %v1247, %v1247
    %v1252 = vpack.c.bf16 %v1248, %v1248
    %v1253 = vld [vmem:[#allocation16] sm:$0xff]
    %v1254 = vld [vmem:[#allocation16 + $0x8] sm:$0xff]
    %v1255 = vld [vmem:[#allocation16 + $0x10] sm:$0xff]
    %v1256 = vld [vmem:[#allocation16 + $0x18] sm:$0xff]
    %v1257 = vld [vmem:[#allocation16 + $0x20] sm:$0xff]
    %v1258 = vld [vmem:[#allocation16 + $0x28] sm:$0xff]
    %v1259 = vld [vmem:[#allocation16 + $0x30] sm:$0xff]
    %v1260 = vld [vmem:[#allocation16 + $0x38] sm:$0xff]
    %v1261 = vld [vmem:[#allocation16 + $0x40] sm:$0xff]
    %v1262 = vld [vmem:[#allocation16 + $0x48] sm:$0xff]
    %v1263 = vld [vmem:[#allocation16 + $0x50] sm:$0xff]
    %v1264 = vld [vmem:[#allocation16 + $0x58] sm:$0xff]
    %v1265 = vld [vmem:[#allocation16 + $0x60] sm:$0xff]
    %v1266 = vld [vmem:[#allocation16 + $0x68] sm:$0xff]
    %v1267 = vld [vmem:[#allocation16 + $0x70] sm:$0xff]
    %v1268 = vld [vmem:[#allocation16 + $0x78] sm:$0xff]
    %v1269 = vld [vmem:[#allocation16 + $0x80] sm:$0xff]
    %v1270 = vld [vmem:[#allocation16 + $0x88] sm:$0xff]
    %v1271 = vld [vmem:[#allocation16 + $0x90] sm:$0xff]
    %v1272 = vld [vmem:[#allocation16 + $0x98] sm:$0xff]
    %v1273 = vld [vmem:[#allocation16 + $0xa0] sm:$0xff]
    %v1274 = vld [vmem:[#allocation16 + $0xa8] sm:$0xff]
    %v1275 = vld [vmem:[#allocation16 + $0xb0] sm:$0xff]
    %v1276 = vld [vmem:[#allocation16 + $0xb8] sm:$0xff]
    %v1277 = vld [vmem:[#allocation16 + $0xc0] sm:$0xff]
    %v1278 = vld [vmem:[#allocation16 + $0xc8] sm:$0xff]
    %v1279 = vld [vmem:[#allocation16 + $0xd0] sm:$0xff]
    %v1280 = vld [vmem:[#allocation16 + $0xd8] sm:$0xff]
    %v1281 = vld [vmem:[#allocation16 + $0xe0] sm:$0xff]
    %v1282 = vld [vmem:[#allocation16 + $0xe8] sm:$0xff]
    %v1283 = vld [vmem:[#allocation16 + $0xf0] sm:$0xff]
    %v1284 = vld [vmem:[#allocation16 + $0xf8] sm:$0xff]
    %v1285 = vld [vmem:[#allocation16 + $0x100] sm:$0xff]
    %v1286 = vld [vmem:[#allocation16 + $0x108] sm:$0xff]
    %v1287 = vld [vmem:[#allocation16 + $0x110] sm:$0xff]
    %v1288 = vld [vmem:[#allocation16 + $0x118] sm:$0xff]
    %v1289 = vld [vmem:[#allocation16 + $0x120] sm:$0xff]
    %v1290 = vld [vmem:[#allocation16 + $0x128] sm:$0xff]
    %v1291 = vld [vmem:[#allocation16 + $0x130] sm:$0xff]
    %v1292 = vld [vmem:[#allocation16 + $0x138] sm:$0xff]
    %v1293 = vld [vmem:[#allocation16 + $0x140] sm:$0xff]
    %v1294 = vld [vmem:[#allocation16 + $0x148] sm:$0xff]
    %v1295 = vld [vmem:[#allocation16 + $0x150] sm:$0xff]
    %v1296 = vld [vmem:[#allocation16 + $0x158] sm:$0xff]
    %v1297 = vld [vmem:[#allocation16 + $0x160] sm:$0xff]
    %v1298 = vld [vmem:[#allocation16 + $0x168] sm:$0xff]
    %v1299 = vld [vmem:[#allocation16 + $0x170] sm:$0xff]
    %v1300 = vld [vmem:[#allocation16 + $0x178] sm:$0xff]
    %v1301 = vld [vmem:[#allocation16 + $0x180] sm:$0xff]
    %v1302 = vld [vmem:[#allocation16 + $0x188] sm:$0xff]
    %v1303 = vld [vmem:[#allocation16 + $0x190] sm:$0xff]
    %v1304 = vld [vmem:[#allocation16 + $0x198] sm:$0xff]
    %v1305 = vld [vmem:[#allocation16 + $0x1a0] sm:$0xff]
    %v1306 = vld [vmem:[#allocation16 + $0x1a8] sm:$0xff]
    %v1307 = vld [vmem:[#allocation16 + $0x1b0] sm:$0xff]
    %v1308 = vld [vmem:[#allocation16 + $0x1b8] sm:$0xff]
    %v1309 = vld [vmem:[#allocation16 + $0x1c0] sm:$0xff]
    %v1310 = vld [vmem:[#allocation16 + $0x1c8] sm:$0xff]
    %v1311 = vld [vmem:[#allocation16 + $0x1d0] sm:$0xff]
    %v1312 = vld [vmem:[#allocation16 + $0x1d8] sm:$0xff]
    %v1313 = vld [vmem:[#allocation16 + $0x1e0] sm:$0xff]
    %v1314 = vld [vmem:[#allocation16 + $0x1e8] sm:$0xff]
    %v1315 = vld [vmem:[#allocation16 + $0x1f0] sm:$0xff]
    %v1316 = vld [vmem:[#allocation16 + $0x1f8] sm:$0xff]
    %v1317 = vld [vmem:[#allocation16 + $0x200] sm:$0xff]
    %v1318 = vld [vmem:[#allocation16 + $0x208] sm:$0xff]
    %v1319 = vld [vmem:[#allocation16 + $0x210] sm:$0xff]
    %v1320 = vld [vmem:[#allocation16 + $0x218] sm:$0xff]
    %v1321 = vld [vmem:[#allocation16 + $0x220] sm:$0xff]
    %v1322 = vld [vmem:[#allocation16 + $0x228] sm:$0xff]
    %v1323 = vld [vmem:[#allocation16 + $0x230] sm:$0xff]
    %v1324 = vld [vmem:[#allocation16 + $0x238] sm:$0xff]
    %v1325 = vld [vmem:[#allocation16 + $0x240] sm:$0xff]
    %v1326 = vld [vmem:[#allocation16 + $0x248] sm:$0xff]
    %v1327 = vld [vmem:[#allocation16 + $0x250] sm:$0xff]
    %v1328 = vld [vmem:[#allocation16 + $0x258] sm:$0xff]
    %v1329 = vld [vmem:[#allocation16 + $0x260] sm:$0xff]
    %v1330 = vld [vmem:[#allocation16 + $0x268] sm:$0xff]
    %v1331 = vld [vmem:[#allocation16 + $0x270] sm:$0xff]
    %v1332 = vld [vmem:[#allocation16 + $0x278] sm:$0xff]
    %v1333 = vld [vmem:[#allocation16 + $0x280] sm:$0xff]
    %v1334 = vld [vmem:[#allocation16 + $0x288] sm:$0xff]
    %v1335 = vld [vmem:[#allocation16 + $0x290] sm:$0xff]
    %v1336 = vld [vmem:[#allocation16 + $0x298] sm:$0xff]
    %v1337 = vld [vmem:[#allocation16 + $0x2a0] sm:$0xff]
    %v1338 = vld [vmem:[#allocation16 + $0x2a8] sm:$0xff]
    %v1339 = vld [vmem:[#allocation16 + $0x2b0] sm:$0xff]
    %v1340 = vld [vmem:[#allocation16 + $0x2b8] sm:$0xff]
    %v1341 = vld [vmem:[#allocation16 + $0x2c0] sm:$0xff]
    %v1342 = vld [vmem:[#allocation16 + $0x2c8] sm:$0xff]
    %v1343 = vld [vmem:[#allocation16 + $0x2d0] sm:$0xff]
    %v1344 = vld [vmem:[#allocation16 + $0x2d8] sm:$0xff]
    %v1345 = vld [vmem:[#allocation16 + $0x2e0] sm:$0xff]
    %v1346 = vld [vmem:[#allocation16 + $0x2e8] sm:$0xff]
    %v1347 = vld [vmem:[#allocation16 + $0x2f0] sm:$0xff]
    %v1348 = vld [vmem:[#allocation16 + $0x2f8] sm:$0xff]
    %v1349 = vld [vmem:[#allocation16 + $0x300] sm:$0xff]
    %v1350 = vld [vmem:[#allocation16 + $0x308] sm:$0xff]
    %v1351 = vld [vmem:[#allocation16 + $0x310] sm:$0xff]
    %v1352 = vld [vmem:[#allocation16 + $0x318] sm:$0xff]
    %v1353 = vld [vmem:[#allocation16 + $0x320] sm:$0xff]
    %v1354 = vld [vmem:[#allocation16 + $0x328] sm:$0xff]
    %v1355 = vld [vmem:[#allocation16 + $0x330] sm:$0xff]
    %v1356 = vld [vmem:[#allocation16 + $0x338] sm:$0xff]
    %v1357 = vld [vmem:[#allocation16 + $0x340] sm:$0xff]
    %v1358 = vld [vmem:[#allocation16 + $0x348] sm:$0xff]
    %v1359 = vld [vmem:[#allocation16 + $0x350] sm:$0xff]
    %v1360 = vld [vmem:[#allocation16 + $0x358] sm:$0xff]
    %v1361 = vld [vmem:[#allocation16 + $0x360] sm:$0xff]
    %v1362 = vld [vmem:[#allocation16 + $0x368] sm:$0xff]
    %v1363 = vld [vmem:[#allocation16 + $0x370] sm:$0xff]
    %v1364 = vld [vmem:[#allocation16 + $0x378] sm:$0xff]
    %v1365 = vld [vmem:[#allocation16 + $0x380] sm:$0xff]
    %v1366 = vld [vmem:[#allocation16 + $0x388] sm:$0xff]
    %v1367 = vld [vmem:[#allocation16 + $0x390] sm:$0xff]
    %v1368 = vld [vmem:[#allocation16 + $0x398] sm:$0xff]
    %v1369 = vld [vmem:[#allocation16 + $0x3a0] sm:$0xff]
    %v1370 = vld [vmem:[#allocation16 + $0x3a8] sm:$0xff]
    %v1371 = vld [vmem:[#allocation16 + $0x3b0] sm:$0xff]
    %v1372 = vld [vmem:[#allocation16 + $0x3b8] sm:$0xff]
    %v1373 = vld [vmem:[#allocation16 + $0x3c0] sm:$0xff]
    %v1374 = vld [vmem:[#allocation16 + $0x3c8] sm:$0xff]
    %v1375 = vld [vmem:[#allocation16 + $0x3d0] sm:$0xff]
    %v1376 = vld [vmem:[#allocation16 + $0x3d8] sm:$0xff]
    %v1377 = vld [vmem:[#allocation16 + $0x3e0] sm:$0xff]
    %v1378 = vld [vmem:[#allocation16 + $0x3e8] sm:$0xff]
    %v1379 = vld [vmem:[#allocation16 + $0x3f0] sm:$0xff]
    %v1380 = vld [vmem:[#allocation16 + $0x3f8] sm:$0xff]
    %v1381 = vld [vmem:[#allocation16 + $0x400] sm:$0xff]
    %v1382 = vld [vmem:[#allocation16 + $0x408] sm:$0xff]
    %v1383 = vld [vmem:[#allocation16 + $0x410] sm:$0xff]
    %v1384 = vld [vmem:[#allocation16 + $0x418] sm:$0xff]
    %v1385 = vld [vmem:[#allocation16 + $0x420] sm:$0xff]
    %v1386 = vld [vmem:[#allocation16 + $0x428] sm:$0xff]
    %v1387 = vld [vmem:[#allocation16 + $0x430] sm:$0xff]
    %v1388 = vld [vmem:[#allocation16 + $0x438] sm:$0xff]
    %v1389 = vld [vmem:[#allocation16 + $0x440] sm:$0xff]
    %v1390 = vld [vmem:[#allocation16 + $0x448] sm:$0xff]
    %v1391 = vld [vmem:[#allocation16 + $0x450] sm:$0xff]
    %v1392 = vld [vmem:[#allocation16 + $0x458] sm:$0xff]
    %v1393 = vld [vmem:[#allocation16 + $0x460] sm:$0xff]
    %v1394 = vld [vmem:[#allocation16 + $0x468] sm:$0xff]
    %v1395 = vld [vmem:[#allocation16 + $0x470] sm:$0xff]
    %v1396 = vld [vmem:[#allocation16 + $0x478] sm:$0xff]
    %v1397 = vld [vmem:[#allocation16 + $0x480] sm:$0xff]
    %v1398 = vld [vmem:[#allocation16 + $0x488] sm:$0xff]
    %v1399 = vld [vmem:[#allocation16 + $0x490] sm:$0xff]
    %v1400 = vld [vmem:[#allocation16 + $0x498] sm:$0xff]
    %v1401 = vld [vmem:[#allocation16 + $0x4a0] sm:$0xff]
    %v1402 = vld [vmem:[#allocation16 + $0x4a8] sm:$0xff]
    %v1403 = vld [vmem:[#allocation16 + $0x4b0] sm:$0xff]
    %v1404 = vld [vmem:[#allocation16 + $0x4b8] sm:$0xff]
    %v1405 = vld [vmem:[#allocation16 + $0x4c0] sm:$0xff]
    %v1406 = vld [vmem:[#allocation16 + $0x4c8] sm:$0xff]
    %v1407 = vld [vmem:[#allocation16 + $0x4d0] sm:$0xff]
    %v1408 = vld [vmem:[#allocation16 + $0x4d8] sm:$0xff]
    %v1409 = vld [vmem:[#allocation16 + $0x4e0] sm:$0xff]
    %v1410 = vld [vmem:[#allocation16 + $0x4e8] sm:$0xff]
    %v1411 = vld [vmem:[#allocation16 + $0x4f0] sm:$0xff]
    %v1412 = vld [vmem:[#allocation16 + $0x4f8] sm:$0xff]
    %v1413 = vld [vmem:[#allocation16 + $0x500] sm:$0xff]
    %v1414 = vld [vmem:[#allocation16 + $0x508] sm:$0xff]
    %v1415 = vld [vmem:[#allocation16 + $0x510] sm:$0xff]
    %v1416 = vld [vmem:[#allocation16 + $0x518] sm:$0xff]
    %v1417 = vld [vmem:[#allocation16 + $0x520] sm:$0xff]
    %v1418 = vld [vmem:[#allocation16 + $0x528] sm:$0xff]
    %v1419 = vld [vmem:[#allocation16 + $0x530] sm:$0xff]
    %v1420 = vld [vmem:[#allocation16 + $0x538] sm:$0xff]
    %v1421 = vld [vmem:[#allocation16 + $0x540] sm:$0xff]
    %v1422 = vld [vmem:[#allocation16 + $0x548] sm:$0xff]
    %v1423 = vld [vmem:[#allocation16 + $0x550] sm:$0xff]
    %v1424 = vld [vmem:[#allocation16 + $0x558] sm:$0xff]
    %v1425 = vld [vmem:[#allocation16 + $0x560] sm:$0xff]
    %v1426 = vld [vmem:[#allocation16 + $0x568] sm:$0xff]
    %v1427 = vld [vmem:[#allocation16 + $0x570] sm:$0xff]
    %v1428 = vld [vmem:[#allocation16 + $0x578] sm:$0xff]
    %v1429 = vld [vmem:[#allocation16 + $0x580] sm:$0xff]
    %v1430 = vld [vmem:[#allocation16 + $0x588] sm:$0xff]
    %v1431 = vld [vmem:[#allocation16 + $0x590] sm:$0xff]
    %v1432 = vld [vmem:[#allocation16 + $0x598] sm:$0xff]
    %v1433 = vld [vmem:[#allocation16 + $0x5a0] sm:$0xff]
    %v1434 = vld [vmem:[#allocation16 + $0x5a8] sm:$0xff]
    %v1435 = vld [vmem:[#allocation16 + $0x5b0] sm:$0xff]
    %v1436 = vld [vmem:[#allocation16 + $0x5b8] sm:$0xff]
    %v1437 = vld [vmem:[#allocation16 + $0x5c0] sm:$0xff]
    %v1438 = vld [vmem:[#allocation16 + $0x5c8] sm:$0xff]
    %v1439 = vld [vmem:[#allocation16 + $0x5d0] sm:$0xff]
    %v1440 = vld [vmem:[#allocation16 + $0x5d8] sm:$0xff]
    %v1441 = vld [vmem:[#allocation16 + $0x5e0] sm:$0xff]
    %v1442 = vld [vmem:[#allocation16 + $0x5e8] sm:$0xff]
    %v1443 = vld [vmem:[#allocation16 + $0x5f0] sm:$0xff]
    %v1444 = vld [vmem:[#allocation16 + $0x5f8] sm:$0xff]
    %v1445 = vld [vmem:[#allocation16 + $0x600] sm:$0xff]
    %v1446 = vld [vmem:[#allocation16 + $0x608] sm:$0xff]
    %v1447 = vld [vmem:[#allocation16 + $0x610] sm:$0xff]
    %v1448 = vld [vmem:[#allocation16 + $0x618] sm:$0xff]
    %v1449 = vld [vmem:[#allocation16 + $0x620] sm:$0xff]
    %v1450 = vld [vmem:[#allocation16 + $0x628] sm:$0xff]
    %v1451 = vld [vmem:[#allocation16 + $0x630] sm:$0xff]
    %v1452 = vld [vmem:[#allocation16 + $0x638] sm:$0xff]
    %v1453 = vld [vmem:[#allocation16 + $0x640] sm:$0xff]
    %v1454 = vld [vmem:[#allocation16 + $0x648] sm:$0xff]
    %v1455 = vld [vmem:[#allocation16 + $0x650] sm:$0xff]
    %v1456 = vld [vmem:[#allocation16 + $0x658] sm:$0xff]
    %v1457 = vld [vmem:[#allocation16 + $0x660] sm:$0xff]
    %v1458 = vld [vmem:[#allocation16 + $0x668] sm:$0xff]
    %v1459 = vld [vmem:[#allocation16 + $0x670] sm:$0xff]
    %v1460 = vld [vmem:[#allocation16 + $0x678] sm:$0xff]
    %v1461 = vld [vmem:[#allocation16 + $0x680] sm:$0xff]
    %v1462 = vld [vmem:[#allocation16 + $0x688] sm:$0xff]
    %v1463 = vld [vmem:[#allocation16 + $0x690] sm:$0xff]
    %v1464 = vld [vmem:[#allocation16 + $0x698] sm:$0xff]
    %v1465 = vld [vmem:[#allocation16 + $0x6a0] sm:$0xff]
    %v1466 = vld [vmem:[#allocation16 + $0x6a8] sm:$0xff]
    %v1467 = vld [vmem:[#allocation16 + $0x6b0] sm:$0xff]
    %v1468 = vld [vmem:[#allocation16 + $0x6b8] sm:$0xff]
    %v1469 = vld [vmem:[#allocation16 + $0x6c0] sm:$0xff]
    %v1470 = vld [vmem:[#allocation16 + $0x6c8] sm:$0xff]
    %v1471 = vld [vmem:[#allocation16 + $0x6d0] sm:$0xff]
    %v1472 = vld [vmem:[#allocation16 + $0x6d8] sm:$0xff]
    %v1473 = vld [vmem:[#allocation16 + $0x6e0] sm:$0xff]
    %v1474 = vld [vmem:[#allocation16 + $0x6e8] sm:$0xff]
    %v1475 = vld [vmem:[#allocation16 + $0x6f0] sm:$0xff]
    %v1476 = vld [vmem:[#allocation16 + $0x6f8] sm:$0xff]
    %v1477 = vld [vmem:[#allocation16 + $0x700] sm:$0xff]
    %v1478 = vld [vmem:[#allocation16 + $0x708] sm:$0xff]
    %v1479 = vld [vmem:[#allocation16 + $0x710] sm:$0xff]
    %v1480 = vld [vmem:[#allocation16 + $0x718] sm:$0xff]
    %v1481 = vld [vmem:[#allocation16 + $0x720] sm:$0xff]
    %v1482 = vld [vmem:[#allocation16 + $0x728] sm:$0xff]
    %v1483 = vld [vmem:[#allocation16 + $0x730] sm:$0xff]
    %v1484 = vld [vmem:[#allocation16 + $0x738] sm:$0xff]
    %v1485 = vld [vmem:[#allocation16 + $0x740] sm:$0xff]
    %v1486 = vld [vmem:[#allocation16 + $0x748] sm:$0xff]
    %v1487 = vld [vmem:[#allocation16 + $0x750] sm:$0xff]
    %v1488 = vld [vmem:[#allocation16 + $0x758] sm:$0xff]
    %v1489 = vld [vmem:[#allocation16 + $0x760] sm:$0xff]
    %v1490 = vld [vmem:[#allocation16 + $0x768] sm:$0xff]
    %v1491 = vld [vmem:[#allocation16 + $0x770] sm:$0xff]
    %v1492 = vld [vmem:[#allocation16 + $0x778] sm:$0xff]
    %v1493 = vld [vmem:[#allocation16 + $0x780] sm:$0xff]
    %v1494 = vld [vmem:[#allocation16 + $0x788] sm:$0xff]
    %v1495 = vld [vmem:[#allocation16 + $0x790] sm:$0xff]
    %v1496 = vld [vmem:[#allocation16 + $0x798] sm:$0xff]
    %v1497 = vld [vmem:[#allocation16 + $0x7a0] sm:$0xff]
    %v1498 = vld [vmem:[#allocation16 + $0x7a8] sm:$0xff]
    %v1499 = vld [vmem:[#allocation16 + $0x7b0] sm:$0xff]
    %v1500 = vld [vmem:[#allocation16 + $0x7b8] sm:$0xff]
    %v1501 = vld [vmem:[#allocation16 + $0x7c0] sm:$0xff]
    %v1502 = vld [vmem:[#allocation16 + $0x7c8] sm:$0xff]
    %v1503 = vld [vmem:[#allocation16 + $0x7d0] sm:$0xff]
    %v1504 = vld [vmem:[#allocation16 + $0x7d8] sm:$0xff]
    %v1505 = vld [vmem:[#allocation16 + $0x7e0] sm:$0xff]
    %v1506 = vld [vmem:[#allocation16 + $0x7e8] sm:$0xff]
    %v1507 = vld [vmem:[#allocation16 + $0x7f0] sm:$0xff]
    %v1508 = vld [vmem:[#allocation16 + $0x7f8] sm:$0xff]
    %v1765 = vunpack.c.l.b16 %v1253
    %v1766 = vunpack.c.h.b16 %v1253
    %v1767 = vunpack.c.l.b16 %v1254
    %v1768 = vunpack.c.h.b16 %v1254
    %v1769 = vunpack.c.l.b16 %v1255
    %v1770 = vunpack.c.h.b16 %v1255
    %v1771 = vunpack.c.l.b16 %v1256
    %v1772 = vunpack.c.h.b16 %v1256
    %v1773 = vunpack.c.l.b16 %v1257
    %v1774 = vunpack.c.h.b16 %v1257
    %v1775 = vunpack.c.l.b16 %v1258
    %v1776 = vunpack.c.h.b16 %v1258
    %v1777 = vunpack.c.l.b16 %v1259
    %v1778 = vunpack.c.h.b16 %v1259
    %v1779 = vunpack.c.l.b16 %v1260
    %v1780 = vunpack.c.h.b16 %v1260
    %v1781 = vunpack.c.l.b16 %v1261
    %v1782 = vunpack.c.h.b16 %v1261
    %v1783 = vunpack.c.l.b16 %v1262
    %v1784 = vunpack.c.h.b16 %v1262
    %v1785 = vunpack.c.l.b16 %v1263
    %v1786 = vunpack.c.h.b16 %v1263
    %v1787 = vunpack.c.l.b16 %v1264
    %v1788 = vunpack.c.h.b16 %v1264
    %v1789 = vunpack.c.l.b16 %v1265
    %v1790 = vunpack.c.h.b16 %v1265
    %v1791 = vunpack.c.l.b16 %v1266
    %v1792 = vunpack.c.h.b16 %v1266
    %v1793 = vunpack.c.l.b16 %v1267
    %v1794 = vunpack.c.h.b16 %v1267
    %v1795 = vunpack.c.l.b16 %v1268
    %v1796 = vunpack.c.h.b16 %v1268
    %v1797 = vunpack.c.l.b16 %v1269
    %v1798 = vunpack.c.h.b16 %v1269
    %v1799 = vunpack.c.l.b16 %v1270
    %v1800 = vunpack.c.h.b16 %v1270
    %v1801 = vunpack.c.l.b16 %v1271
    %v1802 = vunpack.c.h.b16 %v1271
    %v1803 = vunpack.c.l.b16 %v1272
    %v1804 = vunpack.c.h.b16 %v1272
    %v1805 = vunpack.c.l.b16 %v1273
    %v1806 = vunpack.c.h.b16 %v1273
    %v1807 = vunpack.c.l.b16 %v1274
    %v1808 = vunpack.c.h.b16 %v1274
    %v1809 = vunpack.c.l.b16 %v1275
    %v1810 = vunpack.c.h.b16 %v1275
    %v1811 = vunpack.c.l.b16 %v1276
    %v1812 = vunpack.c.h.b16 %v1276
    %v1813 = vunpack.c.l.b16 %v1277
    %v1814 = vunpack.c.h.b16 %v1277
    %v1815 = vunpack.c.l.b16 %v1278
    %v1816 = vunpack.c.h.b16 %v1278
    %v1817 = vunpack.c.l.b16 %v1279
    %v1818 = vunpack.c.h.b16 %v1279
    %v1819 = vunpack.c.l.b16 %v1280
    %v1820 = vunpack.c.h.b16 %v1280
    %v1821 = vunpack.c.l.b16 %v1281
    %v1822 = vunpack.c.h.b16 %v1281
    %v1823 = vunpack.c.l.b16 %v1282
    %v1824 = vunpack.c.h.b16 %v1282
    %v1825 = vunpack.c.l.b16 %v1283
    %v1826 = vunpack.c.h.b16 %v1283
    %v1827 = vunpack.c.l.b16 %v1284
    %v1828 = vunpack.c.h.b16 %v1284
    %v1829 = vunpack.c.l.b16 %v1285
    %v1830 = vunpack.c.h.b16 %v1285
    %v1831 = vunpack.c.l.b16 %v1286
    %v1832 = vunpack.c.h.b16 %v1286
    %v1833 = vunpack.c.l.b16 %v1287
    %v1834 = vunpack.c.h.b16 %v1287
    %v1835 = vunpack.c.l.b16 %v1288
    %v1836 = vunpack.c.h.b16 %v1288
    %v1837 = vunpack.c.l.b16 %v1289
    %v1838 = vunpack.c.h.b16 %v1289
    %v1839 = vunpack.c.l.b16 %v1290
    %v1840 = vunpack.c.h.b16 %v1290
    %v1841 = vunpack.c.l.b16 %v1291
    %v1842 = vunpack.c.h.b16 %v1291
    %v1843 = vunpack.c.l.b16 %v1292
    %v1844 = vunpack.c.h.b16 %v1292
    %v1845 = vunpack.c.l.b16 %v1293
    %v1846 = vunpack.c.h.b16 %v1293
    %v1847 = vunpack.c.l.b16 %v1294
    %v1848 = vunpack.c.h.b16 %v1294
    %v1849 = vunpack.c.l.b16 %v1295
    %v1850 = vunpack.c.h.b16 %v1295
    %v1851 = vunpack.c.l.b16 %v1296
    %v1852 = vunpack.c.h.b16 %v1296
    %v1853 = vunpack.c.l.b16 %v1297
    %v1854 = vunpack.c.h.b16 %v1297
    %v1855 = vunpack.c.l.b16 %v1298
    %v1856 = vunpack.c.h.b16 %v1298
    %v1857 = vunpack.c.l.b16 %v1299
    %v1858 = vunpack.c.h.b16 %v1299
    %v1859 = vunpack.c.l.b16 %v1300
    %v1860 = vunpack.c.h.b16 %v1300
    %v1861 = vunpack.c.l.b16 %v1301
    %v1862 = vunpack.c.h.b16 %v1301
    %v1863 = vunpack.c.l.b16 %v1302
    %v1864 = vunpack.c.h.b16 %v1302
    %v1865 = vunpack.c.l.b16 %v1303
    %v1866 = vunpack.c.h.b16 %v1303
    %v1867 = vunpack.c.l.b16 %v1304
    %v1868 = vunpack.c.h.b16 %v1304
    %v1869 = vunpack.c.l.b16 %v1305
    %v1870 = vunpack.c.h.b16 %v1305
    %v1871 = vunpack.c.l.b16 %v1306
    %v1872 = vunpack.c.h.b16 %v1306
    %v1873 = vunpack.c.l.b16 %v1307
    %v1874 = vunpack.c.h.b16 %v1307
    %v1875 = vunpack.c.l.b16 %v1308
    %v1876 = vunpack.c.h.b16 %v1308
    %v1877 = vunpack.c.l.b16 %v1309
    %v1878 = vunpack.c.h.b16 %v1309
    %v1879 = vunpack.c.l.b16 %v1310
    %v1880 = vunpack.c.h.b16 %v1310
    %v1881 = vunpack.c.l.b16 %v1311
    %v1882 = vunpack.c.h.b16 %v1311
    %v1883 = vunpack.c.l.b16 %v1312
    %v1884 = vunpack.c.h.b16 %v1312
    %v1885 = vunpack.c.l.b16 %v1313
    %v1886 = vunpack.c.h.b16 %v1313
    %v1887 = vunpack.c.l.b16 %v1314
    %v1888 = vunpack.c.h.b16 %v1314
    %v1889 = vunpack.c.l.b16 %v1315
    %v1890 = vunpack.c.h.b16 %v1315
    %v1891 = vunpack.c.l.b16 %v1316
    %v1892 = vunpack.c.h.b16 %v1316
    %v1893 = vunpack.c.l.b16 %v1317
    %v1894 = vunpack.c.h.b16 %v1317
    %v1895 = vunpack.c.l.b16 %v1318
    %v1896 = vunpack.c.h.b16 %v1318
    %v1897 = vunpack.c.l.b16 %v1319
    %v1898 = vunpack.c.h.b16 %v1319
    %v1899 = vunpack.c.l.b16 %v1320
    %v1900 = vunpack.c.h.b16 %v1320
    %v1901 = vunpack.c.l.b16 %v1321
    %v1902 = vunpack.c.h.b16 %v1321
    %v1903 = vunpack.c.l.b16 %v1322
    %v1904 = vunpack.c.h.b16 %v1322
    %v1905 = vunpack.c.l.b16 %v1323
    %v1906 = vunpack.c.h.b16 %v1323
    %v1907 = vunpack.c.l.b16 %v1324
    %v1908 = vunpack.c.h.b16 %v1324
    %v1909 = vunpack.c.l.b16 %v1325
    %v1910 = vunpack.c.h.b16 %v1325
    %v1911 = vunpack.c.l.b16 %v1326
    %v1912 = vunpack.c.h.b16 %v1326
    %v1913 = vunpack.c.l.b16 %v1327
    %v1914 = vunpack.c.h.b16 %v1327
    %v1915 = vunpack.c.l.b16 %v1328
    %v1916 = vunpack.c.h.b16 %v1328
    %v1917 = vunpack.c.l.b16 %v1329
    %v1918 = vunpack.c.h.b16 %v1329
    %v1919 = vunpack.c.l.b16 %v1330
    %v1920 = vunpack.c.h.b16 %v1330
    %v1921 = vunpack.c.l.b16 %v1331
    %v1922 = vunpack.c.h.b16 %v1331
    %v1923 = vunpack.c.l.b16 %v1332
    %v1924 = vunpack.c.h.b16 %v1332
    %v1925 = vunpack.c.l.b16 %v1333
    %v1926 = vunpack.c.h.b16 %v1333
    %v1927 = vunpack.c.l.b16 %v1334
    %v1928 = vunpack.c.h.b16 %v1334
    %v1929 = vunpack.c.l.b16 %v1335
    %v1930 = vunpack.c.h.b16 %v1335
    %v1931 = vunpack.c.l.b16 %v1336
    %v1932 = vunpack.c.h.b16 %v1336
    %v1933 = vunpack.c.l.b16 %v1337
    %v1934 = vunpack.c.h.b16 %v1337
    %v1935 = vunpack.c.l.b16 %v1338
    %v1936 = vunpack.c.h.b16 %v1338
    %v1937 = vunpack.c.l.b16 %v1339
    %v1938 = vunpack.c.h.b16 %v1339
    %v1939 = vunpack.c.l.b16 %v1340
    %v1940 = vunpack.c.h.b16 %v1340
    %v1941 = vunpack.c.l.b16 %v1341
    %v1942 = vunpack.c.h.b16 %v1341
    %v1943 = vunpack.c.l.b16 %v1342
    %v1944 = vunpack.c.h.b16 %v1342
    %v1945 = vunpack.c.l.b16 %v1343
    %v1946 = vunpack.c.h.b16 %v1343
    %v1947 = vunpack.c.l.b16 %v1344
    %v1948 = vunpack.c.h.b16 %v1344
    %v1949 = vunpack.c.l.b16 %v1345
    %v1950 = vunpack.c.h.b16 %v1345
    %v1951 = vunpack.c.l.b16 %v1346
    %v1952 = vunpack.c.h.b16 %v1346
    %v1953 = vunpack.c.l.b16 %v1347
    %v1954 = vunpack.c.h.b16 %v1347
    %v1955 = vunpack.c.l.b16 %v1348
    %v1956 = vunpack.c.h.b16 %v1348
    %v1957 = vunpack.c.l.b16 %v1349
    %v1958 = vunpack.c.h.b16 %v1349
    %v1959 = vunpack.c.l.b16 %v1350
    %v1960 = vunpack.c.h.b16 %v1350
    %v1961 = vunpack.c.l.b16 %v1351
    %v1962 = vunpack.c.h.b16 %v1351
    %v1963 = vunpack.c.l.b16 %v1352
    %v1964 = vunpack.c.h.b16 %v1352
    %v1965 = vunpack.c.l.b16 %v1353
    %v1966 = vunpack.c.h.b16 %v1353
    %v1967 = vunpack.c.l.b16 %v1354
    %v1968 = vunpack.c.h.b16 %v1354
    %v1969 = vunpack.c.l.b16 %v1355
    %v1970 = vunpack.c.h.b16 %v1355
    %v1971 = vunpack.c.l.b16 %v1356
    %v1972 = vunpack.c.h.b16 %v1356
    %v1973 = vunpack.c.l.b16 %v1357
    %v1974 = vunpack.c.h.b16 %v1357
    %v1975 = vunpack.c.l.b16 %v1358
    %v1976 = vunpack.c.h.b16 %v1358
    %v1977 = vunpack.c.l.b16 %v1359
    %v1978 = vunpack.c.h.b16 %v1359
    %v1979 = vunpack.c.l.b16 %v1360
    %v1980 = vunpack.c.h.b16 %v1360
    %v1981 = vunpack.c.l.b16 %v1361
    %v1982 = vunpack.c.h.b16 %v1361
    %v1983 = vunpack.c.l.b16 %v1362
    %v1984 = vunpack.c.h.b16 %v1362
    %v1985 = vunpack.c.l.b16 %v1363
    %v1986 = vunpack.c.h.b16 %v1363
    %v1987 = vunpack.c.l.b16 %v1364
    %v1988 = vunpack.c.h.b16 %v1364
    %v1989 = vunpack.c.l.b16 %v1365
    %v1990 = vunpack.c.h.b16 %v1365
    %v1991 = vunpack.c.l.b16 %v1366
    %v1992 = vunpack.c.h.b16 %v1366
    %v1993 = vunpack.c.l.b16 %v1367
    %v1994 = vunpack.c.h.b16 %v1367
    %v1995 = vunpack.c.l.b16 %v1368
    %v1996 = vunpack.c.h.b16 %v1368
    %v1997 = vunpack.c.l.b16 %v1369
    %v1998 = vunpack.c.h.b16 %v1369
    %v1999 = vunpack.c.l.b16 %v1370
    %v2000 = vunpack.c.h.b16 %v1370
    %v2001 = vunpack.c.l.b16 %v1371
    %v2002 = vunpack.c.h.b16 %v1371
    %v2003 = vunpack.c.l.b16 %v1372
    %v2004 = vunpack.c.h.b16 %v1372
    %v2005 = vunpack.c.l.b16 %v1373
    %v2006 = vunpack.c.h.b16 %v1373
    %v2007 = vunpack.c.l.b16 %v1374
    %v2008 = vunpack.c.h.b16 %v1374
    %v2009 = vunpack.c.l.b16 %v1375
    %v2010 = vunpack.c.h.b16 %v1375
    %v2011 = vunpack.c.l.b16 %v1376
    %v2012 = vunpack.c.h.b16 %v1376
    %v2013 = vunpack.c.l.b16 %v1377
    %v2014 = vunpack.c.h.b16 %v1377
    %v2015 = vunpack.c.l.b16 %v1378
    %v2016 = vunpack.c.h.b16 %v1378
    %v2017 = vunpack.c.l.b16 %v1379
    %v2018 = vunpack.c.h.b16 %v1379
    %v2019 = vunpack.c.l.b16 %v1380
    %v2020 = vunpack.c.h.b16 %v1380
    %v2021 = vunpack.c.l.b16 %v1381
    %v2022 = vunpack.c.h.b16 %v1381
    %v2023 = vunpack.c.l.b16 %v1382
    %v2024 = vunpack.c.h.b16 %v1382
    %v2025 = vunpack.c.l.b16 %v1383
    %v2026 = vunpack.c.h.b16 %v1383
    %v2027 = vunpack.c.l.b16 %v1384
    %v2028 = vunpack.c.h.b16 %v1384
    %v2029 = vunpack.c.l.b16 %v1385
    %v2030 = vunpack.c.h.b16 %v1385
    %v2031 = vunpack.c.l.b16 %v1386
    %v2032 = vunpack.c.h.b16 %v1386
    %v2033 = vunpack.c.l.b16 %v1387
    %v2034 = vunpack.c.h.b16 %v1387
    %v2035 = vunpack.c.l.b16 %v1388
    %v2036 = vunpack.c.h.b16 %v1388
    %v2037 = vunpack.c.l.b16 %v1389
    %v2038 = vunpack.c.h.b16 %v1389
    %v2039 = vunpack.c.l.b16 %v1390
    %v2040 = vunpack.c.h.b16 %v1390
    %v2041 = vunpack.c.l.b16 %v1391
    %v2042 = vunpack.c.h.b16 %v1391
    %v2043 = vunpack.c.l.b16 %v1392
    %v2044 = vunpack.c.h.b16 %v1392
    %v2045 = vunpack.c.l.b16 %v1393
    %v2046 = vunpack.c.h.b16 %v1393
    %v2047 = vunpack.c.l.b16 %v1394
    %v2048 = vunpack.c.h.b16 %v1394
    %v2049 = vunpack.c.l.b16 %v1395
    %v2050 = vunpack.c.h.b16 %v1395
    %v2051 = vunpack.c.l.b16 %v1396
    %v2052 = vunpack.c.h.b16 %v1396
    %v2053 = vunpack.c.l.b16 %v1397
    %v2054 = vunpack.c.h.b16 %v1397
    %v2055 = vunpack.c.l.b16 %v1398
    %v2056 = vunpack.c.h.b16 %v1398
    %v2057 = vunpack.c.l.b16 %v1399
    %v2058 = vunpack.c.h.b16 %v1399
    %v2059 = vunpack.c.l.b16 %v1400
    %v2060 = vunpack.c.h.b16 %v1400
    %v2061 = vunpack.c.l.b16 %v1401
    %v2062 = vunpack.c.h.b16 %v1401
    %v2063 = vunpack.c.l.b16 %v1402
    %v2064 = vunpack.c.h.b16 %v1402
    %v2065 = vunpack.c.l.b16 %v1403
    %v2066 = vunpack.c.h.b16 %v1403
    %v2067 = vunpack.c.l.b16 %v1404
    %v2068 = vunpack.c.h.b16 %v1404
    %v2069 = vunpack.c.l.b16 %v1405
    %v2070 = vunpack.c.h.b16 %v1405
    %v2071 = vunpack.c.l.b16 %v1406
    %v2072 = vunpack.c.h.b16 %v1406
    %v2073 = vunpack.c.l.b16 %v1407
    %v2074 = vunpack.c.h.b16 %v1407
    %v2075 = vunpack.c.l.b16 %v1408
    %v2076 = vunpack.c.h.b16 %v1408
    %v2077 = vunpack.c.l.b16 %v1409
    %v2078 = vunpack.c.h.b16 %v1409
    %v2079 = vunpack.c.l.b16 %v1410
    %v2080 = vunpack.c.h.b16 %v1410
    %v2081 = vunpack.c.l.b16 %v1411
    %v2082 = vunpack.c.h.b16 %v1411
    %v2083 = vunpack.c.l.b16 %v1412
    %v2084 = vunpack.c.h.b16 %v1412
    %v2085 = vunpack.c.l.b16 %v1413
    %v2086 = vunpack.c.h.b16 %v1413
    %v2087 = vunpack.c.l.b16 %v1414
    %v2088 = vunpack.c.h.b16 %v1414
    %v2089 = vunpack.c.l.b16 %v1415
    %v2090 = vunpack.c.h.b16 %v1415
    %v2091 = vunpack.c.l.b16 %v1416
    %v2092 = vunpack.c.h.b16 %v1416
    %v2093 = vunpack.c.l.b16 %v1417
    %v2094 = vunpack.c.h.b16 %v1417
    %v2095 = vunpack.c.l.b16 %v1418
    %v2096 = vunpack.c.h.b16 %v1418
    %v2097 = vunpack.c.l.b16 %v1419
    %v2098 = vunpack.c.h.b16 %v1419
    %v2099 = vunpack.c.l.b16 %v1420
    %v2100 = vunpack.c.h.b16 %v1420
    %v2101 = vunpack.c.l.b16 %v1421
    %v2102 = vunpack.c.h.b16 %v1421
    %v2103 = vunpack.c.l.b16 %v1422
    %v2104 = vunpack.c.h.b16 %v1422
    %v2105 = vunpack.c.l.b16 %v1423
    %v2106 = vunpack.c.h.b16 %v1423
    %v2107 = vunpack.c.l.b16 %v1424
    %v2108 = vunpack.c.h.b16 %v1424
    %v2109 = vunpack.c.l.b16 %v1425
    %v2110 = vunpack.c.h.b16 %v1425
    %v2111 = vunpack.c.l.b16 %v1426
    %v2112 = vunpack.c.h.b16 %v1426
    %v2113 = vunpack.c.l.b16 %v1427
    %v2114 = vunpack.c.h.b16 %v1427
    %v2115 = vunpack.c.l.b16 %v1428
    %v2116 = vunpack.c.h.b16 %v1428
    %v2117 = vunpack.c.l.b16 %v1429
    %v2118 = vunpack.c.h.b16 %v1429
    %v2119 = vunpack.c.l.b16 %v1430
    %v2120 = vunpack.c.h.b16 %v1430
    %v2121 = vunpack.c.l.b16 %v1431
    %v2122 = vunpack.c.h.b16 %v1431
    %v2123 = vunpack.c.l.b16 %v1432
    %v2124 = vunpack.c.h.b16 %v1432
    %v2125 = vunpack.c.l.b16 %v1433
    %v2126 = vunpack.c.h.b16 %v1433
    %v2127 = vunpack.c.l.b16 %v1434
    %v2128 = vunpack.c.h.b16 %v1434
    %v2129 = vunpack.c.l.b16 %v1435
    %v2130 = vunpack.c.h.b16 %v1435
    %v2131 = vunpack.c.l.b16 %v1436
    %v2132 = vunpack.c.h.b16 %v1436
    %v2133 = vunpack.c.l.b16 %v1437
    %v2134 = vunpack.c.h.b16 %v1437
    %v2135 = vunpack.c.l.b16 %v1438
    %v2136 = vunpack.c.h.b16 %v1438
    %v2137 = vunpack.c.l.b16 %v1439
    %v2138 = vunpack.c.h.b16 %v1439
    %v2139 = vunpack.c.l.b16 %v1440
    %v2140 = vunpack.c.h.b16 %v1440
    %v2141 = vunpack.c.l.b16 %v1441
    %v2142 = vunpack.c.h.b16 %v1441
    %v2143 = vunpack.c.l.b16 %v1442
    %v2144 = vunpack.c.h.b16 %v1442
    %v2145 = vunpack.c.l.b16 %v1443
    %v2146 = vunpack.c.h.b16 %v1443
    %v2147 = vunpack.c.l.b16 %v1444
    %v2148 = vunpack.c.h.b16 %v1444
    %v2149 = vunpack.c.l.b16 %v1445
    %v2150 = vunpack.c.h.b16 %v1445
    %v2151 = vunpack.c.l.b16 %v1446
    %v2152 = vunpack.c.h.b16 %v1446
    %v2153 = vunpack.c.l.b16 %v1447
    %v2154 = vunpack.c.h.b16 %v1447
    %v2155 = vunpack.c.l.b16 %v1448
    %v2156 = vunpack.c.h.b16 %v1448
    %v2157 = vunpack.c.l.b16 %v1449
    %v2158 = vunpack.c.h.b16 %v1449
    %v2159 = vunpack.c.l.b16 %v1450
    %v2160 = vunpack.c.h.b16 %v1450
    %v2161 = vunpack.c.l.b16 %v1451
    %v2162 = vunpack.c.h.b16 %v1451
    %v2163 = vunpack.c.l.b16 %v1452
    %v2164 = vunpack.c.h.b16 %v1452
    %v2165 = vunpack.c.l.b16 %v1453
    %v2166 = vunpack.c.h.b16 %v1453
    %v2167 = vunpack.c.l.b16 %v1454
    %v2168 = vunpack.c.h.b16 %v1454
    %v2169 = vunpack.c.l.b16 %v1455
    %v2170 = vunpack.c.h.b16 %v1455
    %v2171 = vunpack.c.l.b16 %v1456
    %v2172 = vunpack.c.h.b16 %v1456
    %v2173 = vunpack.c.l.b16 %v1457
    %v2174 = vunpack.c.h.b16 %v1457
    %v2175 = vunpack.c.l.b16 %v1458
    %v2176 = vunpack.c.h.b16 %v1458
    %v2177 = vunpack.c.l.b16 %v1459
    %v2178 = vunpack.c.h.b16 %v1459
    %v2179 = vunpack.c.l.b16 %v1460
    %v2180 = vunpack.c.h.b16 %v1460
    %v2181 = vunpack.c.l.b16 %v1461
    %v2182 = vunpack.c.h.b16 %v1461
    %v2183 = vunpack.c.l.b16 %v1462
    %v2184 = vunpack.c.h.b16 %v1462
    %v2185 = vunpack.c.l.b16 %v1463
    %v2186 = vunpack.c.h.b16 %v1463
    %v2187 = vunpack.c.l.b16 %v1464
    %v2188 = vunpack.c.h.b16 %v1464
    %v2189 = vunpack.c.l.b16 %v1465
    %v2190 = vunpack.c.h.b16 %v1465
    %v2191 = vunpack.c.l.b16 %v1466
    %v2192 = vunpack.c.h.b16 %v1466
    %v2193 = vunpack.c.l.b16 %v1467
    %v2194 = vunpack.c.h.b16 %v1467
    %v2195 = vunpack.c.l.b16 %v1468
    %v2196 = vunpack.c.h.b16 %v1468
    %v2197 = vunpack.c.l.b16 %v1469
    %v2198 = vunpack.c.h.b16 %v1469
    %v2199 = vunpack.c.l.b16 %v1470
    %v2200 = vunpack.c.h.b16 %v1470
    %v2201 = vunpack.c.l.b16 %v1471
    %v2202 = vunpack.c.h.b16 %v1471
    %v2203 = vunpack.c.l.b16 %v1472
    %v2204 = vunpack.c.h.b16 %v1472
    %v2205 = vunpack.c.l.b16 %v1473
    %v2206 = vunpack.c.h.b16 %v1473
    %v2207 = vunpack.c.l.b16 %v1474
    %v2208 = vunpack.c.h.b16 %v1474
    %v2209 = vunpack.c.l.b16 %v1475
    %v2210 = vunpack.c.h.b16 %v1475
    %v2211 = vunpack.c.l.b16 %v1476
    %v2212 = vunpack.c.h.b16 %v1476
    %v2213 = vunpack.c.l.b16 %v1477
    %v2214 = vunpack.c.h.b16 %v1477
    %v2215 = vunpack.c.l.b16 %v1478
    %v2216 = vunpack.c.h.b16 %v1478
    %v2217 = vunpack.c.l.b16 %v1479
    %v2218 = vunpack.c.h.b16 %v1479
    %v2219 = vunpack.c.l.b16 %v1480
    %v2220 = vunpack.c.h.b16 %v1480
    %v2221 = vunpack.c.l.b16 %v1481
    %v2222 = vunpack.c.h.b16 %v1481
    %v2223 = vunpack.c.l.b16 %v1482
    %v2224 = vunpack.c.h.b16 %v1482
    %v2225 = vunpack.c.l.b16 %v1483
    %v2226 = vunpack.c.h.b16 %v1483
    %v2227 = vunpack.c.l.b16 %v1484
    %v2228 = vunpack.c.h.b16 %v1484
    %v2229 = vunpack.c.l.b16 %v1485
    %v2230 = vunpack.c.h.b16 %v1485
    %v2231 = vunpack.c.l.b16 %v1486
    %v2232 = vunpack.c.h.b16 %v1486
    %v2233 = vunpack.c.l.b16 %v1487
    %v2234 = vunpack.c.h.b16 %v1487
    %v2235 = vunpack.c.l.b16 %v1488
    %v2236 = vunpack.c.h.b16 %v1488
    %v2237 = vunpack.c.l.b16 %v1489
    %v2238 = vunpack.c.h.b16 %v1489
    %v2239 = vunpack.c.l.b16 %v1490
    %v2240 = vunpack.c.h.b16 %v1490
    %v2241 = vunpack.c.l.b16 %v1491
    %v2242 = vunpack.c.h.b16 %v1491
    %v2243 = vunpack.c.l.b16 %v1492
    %v2244 = vunpack.c.h.b16 %v1492
    %v2245 = vunpack.c.l.b16 %v1493
    %v2246 = vunpack.c.h.b16 %v1493
    %v2247 = vunpack.c.l.b16 %v1494
    %v2248 = vunpack.c.h.b16 %v1494
    %v2249 = vunpack.c.l.b16 %v1495
    %v2250 = vunpack.c.h.b16 %v1495
    %v2251 = vunpack.c.l.b16 %v1496
    %v2252 = vunpack.c.h.b16 %v1496
    %v2253 = vunpack.c.l.b16 %v1497
    %v2254 = vunpack.c.h.b16 %v1497
    %v2255 = vunpack.c.l.b16 %v1498
    %v2256 = vunpack.c.h.b16 %v1498
    %v2257 = vunpack.c.l.b16 %v1499
    %v2258 = vunpack.c.h.b16 %v1499
    %v2259 = vunpack.c.l.b16 %v1500
    %v2260 = vunpack.c.h.b16 %v1500
    %v2261 = vunpack.c.l.b16 %v1501
    %v2262 = vunpack.c.h.b16 %v1501
    %v2263 = vunpack.c.l.b16 %v1502
    %v2264 = vunpack.c.h.b16 %v1502
    %v2265 = vunpack.c.l.b16 %v1503
    %v2266 = vunpack.c.h.b16 %v1503
    %v2267 = vunpack.c.l.b16 %v1504
    %v2268 = vunpack.c.h.b16 %v1504
    %v2269 = vunpack.c.l.b16 %v1505
    %v2270 = vunpack.c.h.b16 %v1505
    %v2271 = vunpack.c.l.b16 %v1506
    %v2272 = vunpack.c.h.b16 %v1506
    %v2273 = vunpack.c.l.b16 %v1507
    %v2274 = vunpack.c.h.b16 %v1507
    %v2275 = vunpack.c.l.b16 %v1508
    %v2276 = vunpack.c.h.b16 %v1508
    %v2277 = vpack.c.b16 %v1773, %v1765
    %v2278 = vpack.c.b16 %v1774, %v1766
    %v2279 = vpack.c.b16 %v1775, %v1767
    %v2280 = vpack.c.b16 %v1776, %v1768
    %v2281 = vpack.c.b16 %v1777, %v1769
    %v2282 = vpack.c.b16 %v1778, %v1770
    %v2283 = vpack.c.b16 %v1779, %v1771
    %v2284 = vpack.c.b16 %v1780, %v1772
    %v2285 = vpack.c.b16 %v1789, %v1781
    %v2286 = vpack.c.b16 %v1790, %v1782
    %v2287 = vpack.c.b16 %v1791, %v1783
    %v2288 = vpack.c.b16 %v1792, %v1784
    %v2289 = vpack.c.b16 %v1793, %v1785
    %v2290 = vpack.c.b16 %v1794, %v1786
    %v2291 = vpack.c.b16 %v1795, %v1787
    %v2292 = vpack.c.b16 %v1796, %v1788
    %v2293 = vpack.c.b16 %v1805, %v1797
    %v2294 = vpack.c.b16 %v1806, %v1798
    %v2295 = vpack.c.b16 %v1807, %v1799
    %v2296 = vpack.c.b16 %v1808, %v1800
    %v2297 = vpack.c.b16 %v1809, %v1801
    %v2298 = vpack.c.b16 %v1810, %v1802
    %v2299 = vpack.c.b16 %v1811, %v1803
    %v2300 = vpack.c.b16 %v1812, %v1804
    %v2301 = vpack.c.b16 %v1821, %v1813
    %v2302 = vpack.c.b16 %v1822, %v1814
    %v2303 = vpack.c.b16 %v1823, %v1815
    %v2304 = vpack.c.b16 %v1824, %v1816
    %v2305 = vpack.c.b16 %v1825, %v1817
    %v2306 = vpack.c.b16 %v1826, %v1818
    %v2307 = vpack.c.b16 %v1827, %v1819
    %v2308 = vpack.c.b16 %v1828, %v1820
    %v2309 = vpack.c.b16 %v1837, %v1829
    %v2310 = vpack.c.b16 %v1838, %v1830
    %v2311 = vpack.c.b16 %v1839, %v1831
    %v2312 = vpack.c.b16 %v1840, %v1832
    %v2313 = vpack.c.b16 %v1841, %v1833
    %v2314 = vpack.c.b16 %v1842, %v1834
    %v2315 = vpack.c.b16 %v1843, %v1835
    %v2316 = vpack.c.b16 %v1844, %v1836
    %v2317 = vpack.c.b16 %v1853, %v1845
    %v2318 = vpack.c.b16 %v1854, %v1846
    %v2319 = vpack.c.b16 %v1855, %v1847
    %v2320 = vpack.c.b16 %v1856, %v1848
    %v2321 = vpack.c.b16 %v1857, %v1849
    %v2322 = vpack.c.b16 %v1858, %v1850
    %v2323 = vpack.c.b16 %v1859, %v1851
    %v2324 = vpack.c.b16 %v1860, %v1852
    %v2325 = vpack.c.b16 %v1869, %v1861
    %v2326 = vpack.c.b16 %v1870, %v1862
    %v2327 = vpack.c.b16 %v1871, %v1863
    %v2328 = vpack.c.b16 %v1872, %v1864
    %v2329 = vpack.c.b16 %v1873, %v1865
    %v2330 = vpack.c.b16 %v1874, %v1866
    %v2331 = vpack.c.b16 %v1875, %v1867
    %v2332 = vpack.c.b16 %v1876, %v1868
    %v2333 = vpack.c.b16 %v1885, %v1877
    %v2334 = vpack.c.b16 %v1886, %v1878
    %v2335 = vpack.c.b16 %v1887, %v1879
    %v2336 = vpack.c.b16 %v1888, %v1880
    %v2337 = vpack.c.b16 %v1889, %v1881
    %v2338 = vpack.c.b16 %v1890, %v1882
    %v2339 = vpack.c.b16 %v1891, %v1883
    %v2340 = vpack.c.b16 %v1892, %v1884
    %v2341 = vpack.c.b16 %v1901, %v1893
    %v2342 = vpack.c.b16 %v1902, %v1894
    %v2343 = vpack.c.b16 %v1903, %v1895
    %v2344 = vpack.c.b16 %v1904, %v1896
    %v2345 = vpack.c.b16 %v1905, %v1897
    %v2346 = vpack.c.b16 %v1906, %v1898
    %v2347 = vpack.c.b16 %v1907, %v1899
    %v2348 = vpack.c.b16 %v1908, %v1900
    %v2349 = vpack.c.b16 %v1917, %v1909
    %v2350 = vpack.c.b16 %v1918, %v1910
    %v2351 = vpack.c.b16 %v1919, %v1911
    %v2352 = vpack.c.b16 %v1920, %v1912
    %v2353 = vpack.c.b16 %v1921, %v1913
    %v2354 = vpack.c.b16 %v1922, %v1914
    %v2355 = vpack.c.b16 %v1923, %v1915
    %v2356 = vpack.c.b16 %v1924, %v1916
    %v2357 = vpack.c.b16 %v1933, %v1925
    %v2358 = vpack.c.b16 %v1934, %v1926
    %v2359 = vpack.c.b16 %v1935, %v1927
    %v2360 = vpack.c.b16 %v1936, %v1928
    %v2361 = vpack.c.b16 %v1937, %v1929
    %v2362 = vpack.c.b16 %v1938, %v1930
    %v2363 = vpack.c.b16 %v1939, %v1931
    %v2364 = vpack.c.b16 %v1940, %v1932
    %v2365 = vpack.c.b16 %v1949, %v1941
    %v2366 = vpack.c.b16 %v1950, %v1942
    %v2367 = vpack.c.b16 %v1951, %v1943
    %v2368 = vpack.c.b16 %v1952, %v1944
    %v2369 = vpack.c.b16 %v1953, %v1945
    %v2370 = vpack.c.b16 %v1954, %v1946
    %v2371 = vpack.c.b16 %v1955, %v1947
    %v2372 = vpack.c.b16 %v1956, %v1948
    %v2373 = vpack.c.b16 %v1965, %v1957
    %v2374 = vpack.c.b16 %v1966, %v1958
    %v2375 = vpack.c.b16 %v1967, %v1959
    %v2376 = vpack.c.b16 %v1968, %v1960
    %v2377 = vpack.c.b16 %v1969, %v1961
    %v2378 = vpack.c.b16 %v1970, %v1962
    %v2379 = vpack.c.b16 %v1971, %v1963
    %v2380 = vpack.c.b16 %v1972, %v1964
    %v2381 = vpack.c.b16 %v1981, %v1973
    %v2382 = vpack.c.b16 %v1982, %v1974
    %v2383 = vpack.c.b16 %v1983, %v1975
    %v2384 = vpack.c.b16 %v1984, %v1976
    %v2385 = vpack.c.b16 %v1985, %v1977
    %v2386 = vpack.c.b16 %v1986, %v1978
    %v2387 = vpack.c.b16 %v1987, %v1979
    %v2388 = vpack.c.b16 %v1988, %v1980
    %v2389 = vpack.c.b16 %v1997, %v1989
    %v2390 = vpack.c.b16 %v1998, %v1990
    %v2391 = vpack.c.b16 %v1999, %v1991
    %v2392 = vpack.c.b16 %v2000, %v1992
    %v2393 = vpack.c.b16 %v2001, %v1993
    %v2394 = vpack.c.b16 %v2002, %v1994
    %v2395 = vpack.c.b16 %v2003, %v1995
    %v2396 = vpack.c.b16 %v2004, %v1996
    %v2397 = vpack.c.b16 %v2013, %v2005
    %v2398 = vpack.c.b16 %v2014, %v2006
    %v2399 = vpack.c.b16 %v2015, %v2007
    %v2400 = vpack.c.b16 %v2016, %v2008
    %v2401 = vpack.c.b16 %v2017, %v2009
    %v2402 = vpack.c.b16 %v2018, %v2010
    %v2403 = vpack.c.b16 %v2019, %v2011
    %v2404 = vpack.c.b16 %v2020, %v2012
    %v2405 = vpack.c.b16 %v2029, %v2021
    %v2406 = vpack.c.b16 %v2030, %v2022
    %v2407 = vpack.c.b16 %v2031, %v2023
    %v2408 = vpack.c.b16 %v2032, %v2024
    %v2409 = vpack.c.b16 %v2033, %v2025
    %v2410 = vpack.c.b16 %v2034, %v2026
    %v2411 = vpack.c.b16 %v2035, %v2027
    %v2412 = vpack.c.b16 %v2036, %v2028
    %v2413 = vpack.c.b16 %v2045, %v2037
    %v2414 = vpack.c.b16 %v2046, %v2038
    %v2415 = vpack.c.b16 %v2047, %v2039
    %v2416 = vpack.c.b16 %v2048, %v2040
    %v2417 = vpack.c.b16 %v2049, %v2041
    %v2418 = vpack.c.b16 %v2050, %v2042
    %v2419 = vpack.c.b16 %v2051, %v2043
    %v2420 = vpack.c.b16 %v2052, %v2044
    %v2421 = vpack.c.b16 %v2061, %v2053
    %v2422 = vpack.c.b16 %v2062, %v2054
    %v2423 = vpack.c.b16 %v2063, %v2055
    %v2424 = vpack.c.b16 %v2064, %v2056
    %v2425 = vpack.c.b16 %v2065, %v2057
    %v2426 = vpack.c.b16 %v2066, %v2058
    %v2427 = vpack.c.b16 %v2067, %v2059
    %v2428 = vpack.c.b16 %v2068, %v2060
    %v2429 = vpack.c.b16 %v2077, %v2069
    %v2430 = vpack.c.b16 %v2078, %v2070
    %v2431 = vpack.c.b16 %v2079, %v2071
    %v2432 = vpack.c.b16 %v2080, %v2072
    %v2433 = vpack.c.b16 %v2081, %v2073
    %v2434 = vpack.c.b16 %v2082, %v2074
    %v2435 = vpack.c.b16 %v2083, %v2075
    %v2436 = vpack.c.b16 %v2084, %v2076
    %v2437 = vpack.c.b16 %v2093, %v2085
    %v2438 = vpack.c.b16 %v2094, %v2086
    %v2439 = vpack.c.b16 %v2095, %v2087
    %v2440 = vpack.c.b16 %v2096, %v2088
    %v2441 = vpack.c.b16 %v2097, %v2089
    %v2442 = vpack.c.b16 %v2098, %v2090
    %v2443 = vpack.c.b16 %v2099, %v2091
    %v2444 = vpack.c.b16 %v2100, %v2092
    %v2445 = vpack.c.b16 %v2109, %v2101
    %v2446 = vpack.c.b16 %v2110, %v2102
    %v2447 = vpack.c.b16 %v2111, %v2103
    %v2448 = vpack.c.b16 %v2112, %v2104
    %v2449 = vpack.c.b16 %v2113, %v2105
    %v2450 = vpack.c.b16 %v2114, %v2106
    %v2451 = vpack.c.b16 %v2115, %v2107
    %v2452 = vpack.c.b16 %v2116, %v2108
    %v2453 = vpack.c.b16 %v2125, %v2117
    %v2454 = vpack.c.b16 %v2126, %v2118
    %v2455 = vpack.c.b16 %v2127, %v2119
    %v2456 = vpack.c.b16 %v2128, %v2120
    %v2457 = vpack.c.b16 %v2129, %v2121
    %v2458 = vpack.c.b16 %v2130, %v2122
    %v2459 = vpack.c.b16 %v2131, %v2123
    %v2460 = vpack.c.b16 %v2132, %v2124
    %v2461 = vpack.c.b16 %v2141, %v2133
    %v2462 = vpack.c.b16 %v2142, %v2134
    %v2463 = vpack.c.b16 %v2143, %v2135
    %v2464 = vpack.c.b16 %v2144, %v2136
    %v2465 = vpack.c.b16 %v2145, %v2137
    %v2466 = vpack.c.b16 %v2146, %v2138
    %v2467 = vpack.c.b16 %v2147, %v2139
    %v2468 = vpack.c.b16 %v2148, %v2140
    %v2469 = vpack.c.b16 %v2157, %v2149
    %v2470 = vpack.c.b16 %v2158, %v2150
    %v2471 = vpack.c.b16 %v2159, %v2151
    %v2472 = vpack.c.b16 %v2160, %v2152
    %v2473 = vpack.c.b16 %v2161, %v2153
    %v2474 = vpack.c.b16 %v2162, %v2154
    %v2475 = vpack.c.b16 %v2163, %v2155
    %v2476 = vpack.c.b16 %v2164, %v2156
    %v2477 = vpack.c.b16 %v2173, %v2165
    %v2478 = vpack.c.b16 %v2174, %v2166
    %v2479 = vpack.c.b16 %v2175, %v2167
    %v2480 = vpack.c.b16 %v2176, %v2168
    %v2481 = vpack.c.b16 %v2177, %v2169
    %v2482 = vpack.c.b16 %v2178, %v2170
    %v2483 = vpack.c.b16 %v2179, %v2171
    %v2484 = vpack.c.b16 %v2180, %v2172
    %v2485 = vpack.c.b16 %v2189, %v2181
    %v2486 = vpack.c.b16 %v2190, %v2182
    %v2487 = vpack.c.b16 %v2191, %v2183
    %v2488 = vpack.c.b16 %v2192, %v2184
    %v2489 = vpack.c.b16 %v2193, %v2185
    %v2490 = vpack.c.b16 %v2194, %v2186
    %v2491 = vpack.c.b16 %v2195, %v2187
    %v2492 = vpack.c.b16 %v2196, %v2188
    %v2493 = vpack.c.b16 %v2205, %v2197
    %v2494 = vpack.c.b16 %v2206, %v2198
    %v2495 = vpack.c.b16 %v2207, %v2199
    %v2496 = vpack.c.b16 %v2208, %v2200
    %v2497 = vpack.c.b16 %v2209, %v2201
    %v2498 = vpack.c.b16 %v2210, %v2202
    %v2499 = vpack.c.b16 %v2211, %v2203
    %v2500 = vpack.c.b16 %v2212, %v2204
    %v2501 = vpack.c.b16 %v2221, %v2213
    %v2502 = vpack.c.b16 %v2222, %v2214
    %v2503 = vpack.c.b16 %v2223, %v2215
    %v2504 = vpack.c.b16 %v2224, %v2216
    %v2505 = vpack.c.b16 %v2225, %v2217
    %v2506 = vpack.c.b16 %v2226, %v2218
    %v2507 = vpack.c.b16 %v2227, %v2219
    %v2508 = vpack.c.b16 %v2228, %v2220
    %v2509 = vpack.c.b16 %v2237, %v2229
    %v2510 = vpack.c.b16 %v2238, %v2230
    %v2511 = vpack.c.b16 %v2239, %v2231
    %v2512 = vpack.c.b16 %v2240, %v2232
    %v2513 = vpack.c.b16 %v2241, %v2233
    %v2514 = vpack.c.b16 %v2242, %v2234
    %v2515 = vpack.c.b16 %v2243, %v2235
    %v2516 = vpack.c.b16 %v2244, %v2236
    %v2517 = vpack.c.b16 %v2253, %v2245
    %v2518 = vpack.c.b16 %v2254, %v2246
    %v2519 = vpack.c.b16 %v2255, %v2247
    %v2520 = vpack.c.b16 %v2256, %v2248
    %v2521 = vpack.c.b16 %v2257, %v2249
    %v2522 = vpack.c.b16 %v2258, %v2250
    %v2523 = vpack.c.b16 %v2259, %v2251
    %v2524 = vpack.c.b16 %v2260, %v2252
    %v2525 = vpack.c.b16 %v2269, %v2261
    %v2526 = vpack.c.b16 %v2270, %v2262
    %v2527 = vpack.c.b16 %v2271, %v2263
    %v2528 = vpack.c.b16 %v2272, %v2264
    %v2529 = vpack.c.b16 %v2273, %v2265
    %v2530 = vpack.c.b16 %v2274, %v2266
    %v2531 = vpack.c.b16 %v2275, %v2267
    %v2532 = vpack.c.b16 %v2276, %v2268
    %2789 = vmatprep.subr.bf16.mxu0 %v2278
    %2790 = vmatpush1.bf16.msra.mxu0 %v2277
    %2791 = vmatprep.subr.bf16.mxu0 %v2286
    %2792 = vmatpush1.bf16.msra.mxu0 %v2285
    %2793 = vmatprep.subr.bf16.mxu0 %v2294
    %2794 = vmatpush1.bf16.msra.mxu0 %v2293
    %2795 = vmatprep.subr.bf16.mxu0 %v2302
    %2796 = vmatpush1.bf16.msra.mxu0 %v2301
    %2797 = vmatprep.subr.bf16.mxu0 %v2310
    %2798 = vmatpush1.bf16.msra.mxu0 %v2309
    %2799 = vmatprep.subr.bf16.mxu0 %v2318
    %2800 = vmatpush1.bf16.msra.mxu0 %v2317
    %2801 = vmatprep.subr.bf16.mxu0 %v2326
    %2802 = vmatpush1.bf16.msra.mxu0 %v2325
    %2803 = vmatprep.subr.bf16.mxu0 %v2334
    %2804 = vmatpush1.bf16.msra.mxu0 %v2333
    %2805 = vmatprep.subr.bf16.mxu0 %v2342
    %2806 = vmatpush1.bf16.msra.mxu0 %v2341
    %2807 = vmatprep.subr.bf16.mxu0 %v2350
    %2808 = vmatpush1.bf16.msra.mxu0 %v2349
    %2809 = vmatprep.subr.bf16.mxu0 %v2358
    %2810 = vmatpush1.bf16.msra.mxu0 %v2357
    %2811 = vmatprep.subr.bf16.mxu0 %v2366
    %2812 = vmatpush1.bf16.msra.mxu0 %v2365
    %2813 = vmatprep.subr.bf16.mxu0 %v2374
    %2814 = vmatpush1.bf16.msra.mxu0 %v2373
    %2815 = vmatprep.subr.bf16.mxu0 %v2382
    %2816 = vmatpush1.bf16.msra.mxu0 %v2381
    %2817 = vmatprep.subr.bf16.mxu0 %v2390
    %2818 = vmatpush1.bf16.msra.mxu0 %v2389
    %2819 = vmatprep.subr.bf16.mxu0 %v2398
    %2820 = vmatpush1.bf16.msra.mxu0 %v2397
    %2821 = vmatprep.mubr.bf16.mxu0 %v1250
    %2822 = vmatmul.mubr.bf16.gmra.mrb[0].mxu0 %v1249
    %v2823 = vpop.f32.mrb[0].mxu0
    %v2824 = vadd.f32 0.0, %v2823
    %v2825 = vpop.f32.mrb[0].mxu0
    %v2826 = vadd.f32 0.0, %v2825
    %v2827 = vpop.f32.mrb[0].mxu0
    %v2828 = vpop.f32.mrb[0].mxu0
    %2829 = vdwg.mxu0
    %2830 = vmatprep.subr.bf16.mxu0 %v2406
    %2831 = vmatpush1.bf16.msra.mxu0 %v2405
    %2832 = vmatprep.subr.bf16.mxu0 %v2414
    %2833 = vmatpush1.bf16.msra.mxu0 %v2413
    %2834 = vmatprep.subr.bf16.mxu0 %v2422
    %2835 = vmatpush1.bf16.msra.mxu0 %v2421
    %2836 = vmatprep.subr.bf16.mxu0 %v2430
    %2837 = vmatpush1.bf16.msra.mxu0 %v2429
    %2838 = vmatprep.subr.bf16.mxu0 %v2438
    %2839 = vmatpush1.bf16.msra.mxu0 %v2437
    %2840 = vmatprep.subr.bf16.mxu0 %v2446
    %2841 = vmatpush1.bf16.msra.mxu0 %v2445
    %2842 = vmatprep.subr.bf16.mxu0 %v2454
    %2843 = vmatpush1.bf16.msra.mxu0 %v2453
    %2844 = vmatprep.subr.bf16.mxu0 %v2462
    %2845 = vmatpush1.bf16.msra.mxu0 %v2461
    %2846 = vmatprep.subr.bf16.mxu0 %v2470
    %2847 = vmatpush1.bf16.msra.mxu0 %v2469
    %2848 = vmatprep.subr.bf16.mxu0 %v2478
    %2849 = vmatpush1.bf16.msra.mxu0 %v2477
    %2850 = vmatprep.subr.bf16.mxu0 %v2486
    %2851 = vmatpush1.bf16.msra.mxu0 %v2485
    %2852 = vmatprep.subr.bf16.mxu0 %v2494
    %2853 = vmatpush1.bf16.msra.mxu0 %v2493
    %2854 = vmatprep.subr.bf16.mxu0 %v2502
    %2855 = vmatpush1.bf16.msra.mxu0 %v2501
    %2856 = vmatprep.subr.bf16.mxu0 %v2510
    %2857 = vmatpush1.bf16.msra.mxu0 %v2509
    %2858 = vmatprep.subr.bf16.mxu0 %v2518
    %2859 = vmatpush1.bf16.msra.mxu0 %v2517
    %2860 = vmatprep.subr.bf16.mxu0 %v2526
    %2861 = vmatpush1.bf16.msra.mxu0 %v2525
    %2862 = vmatprep.mubr.bf16.mxu0 %v1252
    %2863 = vmatmul.mubr.bf16.gmra.mrb[0].mxu0 %v1251
    %v2864 = vpop.f32.mrb[0].mxu0
    %v2865 = vadd.f32 %v2824, %v2864
    %v2866 = vpop.f32.mrb[0].mxu0
    %v2867 = vadd.f32 %v2826, %v2866
    %v2868 = vpop.f32.mrb[0].mxu0
    %v2869 = vpop.f32.mrb[0].mxu0
    %2870 = vdwg.mxu0
    %2871 = vmatprep.subr.bf16.mxu0 %v2280
    %2872 = vmatpush1.bf16.msra.mxu0 %v2279
    %2873 = vmatprep.subr.bf16.mxu0 %v2288
    %2874 = vmatpush1.bf16.msra.mxu0 %v2287
    %2875 = vmatprep.subr.bf16.mxu0 %v2296
    %2876 = vmatpush1.bf16.msra.mxu0 %v2295
    %2877 = vmatprep.subr.bf16.mxu0 %v2304
    %2878 = vmatpush1.bf16.msra.mxu0 %v2303
    %2879 = vmatprep.subr.bf16.mxu0 %v2312
    %2880 = vmatpush1.bf16.msra.mxu0 %v2311
    %2881 = vmatprep.subr.bf16.mxu0 %v2320
    %2882 = vmatpush1.bf16.msra.mxu0 %v2319
    %2883 = vmatprep.subr.bf16.mxu0 %v2328
    %2884 = vmatpush1.bf16.msra.mxu0 %v2327
    %2885 = vmatprep.subr.bf16.mxu0 %v2336
    %2886 = vmatpush1.bf16.msra.mxu0 %v2335
    %2887 = vmatprep.subr.bf16.mxu0 %v2344
    %2888 = vmatpush1.bf16.msra.mxu0 %v2343
    %2889 = vmatprep.subr.bf16.mxu0 %v2352
    %2890 = vmatpush1.bf16.msra.mxu0 %v2351
    %2891 = vmatprep.subr.bf16.mxu0 %v2360
    %2892 = vmatpush1.bf16.msra.mxu0 %v2359
    %2893 = vmatprep.subr.bf16.mxu0 %v2368
    %2894 = vmatpush1.bf16.msra.mxu0 %v2367
    %2895 = vmatprep.subr.bf16.mxu0 %v2376
    %2896 = vmatpush1.bf16.msra.mxu0 %v2375
    %2897 = vmatprep.subr.bf16.mxu0 %v2384
    %2898 = vmatpush1.bf16.msra.mxu0 %v2383
    %2899 = vmatprep.subr.bf16.mxu0 %v2392
    %2900 = vmatpush1.bf16.msra.mxu0 %v2391
    %2901 = vmatprep.subr.bf16.mxu0 %v2400
    %2902 = vmatpush1.bf16.msra.mxu0 %v2399
    %2903 = vmatprep.mubr.bf16.mxu0 %v1250
    %2904 = vmatmul.mubr.bf16.gmra.mrb[0].mxu0 %v1249
    %v2905 = vpop.f32.mrb[0].mxu0
    %v2906 = vadd.f32 0.0, %v2905
    %v2907 = vpop.f32.mrb[0].mxu0
    %v2908 = vadd.f32 0.0, %v2907
    %v2909 = vpop.f32.mrb[0].mxu0
    %v2910 = vpop.f32.mrb[0].mxu0
    %2911 = vdwg.mxu0
    %2912 = vmatprep.subr.bf16.mxu0 %v2408
    %2913 = vmatpush1.bf16.msra.mxu0 %v2407
    %2914 = vmatprep.subr.bf16.mxu0 %v2416
    %2915 = vmatpush1.bf16.msra.mxu0 %v2415
    %2916 = vmatprep.subr.bf16.mxu0 %v2424
    %2917 = vmatpush1.bf16.msra.mxu0 %v2423
    %2918 = vmatprep.subr.bf16.mxu0 %v2432
    %2919 = vmatpush1.bf16.msra.mxu0 %v2431
    %2920 = vmatprep.subr.bf16.mxu0 %v2440
    %2921 = vmatpush1.bf16.msra.mxu0 %v2439
    %2922 = vmatprep.subr.bf16.mxu0 %v2448
    %2923 = vmatpush1.bf16.msra.mxu0 %v2447
    %2924 = vmatprep.subr.bf16.mxu0 %v2456
    %2925 = vmatpush1.bf16.msra.mxu0 %v2455
    %2926 = vmatprep.subr.bf16.mxu0 %v2464
    %2927 = vmatpush1.bf16.msra.mxu0 %v2463
    %2928 = vmatprep.subr.bf16.mxu0 %v2472
    %2929 = vmatpush1.bf16.msra.mxu0 %v2471
    %2930 = vmatprep.subr.bf16.mxu0 %v2480
    %2931 = vmatpush1.bf16.msra.mxu0 %v2479
    %2932 = vmatprep.subr.bf16.mxu0 %v2488
    %2933 = vmatpush1.bf16.msra.mxu0 %v2487
    %2934 = vmatprep.subr.bf16.mxu0 %v2496
    %2935 = vmatpush1.bf16.msra.mxu0 %v2495
    %2936 = vmatprep.subr.bf16.mxu0 %v2504
    %2937 = vmatpush1.bf16.msra.mxu0 %v2503
    %2938 = vmatprep.subr.bf16.mxu0 %v2512
    %2939 = vmatpush1.bf16.msra.mxu0 %v2511
    %2940 = vmatprep.subr.bf16.mxu0 %v2520
    %2941 = vmatpush1.bf16.msra.mxu0 %v2519
    %2942 = vmatprep.subr.bf16.mxu0 %v2528
    %2943 = vmatpush1.bf16.msra.mxu0 %v2527
    %2944 = vmatprep.mubr.bf16.mxu0 %v1252
    %2945 = vmatmul.mubr.bf16.gmra.mrb[0].mxu0 %v1251
    %v2946 = vpop.f32.mrb[0].mxu0
    %v2947 = vadd.f32 %v2906, %v2946
    %v2948 = vpop.f32.mrb[0].mxu0
    %v2949 = vadd.f32 %v2908, %v2948
    %v2950 = vpop.f32.mrb[0].mxu0
    %v2951 = vpop.f32.mrb[0].mxu0
    %2952 = vdwg.mxu0
    %2953 = vmatprep.subr.bf16.mxu0 %v2282
    %2954 = vmatpush1.bf16.msra.mxu0 %v2281
    %2955 = vmatprep.subr.bf16.mxu0 %v2290
    %2956 = vmatpush1.bf16.msra.mxu0 %v2289
    %2957 = vmatprep.subr.bf16.mxu0 %v2298
    %2958 = vmatpush1.bf16.msra.mxu0 %v2297
    %2959 = vmatprep.subr.bf16.mxu0 %v2306
    %2960 = vmatpush1.bf16.msra.mxu0 %v2305
    %2961 = vmatprep.subr.bf16.mxu0 %v2314
    %2962 = vmatpush1.bf16.msra.mxu0 %v2313
    %2963 = vmatprep.subr.bf16.mxu0 %v2322
    %2964 = vmatpush1.bf16.msra.mxu0 %v2321
    %2965 = vmatprep.subr.bf16.mxu0 %v2330
    %2966 = vmatpush1.bf16.msra.mxu0 %v2329
    %2967 = vmatprep.subr.bf16.mxu0 %v2338
    %2968 = vmatpush1.bf16.msra.mxu0 %v2337
    %2969 = vmatprep.subr.bf16.mxu0 %v2346
    %2970 = vmatpush1.bf16.msra.mxu0 %v2345
    %2971 = vmatprep.subr.bf16.mxu0 %v2354
    %2972 = vmatpush1.bf16.msra.mxu0 %v2353
    %2973 = vmatprep.subr.bf16.mxu0 %v2362
    %2974 = vmatpush1.bf16.msra.mxu0 %v2361
    %2975 = vmatprep.subr.bf16.mxu0 %v2370
    %2976 = vmatpush1.bf16.msra.mxu0 %v2369
    %2977 = vmatprep.subr.bf16.mxu0 %v2378
    %2978 = vmatpush1.bf16.msra.mxu0 %v2377
    %2979 = vmatprep.subr.bf16.mxu0 %v2386
    %2980 = vmatpush1.bf16.msra.mxu0 %v2385
    %2981 = vmatprep.subr.bf16.mxu0 %v2394
    %2982 = vmatpush1.bf16.msra.mxu0 %v2393
    %2983 = vmatprep.subr.bf16.mxu0 %v2402
    %2984 = vmatpush1.bf16.msra.mxu0 %v2401
    %2985 = vmatprep.mubr.bf16.mxu0 %v1250
    %2986 = vmatmul.mubr.bf16.gmra.mrb[0].mxu0 %v1249
    %v2987 = vpop.f32.mrb[0].mxu0
    %v2988 = vadd.f32 0.0, %v2987
    %v2989 = vpop.f32.mrb[0].mxu0
    %v2990 = vadd.f32 0.0, %v2989
    %v2991 = vpop.f32.mrb[0].mxu0
    %v2992 = vpop.f32.mrb[0].mxu0
    %2993 = vdwg.mxu0
    %2994 = vmatprep.subr.bf16.mxu0 %v2410
    %2995 = vmatpush1.bf16.msra.mxu0 %v2409
    %2996 = vmatprep.subr.bf16.mxu0 %v2418
    %2997 = vmatpush1.bf16.msra.mxu0 %v2417
    %2998 = vmatprep.subr.bf16.mxu0 %v2426
    %2999 = vmatpush1.bf16.msra.mxu0 %v2425
    %3000 = vmatprep.subr.bf16.mxu0 %v2434
    %3001 = vmatpush1.bf16.msra.mxu0 %v2433
    %3002 = vmatprep.subr.bf16.mxu0 %v2442
    %3003 = vmatpush1.bf16.msra.mxu0 %v2441
    %3004 = vmatprep.subr.bf16.mxu0 %v2450
    %3005 = vmatpush1.bf16.msra.mxu0 %v2449
    %3006 = vmatprep.subr.bf16.mxu0 %v2458
    %3007 = vmatpush1.bf16.msra.mxu0 %v2457
    %3008 = vmatprep.subr.bf16.mxu0 %v2466
    %3009 = vmatpush1.bf16.msra.mxu0 %v2465
    %3010 = vmatprep.subr.bf16.mxu0 %v2474
    %3011 = vmatpush1.bf16.msra.mxu0 %v2473
    %3012 = vmatprep.subr.bf16.mxu0 %v2482
    %3013 = vmatpush1.bf16.msra.mxu0 %v2481
    %3014 = vmatprep.subr.bf16.mxu0 %v2490
    %3015 = vmatpush1.bf16.msra.mxu0 %v2489
    %3016 = vmatprep.subr.bf16.mxu0 %v2498
    %3017 = vmatpush1.bf16.msra.mxu0 %v2497
    %3018 = vmatprep.subr.bf16.mxu0 %v2506
    %3019 = vmatpush1.bf16.msra.mxu0 %v2505
    %3020 = vmatprep.subr.bf16.mxu0 %v2514
    %3021 = vmatpush1.bf16.msra.mxu0 %v2513
    %3022 = vmatprep.subr.bf16.mxu0 %v2522
    %3023 = vmatpush1.bf16.msra.mxu0 %v2521
    %3024 = vmatprep.subr.bf16.mxu0 %v2530
    %3025 = vmatpush1.bf16.msra.mxu0 %v2529
    %3026 = vmatprep.mubr.bf16.mxu0 %v1252
    %3027 = vmatmul.mubr.bf16.gmra.mrb[0].mxu0 %v1251
    %v3028 = vpop.f32.mrb[0].mxu0
    %v3029 = vadd.f32 %v2988, %v3028
    %v3030 = vpop.f32.mrb[0].mxu0
    %v3031 = vadd.f32 %v2990, %v3030
    %v3032 = vpop.f32.mrb[0].mxu0
    %v3033 = vpop.f32.mrb[0].mxu0
    %3034 = vdwg.mxu0
    %3035 = vmatprep.subr.bf16.mxu0 %v2284
    %3036 = vmatpush1.bf16.msra.mxu0 %v2283
    %3037 = vmatprep.subr.bf16.mxu0 %v2292
    %3038 = vmatpush1.bf16.msra.mxu0 %v2291
    %3039 = vmatprep.subr.bf16.mxu0 %v2300
    %3040 = vmatpush1.bf16.msra.mxu0 %v2299
    %3041 = vmatprep.subr.bf16.mxu0 %v2308
    %3042 = vmatpush1.bf16.msra.mxu0 %v2307
    %3043 = vmatprep.subr.bf16.mxu0 %v2316
    %3044 = vmatpush1.bf16.msra.mxu0 %v2315
    %3045 = vmatprep.subr.bf16.mxu0 %v2324
    %3046 = vmatpush1.bf16.msra.mxu0 %v2323
    %3047 = vmatprep.subr.bf16.mxu0 %v2332
    %3048 = vmatpush1.bf16.msra.mxu0 %v2331
    %3049 = vmatprep.subr.bf16.mxu0 %v2340
    %3050 = vmatpush1.bf16.msra.mxu0 %v2339
    %3051 = vmatprep.subr.bf16.mxu0 %v2348
    %3052 = vmatpush1.bf16.msra.mxu0 %v2347
    %3053 = vmatprep.subr.bf16.mxu0 %v2356
    %3054 = vmatpush1.bf16.msra.mxu0 %v2355
    %3055 = vmatprep.subr.bf16.mxu0 %v2364
    %3056 = vmatpush1.bf16.msra.mxu0 %v2363
    %3057 = vmatprep.subr.bf16.mxu0 %v2372
    %3058 = vmatpush1.bf16.msra.mxu0 %v2371
    %3059 = vmatprep.subr.bf16.mxu0 %v2380
    %3060 = vmatpush1.bf16.msra.mxu0 %v2379
    %3061 = vmatprep.subr.bf16.mxu0 %v2388
    %3062 = vmatpush1.bf16.msra.mxu0 %v2387
    %3063 = vmatprep.subr.bf16.mxu0 %v2396
    %3064 = vmatpush1.bf16.msra.mxu0 %v2395
    %3065 = vmatprep.subr.bf16.mxu0 %v2404
    %3066 = vmatpush1.bf16.msra.mxu0 %v2403
    %3067 = vmatprep.mubr.bf16.mxu0 %v1250
    %3068 = vmatmul.mubr.bf16.gmra.mrb[0].mxu0 %v1249
    %v3069 = vpop.f32.mrb[0].mxu0
    %v3070 = vadd.f32 0.0, %v3069
    %v3071 = vpop.f32.mrb[0].mxu0
    %v3072 = vadd.f32 0.0, %v3071
    %v3073 = vpop.f32.mrb[0].mxu0
    %v3074 = vpop.f32.mrb[0].mxu0
    %3075 = vdwg.mxu0
    %3076 = vmatprep.subr.bf16.mxu0 %v2412
    %3077 = vmatpush1.bf16.msra.mxu0 %v2411
    %3078 = vmatprep.subr.bf16.mxu0 %v2420
    %3079 = vmatpush1.bf16.msra.mxu0 %v2419
    %3080 = vmatprep.subr.bf16.mxu0 %v2428
    %3081 = vmatpush1.bf16.msra.mxu0 %v2427
    %3082 = vmatprep.subr.bf16.mxu0 %v2436
    %3083 = vmatpush1.bf16.msra.mxu0 %v2435
    %3084 = vmatprep.subr.bf16.mxu0 %v2444
    %3085 = vmatpush1.bf16.msra.mxu0 %v2443
    %3086 = vmatprep.subr.bf16.mxu0 %v2452
    %3087 = vmatpush1.bf16.msra.mxu0 %v2451
    %3088 = vmatprep.subr.bf16.mxu0 %v2460
    %3089 = vmatpush1.bf16.msra.mxu0 %v2459
    %3090 = vmatprep.subr.bf16.mxu0 %v2468
    %3091 = vmatpush1.bf16.msra.mxu0 %v2467
    %3092 = vmatprep.subr.bf16.mxu0 %v2476
    %3093 = vmatpush1.bf16.msra.mxu0 %v2475
    %3094 = vmatprep.subr.bf16.mxu0 %v2484
    %3095 = vmatpush1.bf16.msra.mxu0 %v2483
    %3096 = vmatprep.subr.bf16.mxu0 %v2492
    %3097 = vmatpush1.bf16.msra.mxu0 %v2491
    %3098 = vmatprep.subr.bf16.mxu0 %v2500
    %3099 = vmatpush1.bf16.msra.mxu0 %v2499
    %3100 = vmatprep.subr.bf16.mxu0 %v2508
    %3101 = vmatpush1.bf16.msra.mxu0 %v2507
    %3102 = vmatprep.subr.bf16.mxu0 %v2516
    %3103 = vmatpush1.bf16.msra.mxu0 %v2515
    %3104 = vmatprep.subr.bf16.mxu0 %v2524
    %3105 = vmatpush1.bf16.msra.mxu0 %v2523
    %3106 = vmatprep.subr.bf16.mxu0 %v2532
    %3107 = vmatpush1.bf16.msra.mxu0 %v2531
    %3108 = vmatprep.mubr.bf16.mxu0 %v1252
    %3109 = vmatmul.mubr.bf16.gmra.mrb[0].mxu0 %v1251
    %v3110 = vpop.f32.mrb[0].mxu0
    %v3111 = vadd.f32 %v3070, %v3110
    %v3112 = vpop.f32.mrb[0].mxu0
    %v3113 = vadd.f32 %v3072, %v3112
    %v3114 = vpop.f32.mrb[0].mxu0
    %v3115 = vpop.f32.mrb[0].mxu0
    %3116 = vdwg.mxu0
    %v3117 = vrot.slane %v2865, 4
    %v3118 = vadd.f32 %v2865, %v3117
    %v3119 = vrot.slane %v3118, 2
    %v3120 = vadd.f32 %v3118, %v3119
    %v3121 = vrot.slane %v3120, 1
    %v3122 = vadd.f32 %v3120, %v3121
    %v3123 = vrot.slane %v2867, 4
    %v3124 = vadd.f32 %v2867, %v3123
    %v3125 = vrot.slane %v3124, 2
    %v3126 = vadd.f32 %v3124, %v3125
    %v3127 = vrot.slane %v3126, 1
    %v3128 = vadd.f32 %v3126, %v3127
    %v3129 = vrot.slane %v2947, 4
    %v3130 = vadd.f32 %v2947, %v3129
    %v3131 = vrot.slane %v3130, 2
    %v3132 = vadd.f32 %v3130, %v3131
    %v3133 = vrot.slane %v3132, 1
    %v3134 = vadd.f32 %v3132, %v3133
    %v3135 = vrot.slane %v2949, 4
    %v3136 = vadd.f32 %v2949, %v3135
    %v3137 = vrot.slane %v3136, 2
    %v3138 = vadd.f32 %v3136, %v3137
    %v3139 = vrot.slane %v3138, 1
    %v3140 = vadd.f32 %v3138, %v3139
    %v3141 = vrot.slane %v3029, 4
    %v3142 = vadd.f32 %v3029, %v3141
    %v3143 = vrot.slane %v3142, 2
    %v3144 = vadd.f32 %v3142, %v3143
    %v3145 = vrot.slane %v3144, 1
    %v3146 = vadd.f32 %v3144, %v3145
    %v3147 = vrot.slane %v3031, 4
    %v3148 = vadd.f32 %v3031, %v3147
    %v3149 = vrot.slane %v3148, 2
    %v3150 = vadd.f32 %v3148, %v3149
    %v3151 = vrot.slane %v3150, 1
    %v3152 = vadd.f32 %v3150, %v3151
    %v3153 = vrot.slane %v3111, 4
    %v3154 = vadd.f32 %v3111, %v3153
    %v3155 = vrot.slane %v3154, 2
    %v3156 = vadd.f32 %v3154, %v3155
    %v3157 = vrot.slane %v3156, 1
    %v3158 = vadd.f32 %v3156, %v3157
    %v3159 = vrot.slane %v3113, 4
    %v3160 = vadd.f32 %v3113, %v3159
    %v3161 = vrot.slane %v3160, 2
    %v3162 = vadd.f32 %v3160, %v3161
    %v3163 = vrot.slane %v3162, 1
    %v3164 = vadd.f32 %v3162, %v3163
    %v3165 = vmul.f32 %v3122, %v482
    %v3166 = vmul.f32 %v3128, %v482
    %v3167 = vmul.f32 %v3134, %v482
    %v3168 = vmul.f32 %v3140, %v482
    %v3169 = vmul.f32 %v3146, %v482
    %v3170 = vmul.f32 %v3152, %v482
    %v3171 = vmul.f32 %v3158, %v482
    %v3172 = vmul.f32 %v3164, %v482
    %v3173 = vsub.f32 %v2865, %v3165
    %v3174 = vsub.f32 %v2867, %v3166
    %v3175 = vsub.f32 %v2947, %v3167
    %v3176 = vsub.f32 %v2949, %v3168
    %v3177 = vsub.f32 %v3029, %v3169
    %v3178 = vsub.f32 %v3031, %v3170
    %v3179 = vsub.f32 %v3111, %v3171
    %v3180 = vsub.f32 %v3113, %v3172
    %v3181 = vmul.f32 %v3173, %v3173
    %v3182 = vmul.f32 %v3174, %v3174
    %v3183 = vmul.f32 %v3175, %v3175
    %v3184 = vmul.f32 %v3176, %v3176
    %v3185 = vmul.f32 %v3177, %v3177
    %v3186 = vmul.f32 %v3178, %v3178
    %v3187 = vmul.f32 %v3179, %v3179
    %v3188 = vmul.f32 %v3180, %v3180
    %v3189 = vrot.slane %v3181, 4
    %v3190 = vadd.f32 %v3181, %v3189
    %v3191 = vrot.slane %v3190, 2
    %v3192 = vadd.f32 %v3190, %v3191
    %v3193 = vrot.slane %v3192, 1
    %v3194 = vadd.f32 %v3192, %v3193
    %v3195 = vrot.slane %v3182, 4
    %v3196 = vadd.f32 %v3182, %v3195
    %v3197 = vrot.slane %v3196, 2
    %v3198 = vadd.f32 %v3196, %v3197
    %v3199 = vrot.slane %v3198, 1
    %v3200 = vadd.f32 %v3198, %v3199
    %v3201 = vrot.slane %v3183, 4
    %v3202 = vadd.f32 %v3183, %v3201
    %v3203 = vrot.slane %v3202, 2
    %v3204 = vadd.f32 %v3202, %v3203
    %v3205 = vrot.slane %v3204, 1
    %v3206 = vadd.f32 %v3204, %v3205
    %v3207 = vrot.slane %v3184, 4
    %v3208 = vadd.f32 %v3184, %v3207
    %v3209 = vrot.slane %v3208, 2
    %v3210 = vadd.f32 %v3208, %v3209
    %v3211 = vrot.slane %v3210, 1
    %v3212 = vadd.f32 %v3210, %v3211
    %v3213 = vrot.slane %v3185, 4
    %v3214 = vadd.f32 %v3185, %v3213
    %v3215 = vrot.slane %v3214, 2
    %v3216 = vadd.f32 %v3214, %v3215
    %v3217 = vrot.slane %v3216, 1
    %v3218 = vadd.f32 %v3216, %v3217
    %v3219 = vrot.slane %v3186, 4
    %v3220 = vadd.f32 %v3186, %v3219
    %v3221 = vrot.slane %v3220, 2
    %v3222 = vadd.f32 %v3220, %v3221
    %v3223 = vrot.slane %v3222, 1
    %v3224 = vadd.f32 %v3222, %v3223
    %v3225 = vrot.slane %v3187, 4
    %v3226 = vadd.f32 %v3187, %v3225
    %v3227 = vrot.slane %v3226, 2
    %v3228 = vadd.f32 %v3226, %v3227
    %v3229 = vrot.slane %v3228, 1
    %v3230 = vadd.f32 %v3228, %v3229
    %v3231 = vrot.slane %v3188, 4
    %v3232 = vadd.f32 %v3188, %v3231
    %v3233 = vrot.slane %v3232, 2
    %v3234 = vadd.f32 %v3232, %v3233
    %v3235 = vrot.slane %v3234, 1
    %v3236 = vadd.f32 %v3234, %v3235
    %v3237 = vmul.f32 %v3194, %v482
    %v3238 = vmul.f32 %v3200, %v482
    %v3239 = vmul.f32 %v3206, %v482
    %v3240 = vmul.f32 %v3212, %v482
    %v3241 = vmul.f32 %v3218, %v482
    %v3242 = vmul.f32 %v3224, %v482
    %v3243 = vmul.f32 %v3230, %v482
    %v3244 = vmul.f32 %v3236, %v482
    %v3245 = vld [vmem:[#allocation18] sm:$0xff]
    %v3246 = vadd.f32 %v3237, 0.8
    %v3247 = vadd.f32 %v3238, 0.8
    %v3248 = vadd.f32 %v3239, 0.8
    %v3249 = vadd.f32 %v3240, 0.8
    %v3250 = vadd.f32 %v3241, 0.8
    %v3251 = vadd.f32 %v3242, 0.8
    %v3252 = vadd.f32 %v3243, 0.8
    %v3253 = vadd.f32 %v3244, 0.8
    %v3254 = vrsqrt.pop %v3246
    %v3255 = vrsqrt.pop %v3247
    %v3256 = vrsqrt.pop %v3248
    %v3257 = vrsqrt.pop %v3249
    %v3258 = vrsqrt.pop %v3250
    %v3259 = vrsqrt.pop %v3251
    %v3260 = vrsqrt.pop %v3252
    %v3261 = vrsqrt.pop %v3253
    %v3270 = vcombine.low %v3254, %v3255
    %v3271 = vcombine.low %v3256, %v3257
    %v3272 = vcombine.low %v3258, %v3259
    %v3273 = vcombine.low %v3260, %v3261
    %v3275 = vunpack.c.l.s4 1966171168
    %v3276 = vunpack.c.0.s8 %v3275
    %v3277 = vlaneseq
    %v3278 = vshrl.u32 %v3277, 7
    %v3279 = vsub.s32 %v3276, %v3278
    %v3280 = vrot.slane %v3270, %v3279
    %v3282 = vunpack.c.l.s4 1966171168
    %v3283 = vunpack.c.0.s8 %v3282
    %v3284 = vlaneseq
    %v3285 = vshrl.u32 %v3284, 7
    %v3286 = vsub.s32 %v3283, %v3285
    %v3287 = vrot.slane %v3271, %v3286
    %v3289 = vunpack.c.l.s4 1966171168
    %v3290 = vunpack.c.0.s8 %v3289
    %v3291 = vlaneseq
    %v3292 = vshrl.u32 %v3291, 7
    %v3293 = vsub.s32 %v3290, %v3292
    %v3294 = vrot.slane %v3272, %v3293
    %v3296 = vunpack.c.l.s4 1966171168
    %v3297 = vunpack.c.0.s8 %v3296
    %v3298 = vlaneseq
    %v3299 = vshrl.u32 %v3298, 7
    %v3300 = vsub.s32 %v3297, %v3299
    %v3301 = vrot.slane %v3273, %v3300
    %v3302 = vcombine.low %v3280, %v3287
    %v3303 = vcombine.low %v3294, %v3301
    %v3305 = vunpack.c.l.s4 1966171168
    %v3306 = vunpack.c.0.s8 %v3305
    %v3307 = vlaneseq
    %v3308 = vshrl.u32 %v3307, 7
    %v3309 = vsub.s32 %v3306, %v3308
    %v3310 = vrot.slane %v3302, %v3309
    %v3312 = vunpack.c.l.s4 1966171168
    %v3313 = vunpack.c.0.s8 %v3312
    %v3314 = vlaneseq
    %v3315 = vshrl.u32 %v3314, 7
    %v3316 = vsub.s32 %v3313, %v3315
    %v3317 = vrot.slane %v3303, %v3316
    %v3318 = vcombine.low %v3310, %v3317
    %v3320 = vmul.f32 %v3245, %v3318
    %v3321 = vld [vmem:[#allocation19] sm:$0xff]
    %v3323 = vlaneseq
    %v3324 = vshrl.u32 %v3323, 7
    %v3325 = vsub.s32 0, %v3324
    %v3326 = vrot.slane %v3320, %v3325
    %v3327 = vlaneseq
    %v3328 = vshrl.u32 %v3327, 7
    %v3329 = vsub.s32 1, %v3328
    %v3330 = vrot.slane %v3320, %v3329
    %v3331 = vlaneseq
    %v3332 = vshrl.u32 %v3331, 7
    %v3333 = vsub.s32 2, %v3332
    %v3334 = vrot.slane %v3320, %v3333
    %v3335 = vlaneseq
    %v3336 = vshrl.u32 %v3335, 7
    %v3337 = vsub.s32 3, %v3336
    %v3338 = vrot.slane %v3320, %v3337
    %v3339 = vlaneseq
    %v3340 = vshrl.u32 %v3339, 7
    %v3341 = vsub.s32 4, %v3340
    %v3342 = vrot.slane %v3320, %v3341
    %v3343 = vlaneseq
    %v3344 = vshrl.u32 %v3343, 7
    %v3345 = vsub.s32 5, %v3344
    %v3346 = vrot.slane %v3320, %v3345
    %v3347 = vlaneseq
    %v3348 = vshrl.u32 %v3347, 7
    %v3349 = vsub.s32 6, %v3348
    %v3350 = vrot.slane %v3320, %v3349
    %v3351 = vlaneseq
    %v3352 = vshrl.u32 %v3351, 7
    %v3353 = vsub.s32 7, %v3352
    %v3354 = vrot.slane %v3320, %v3353
    %v3363 = vmul.f32 %v3165, %v3326
    %v3364 = vmul.f32 %v3166, %v3330
    %v3365 = vmul.f32 %v3167, %v3334
    %v3366 = vmul.f32 %v3168, %v3338
    %v3367 = vmul.f32 %v3169, %v3342
    %v3368 = vmul.f32 %v3170, %v3346
    %v3369 = vmul.f32 %v3171, %v3350
    %v3370 = vmul.f32 %v3172, %v3354
    %v3379 = vcombine.low %v3363, %v3364
    %v3380 = vcombine.low %v3365, %v3366
    %v3381 = vcombine.low %v3367, %v3368
    %v3382 = vcombine.low %v3369, %v3370
    %v3384 = vunpack.c.l.s4 1966171168
    %v3385 = vunpack.c.0.s8 %v3384
    %v3386 = vlaneseq
    %v3387 = vshrl.u32 %v3386, 7
    %v3388 = vsub.s32 %v3385, %v3387
    %v3389 = vrot.slane %v3379, %v3388
    %v3391 = vunpack.c.l.s4 1966171168
    %v3392 = vunpack.c.0.s8 %v3391
    %v3393 = vlaneseq
    %v3394 = vshrl.u32 %v3393, 7
    %v3395 = vsub.s32 %v3392, %v3394
    %v3396 = vrot.slane %v3380, %v3395
    %v3398 = vunpack.c.l.s4 1966171168
    %v3399 = vunpack.c.0.s8 %v3398
    %v3400 = vlaneseq
    %v3401 = vshrl.u32 %v3400, 7
    %v3402 = vsub.s32 %v3399, %v3401
    %v3403 = vrot.slane %v3381, %v3402
    %v3405 = vunpack.c.l.s4 1966171168
    %v3406 = vunpack.c.0.s8 %v3405
    %v3407 = vlaneseq
    %v3408 = vshrl.u32 %v3407, 7
    %v3409 = vsub.s32 %v3406, %v3408
    %v3410 = vrot.slane %v3382, %v3409
    %v3411 = vcombine.low %v3389, %v3396
    %v3412 = vcombine.low %v3403, %v3410
    %v3414 = vunpack.c.l.s4 1966171168
    %v3415 = vunpack.c.0.s8 %v3414
    %v3416 = vlaneseq
    %v3417 = vshrl.u32 %v3416, 7
    %v3418 = vsub.s32 %v3415, %v3417
    %v3419 = vrot.slane %v3411, %v3418
    %v3421 = vunpack.c.l.s4 1966171168
    %v3422 = vunpack.c.0.s8 %v3421
    %v3423 = vlaneseq
    %v3424 = vshrl.u32 %v3423, 7
    %v3425 = vsub.s32 %v3422, %v3424
    %v3426 = vrot.slane %v3412, %v3425
    %v3427 = vcombine.low %v3419, %v3426
    %v3429 = vsub.f32 %v3321, %v3427
    %v3430 = vmul.f32 %v2865, %v3326
    %v3431 = vmul.f32 %v2867, %v3330
    %v3432 = vmul.f32 %v2947, %v3334
    %v3433 = vmul.f32 %v2949, %v3338
    %v3434 = vmul.f32 %v3029, %v3342
    %v3435 = vmul.f32 %v3031, %v3346
    %v3436 = vmul.f32 %v3111, %v3350
    %v3437 = vmul.f32 %v3113, %v3354
    %v3439 = vlaneseq
    %v3440 = vshrl.u32 %v3439, 7
    %v3441 = vsub.s32 0, %v3440
    %v3442 = vrot.slane %v3429, %v3441
    %v3443 = vlaneseq
    %v3444 = vshrl.u32 %v3443, 7
    %v3445 = vsub.s32 1, %v3444
    %v3446 = vrot.slane %v3429, %v3445
    %v3447 = vlaneseq
    %v3448 = vshrl.u32 %v3447, 7
    %v3449 = vsub.s32 2, %v3448
    %v3450 = vrot.slane %v3429, %v3449
    %v3451 = vlaneseq
    %v3452 = vshrl.u32 %v3451, 7
    %v3453 = vsub.s32 3, %v3452
    %v3454 = vrot.slane %v3429, %v3453
    %v3455 = vlaneseq
    %v3456 = vshrl.u32 %v3455, 7
    %v3457 = vsub.s32 4, %v3456
    %v3458 = vrot.slane %v3429, %v3457
    %v3459 = vlaneseq
    %v3460 = vshrl.u32 %v3459, 7
    %v3461 = vsub.s32 5, %v3460
    %v3462 = vrot.slane %v3429, %v3461
    %v3463 = vlaneseq
    %v3464 = vshrl.u32 %v3463, 7
    %v3465 = vsub.s32 6, %v3464
    %v3466 = vrot.slane %v3429, %v3465
    %v3467 = vlaneseq
    %v3468 = vshrl.u32 %v3467, 7
    %v3469 = vsub.s32 7, %v3468
    %v3470 = vrot.slane %v3429, %v3469
    %v3479 = vadd.f32 %v3430, %v3442
    %v3480 = vadd.f32 %v3431, %v3446
    %v3481 = vadd.f32 %v3432, %v3450
    %v3482 = vadd.f32 %v3433, %v3454
    %v3483 = vadd.f32 %v3434, %v3458
    %v3484 = vadd.f32 %v3435, %v3462
    %v3485 = vadd.f32 %v3436, %v3466
    %v3486 = vadd.f32 %v3437, %v3470
    %vm3487 = vcmp.gt.f32.partialorder %v3479, 0.0
    %vm3488 = vcmp.gt.f32.partialorder %v3480, 0.0
    %vm3489 = vcmp.gt.f32.partialorder %v3481, 0.0
    %vm3490 = vcmp.gt.f32.partialorder %v3482, 0.0
    %vm3491 = vcmp.gt.f32.partialorder %v3483, 0.0
    %vm3492 = vcmp.gt.f32.partialorder %v3484, 0.0
    %vm3493 = vcmp.gt.f32.partialorder %v3485, 0.0
    %vm3494 = vcmp.gt.f32.partialorder %v3486, 0.0
    %v3495 = vmul.f32 %v3479, 0.2
    %v3496 = vmul.f32 %v3480, 0.2
    %v3497 = vmul.f32 %v3481, 0.2
    %v3498 = vmul.f32 %v3482, 0.2
    %v3499 = vmul.f32 %v3483, 0.2
    %v3500 = vmul.f32 %v3484, 0.2
    %v3501 = vmul.f32 %v3485, 0.2
    %v3502 = vmul.f32 %v3486, 0.2
    %v3503 = vsel %vm3487, %v3479, %v3495
    %v3504 = vsel %vm3488, %v3480, %v3496
    %v3505 = vsel %vm3489, %v3481, %v3497
    %v3506 = vsel %vm3490, %v3482, %v3498
    %v3507 = vsel %vm3491, %v3483, %v3499
    %v3508 = vsel %vm3492, %v3484, %v3500
    %v3509 = vsel %vm3493, %v3485, %v3501
    %v3510 = vsel %vm3494, %v3486, %v3502
    %v3511 = vpack.c.bf16 %v3503, %v3503
    %v3512 = vpack.c.bf16 %v3504, %v3504
    %v3513 = vpack.c.bf16 %v3505, %v3505
    %v3514 = vpack.c.bf16 %v3506, %v3506
    %v3515 = vpack.c.bf16 %v3507, %v3507
    %v3516 = vpack.c.bf16 %v3508, %v3508
    %v3517 = vpack.c.bf16 %v3509, %v3509
    %v3518 = vpack.c.bf16 %v3510, %v3510
    %v3519 = vld [vmem:[#allocation21] sm:$0xff]
    %v3520 = vld [vmem:[#allocation21 + $0x8] sm:$0xff]
    %v3521 = vld [vmem:[#allocation21 + $0x10] sm:$0xff]
    %v3522 = vld [vmem:[#allocation21 + $0x18] sm:$0xf]
    %v3523 = vld [vmem:[#allocation21 + $0x1c] sm:$0xff]
    %v3524 = vld [vmem:[#allocation21 + $0x24] sm:$0xff]
    %v3525 = vld [vmem:[#allocation21 + $0x2c] sm:$0xff]
    %v3526 = vld [vmem:[#allocation21 + $0x34] sm:$0xf]
    %v3527 = vld [vmem:[#allocation21 + $0x38] sm:$0xff]
    %v3528 = vld [vmem:[#allocation21 + $0x40] sm:$0xff]
    %v3529 = vld [vmem:[#allocation21 + $0x48] sm:$0xff]
    %v3530 = vld [vmem:[#allocation21 + $0x50] sm:$0xf]
    %v3531 = vld [vmem:[#allocation21 + $0x54] sm:$0xff]
    %v3532 = vld [vmem:[#allocation21 + $0x5c] sm:$0xff]
    %v3533 = vld [vmem:[#allocation21 + $0x64] sm:$0xff]
    %v3534 = vld [vmem:[#allocation21 + $0x6c] sm:$0xf]
    %v3535 = vld [vmem:[#allocation21 + $0x70] sm:$0xff]
    %v3536 = vld [vmem:[#allocation21 + $0x78] sm:$0xff]
    %v3537 = vld [vmem:[#allocation21 + $0x80] sm:$0xff]
    %v3538 = vld [vmem:[#allocation21 + $0x88] sm:$0xf]
    %v3539 = vld [vmem:[#allocation21 + $0x8c] sm:$0xff]
    %v3540 = vld [vmem:[#allocation21 + $0x94] sm:$0xff]
    %v3541 = vld [vmem:[#allocation21 + $0x9c] sm:$0xff]
    %v3542 = vld [vmem:[#allocation21 + $0xa4] sm:$0xf]
    %v3543 = vld [vmem:[#allocation21 + $0xa8] sm:$0xff]
    %v3544 = vld [vmem:[#allocation21 + $0xb0] sm:$0xff]
    %v3545 = vld [vmem:[#allocation21 + $0xb8] sm:$0xff]
    %v3546 = vld [vmem:[#allocation21 + $0xc0] sm:$0xf]
    %v3547 = vld [vmem:[#allocation21 + $0xc4] sm:$0xff]
    %v3548 = vld [vmem:[#allocation21 + $0xcc] sm:$0xff]
    %v3549 = vld [vmem:[#allocation21 + $0xd4] sm:$0xff]
    %v3550 = vld [vmem:[#allocation21 + $0xdc] sm:$0xf]
    %v3551 = vld [vmem:[#allocation21 + $0xe0] sm:$0xff]
    %v3552 = vld [vmem:[#allocation21 + $0xe8] sm:$0xff]
    %v3553 = vld [vmem:[#allocation21 + $0xf0] sm:$0xff]
    %v3554 = vld [vmem:[#allocation21 + $0xf8] sm:$0xf]
    %v3555 = vld [vmem:[#allocation21 + $0xfc] sm:$0xff]
    %v3556 = vld [vmem:[#allocation21 + $0x104] sm:$0xff]
    %v3557 = vld [vmem:[#allocation21 + $0x10c] sm:$0xff]
    %v3558 = vld [vmem:[#allocation21 + $0x114] sm:$0xf]
    %v3559 = vld [vmem:[#allocation21 + $0x118] sm:$0xff]
    %v3560 = vld [vmem:[#allocation21 + $0x120] sm:$0xff]
    %v3561 = vld [vmem:[#allocation21 + $0x128] sm:$0xff]
    %v3562 = vld [vmem:[#allocation21 + $0x130] sm:$0xf]
    %v3563 = vld [vmem:[#allocation21 + $0x134] sm:$0xff]
    %v3564 = vld [vmem:[#allocation21 + $0x13c] sm:$0xff]
    %v3565 = vld [vmem:[#allocation21 + $0x144] sm:$0xff]
    %v3566 = vld [vmem:[#allocation21 + $0x14c] sm:$0xf]
    %v3567 = vld [vmem:[#allocation21 + $0x150] sm:$0xff]
    %v3568 = vld [vmem:[#allocation21 + $0x158] sm:$0xff]
    %v3569 = vld [vmem:[#allocation21 + $0x160] sm:$0xff]
    %v3570 = vld [vmem:[#allocation21 + $0x168] sm:$0xf]
    %v3571 = vld [vmem:[#allocation21 + $0x16c] sm:$0xff]
    %v3572 = vld [vmem:[#allocation21 + $0x174] sm:$0xff]
    %v3573 = vld [vmem:[#allocation21 + $0x17c] sm:$0xff]
    %v3574 = vld [vmem:[#allocation21 + $0x184] sm:$0xf]
    %v3575 = vld [vmem:[#allocation21 + $0x188] sm:$0xff]
    %v3576 = vld [vmem:[#allocation21 + $0x190] sm:$0xff]
    %v3577 = vld [vmem:[#allocation21 + $0x198] sm:$0xff]
    %v3578 = vld [vmem:[#allocation21 + $0x1a0] sm:$0xf]
    %v3579 = vld [vmem:[#allocation21 + $0x1a4] sm:$0xff]
    %v3580 = vld [vmem:[#allocation21 + $0x1ac] sm:$0xff]
    %v3581 = vld [vmem:[#allocation21 + $0x1b4] sm:$0xff]
    %v3582 = vld [vmem:[#allocation21 + $0x1bc] sm:$0xf]
    %v3583 = vld [vmem:[#allocation21 + $0x1c0] sm:$0xff]
    %v3584 = vld [vmem:[#allocation21 + $0x1c8] sm:$0xff]
    %v3585 = vld [vmem:[#allocation21 + $0x1d0] sm:$0xff]
    %v3586 = vld [vmem:[#allocation21 + $0x1d8] sm:$0xf]
    %v3587 = vld [vmem:[#allocation21 + $0x1dc] sm:$0xff]
    %v3588 = vld [vmem:[#allocation21 + $0x1e4] sm:$0xff]
    %v3589 = vld [vmem:[#allocation21 + $0x1ec] sm:$0xff]
    %v3590 = vld [vmem:[#allocation21 + $0x1f4] sm:$0xf]
    %v3591 = vld [vmem:[#allocation21 + $0x1f8] sm:$0xff]
    %v3592 = vld [vmem:[#allocation21 + $0x200] sm:$0xff]
    %v3593 = vld [vmem:[#allocation21 + $0x208] sm:$0xff]
    %v3594 = vld [vmem:[#allocation21 + $0x210] sm:$0xf]
    %v3595 = vld [vmem:[#allocation21 + $0x214] sm:$0xff]
    %v3596 = vld [vmem:[#allocation21 + $0x21c] sm:$0xff]
    %v3597 = vld [vmem:[#allocation21 + $0x224] sm:$0xff]
    %v3598 = vld [vmem:[#allocation21 + $0x22c] sm:$0xf]
    %v3599 = vld [vmem:[#allocation21 + $0x230] sm:$0xff]
    %v3600 = vld [vmem:[#allocation21 + $0x238] sm:$0xff]
    %v3601 = vld [vmem:[#allocation21 + $0x240] sm:$0xff]
    %v3602 = vld [vmem:[#allocation21 + $0x248] sm:$0xf]
    %v3603 = vld [vmem:[#allocation21 + $0x24c] sm:$0xff]
    %v3604 = vld [vmem:[#allocation21 + $0x254] sm:$0xff]
    %v3605 = vld [vmem:[#allocation21 + $0x25c] sm:$0xff]
    %v3606 = vld [vmem:[#allocation21 + $0x264] sm:$0xf]
    %v3607 = vld [vmem:[#allocation21 + $0x268] sm:$0xff]
    %v3608 = vld [vmem:[#allocation21 + $0x270] sm:$0xff]
    %v3609 = vld [vmem:[#allocation21 + $0x278] sm:$0xff]
    %v3610 = vld [vmem:[#allocation21 + $0x280] sm:$0xf]
    %v3611 = vld [vmem:[#allocation21 + $0x284] sm:$0xff]
    %v3612 = vld [vmem:[#allocation21 + $0x28c] sm:$0xff]
    %v3613 = vld [vmem:[#allocation21 + $0x294] sm:$0xff]
    %v3614 = vld [vmem:[#allocation21 + $0x29c] sm:$0xf]
    %v3615 = vld [vmem:[#allocation21 + $0x2a0] sm:$0xff]
    %v3616 = vld [vmem:[#allocation21 + $0x2a8] sm:$0xff]
    %v3617 = vld [vmem:[#allocation21 + $0x2b0] sm:$0xff]
    %v3618 = vld [vmem:[#allocation21 + $0x2b8] sm:$0xf]
    %v3619 = vld [vmem:[#allocation21 + $0x2bc] sm:$0xff]
    %v3620 = vld [vmem:[#allocation21 + $0x2c4] sm:$0xff]
    %v3621 = vld [vmem:[#allocation21 + $0x2cc] sm:$0xff]
    %v3622 = vld [vmem:[#allocation21 + $0x2d4] sm:$0xf]
    %v3623 = vld [vmem:[#allocation21 + $0x2d8] sm:$0xff]
    %v3624 = vld [vmem:[#allocation21 + $0x2e0] sm:$0xff]
    %v3625 = vld [vmem:[#allocation21 + $0x2e8] sm:$0xff]
    %v3626 = vld [vmem:[#allocation21 + $0x2f0] sm:$0xf]
    %v3627 = vld [vmem:[#allocation21 + $0x2f4] sm:$0xff]
    %v3628 = vld [vmem:[#allocation21 + $0x2fc] sm:$0xff]
    %v3629 = vld [vmem:[#allocation21 + $0x304] sm:$0xff]
    %v3630 = vld [vmem:[#allocation21 + $0x30c] sm:$0xf]
    %v3631 = vld [vmem:[#allocation21 + $0x310] sm:$0xff]
    %v3632 = vld [vmem:[#allocation21 + $0x318] sm:$0xff]
    %v3633 = vld [vmem:[#allocation21 + $0x320] sm:$0xff]
    %v3634 = vld [vmem:[#allocation21 + $0x328] sm:$0xf]
    %v3635 = vld [vmem:[#allocation21 + $0x32c] sm:$0xff]
    %v3636 = vld [vmem:[#allocation21 + $0x334] sm:$0xff]
    %v3637 = vld [vmem:[#allocation21 + $0x33c] sm:$0xff]
    %v3638 = vld [vmem:[#allocation21 + $0x344] sm:$0xf]
    %v3639 = vld [vmem:[#allocation21 + $0x348] sm:$0xff]
    %v3640 = vld [vmem:[#allocation21 + $0x350] sm:$0xff]
    %v3641 = vld [vmem:[#allocation21 + $0x358] sm:$0xff]
    %v3642 = vld [vmem:[#allocation21 + $0x360] sm:$0xf]
    %v3643 = vld [vmem:[#allocation21 + $0x364] sm:$0xff]
    %v3644 = vld [vmem:[#allocation21 + $0x36c] sm:$0xff]
    %v3645 = vld [vmem:[#allocation21 + $0x374] sm:$0xff]
    %v3646 = vld [vmem:[#allocation21 + $0x37c] sm:$0xf]
    %v3647 = vld [vmem:[#allocation21 + $0x380] sm:$0xff]
    %v3648 = vld [vmem:[#allocation21 + $0x388] sm:$0xff]
    %v3649 = vld [vmem:[#allocation21 + $0x390] sm:$0xff]
    %v3650 = vld [vmem:[#allocation21 + $0x398] sm:$0xf]
    %v3651 = vld [vmem:[#allocation21 + $0x39c] sm:$0xff]
    %v3652 = vld [vmem:[#allocation21 + $0x3a4] sm:$0xff]
    %v3653 = vld [vmem:[#allocation21 + $0x3ac] sm:$0xff]
    %v3654 = vld [vmem:[#allocation21 + $0x3b4] sm:$0xf]
    %v3655 = vld [vmem:[#allocation21 + $0x3b8] sm:$0xff]
    %v3656 = vld [vmem:[#allocation21 + $0x3c0] sm:$0xff]
    %v3657 = vld [vmem:[#allocation21 + $0x3c8] sm:$0xff]
    %v3658 = vld [vmem:[#allocation21 + $0x3d0] sm:$0xf]
    %v3659 = vld [vmem:[#allocation21 + $0x3d4] sm:$0xff]
    %v3660 = vld [vmem:[#allocation21 + $0x3dc] sm:$0xff]
    %v3661 = vld [vmem:[#allocation21 + $0x3e4] sm:$0xff]
    %v3662 = vld [vmem:[#allocation21 + $0x3ec] sm:$0xf]
    %v3663 = vld [vmem:[#allocation21 + $0x3f0] sm:$0xff]
    %v3664 = vld [vmem:[#allocation21 + $0x3f8] sm:$0xff]
    %v3665 = vld [vmem:[#allocation21 + $0x400] sm:$0xff]
    %v3666 = vld [vmem:[#allocation21 + $0x408] sm:$0xf]
    %v3667 = vld [vmem:[#allocation21 + $0x40c] sm:$0xff]
    %v3668 = vld [vmem:[#allocation21 + $0x414] sm:$0xff]
    %v3669 = vld [vmem:[#allocation21 + $0x41c] sm:$0xff]
    %v3670 = vld [vmem:[#allocation21 + $0x424] sm:$0xf]
    %v3671 = vld [vmem:[#allocation21 + $0x428] sm:$0xff]
    %v3672 = vld [vmem:[#allocation21 + $0x430] sm:$0xff]
    %v3673 = vld [vmem:[#allocation21 + $0x438] sm:$0xff]
    %v3674 = vld [vmem:[#allocation21 + $0x440] sm:$0xf]
    %v3675 = vld [vmem:[#allocation21 + $0x444] sm:$0xff]
    %v3676 = vld [vmem:[#allocation21 + $0x44c] sm:$0xff]
    %v3677 = vld [vmem:[#allocation21 + $0x454] sm:$0xff]
    %v3678 = vld [vmem:[#allocation21 + $0x45c] sm:$0xf]
    %v3679 = vld [vmem:[#allocation21 + $0x460] sm:$0xff]
    %v3680 = vld [vmem:[#allocation21 + $0x468] sm:$0xff]
    %v3681 = vld [vmem:[#allocation21 + $0x470] sm:$0xff]
    %v3682 = vld [vmem:[#allocation21 + $0x478] sm:$0xf]
    %v3683 = vld [vmem:[#allocation21 + $0x47c] sm:$0xff]
    %v3684 = vld [vmem:[#allocation21 + $0x484] sm:$0xff]
    %v3685 = vld [vmem:[#allocation21 + $0x48c] sm:$0xff]
    %v3686 = vld [vmem:[#allocation21 + $0x494] sm:$0xf]
    %v3687 = vld [vmem:[#allocation21 + $0x498] sm:$0xff]
    %v3688 = vld [vmem:[#allocation21 + $0x4a0] sm:$0xff]
    %v3689 = vld [vmem:[#allocation21 + $0x4a8] sm:$0xff]
    %v3690 = vld [vmem:[#allocation21 + $0x4b0] sm:$0xf]
    %v3691 = vld [vmem:[#allocation21 + $0x4b4] sm:$0xff]
    %v3692 = vld [vmem:[#allocation21 + $0x4bc] sm:$0xff]
    %v3693 = vld [vmem:[#allocation21 + $0x4c4] sm:$0xff]
    %v3694 = vld [vmem:[#allocation21 + $0x4cc] sm:$0xf]
    %v3695 = vld [vmem:[#allocation21 + $0x4d0] sm:$0xff]
    %v3696 = vld [vmem:[#allocation21 + $0x4d8] sm:$0xff]
    %v3697 = vld [vmem:[#allocation21 + $0x4e0] sm:$0xff]
    %v3698 = vld [vmem:[#allocation21 + $0x4e8] sm:$0xf]
    %v3699 = vld [vmem:[#allocation21 + $0x4ec] sm:$0xff]
    %v3700 = vld [vmem:[#allocation21 + $0x4f4] sm:$0xff]
    %v3701 = vld [vmem:[#allocation21 + $0x4fc] sm:$0xff]
    %v3702 = vld [vmem:[#allocation21 + $0x504] sm:$0xf]
    %v3703 = vld [vmem:[#allocation21 + $0x508] sm:$0xff]
    %v3704 = vld [vmem:[#allocation21 + $0x510] sm:$0xff]
    %v3705 = vld [vmem:[#allocation21 + $0x518] sm:$0xff]
    %v3706 = vld [vmem:[#allocation21 + $0x520] sm:$0xf]
    %v3707 = vld [vmem:[#allocation21 + $0x524] sm:$0xff]
    %v3708 = vld [vmem:[#allocation21 + $0x52c] sm:$0xff]
    %v3709 = vld [vmem:[#allocation21 + $0x534] sm:$0xff]
    %v3710 = vld [vmem:[#allocation21 + $0x53c] sm:$0xf]
    %v3711 = vld [vmem:[#allocation21 + $0x540] sm:$0xff]
    %v3712 = vld [vmem:[#allocation21 + $0x548] sm:$0xff]
    %v3713 = vld [vmem:[#allocation21 + $0x550] sm:$0xff]
    %v3714 = vld [vmem:[#allocation21 + $0x558] sm:$0xf]
    %v3715 = vld [vmem:[#allocation21 + $0x55c] sm:$0xff]
    %v3716 = vld [vmem:[#allocation21 + $0x564] sm:$0xff]
    %v3717 = vld [vmem:[#allocation21 + $0x56c] sm:$0xff]
    %v3718 = vld [vmem:[#allocation21 + $0x574] sm:$0xf]
    %v3719 = vld [vmem:[#allocation21 + $0x578] sm:$0xff]
    %v3720 = vld [vmem:[#allocation21 + $0x580] sm:$0xff]
    %v3721 = vld [vmem:[#allocation21 + $0x588] sm:$0xff]
    %v3722 = vld [vmem:[#allocation21 + $0x590] sm:$0xf]
    %v3723 = vld [vmem:[#allocation21 + $0x594] sm:$0xff]
    %v3724 = vld [vmem:[#allocation21 + $0x59c] sm:$0xff]
    %v3725 = vld [vmem:[#allocation21 + $0x5a4] sm:$0xff]
    %v3726 = vld [vmem:[#allocation21 + $0x5ac] sm:$0xf]
    %v3727 = vld [vmem:[#allocation21 + $0x5b0] sm:$0xff]
    %v3728 = vld [vmem:[#allocation21 + $0x5b8] sm:$0xff]
    %v3729 = vld [vmem:[#allocation21 + $0x5c0] sm:$0xff]
    %v3730 = vld [vmem:[#allocation21 + $0x5c8] sm:$0xf]
    %v3731 = vld [vmem:[#allocation21 + $0x5cc] sm:$0xff]
    %v3732 = vld [vmem:[#allocation21 + $0x5d4] sm:$0xff]
    %v3733 = vld [vmem:[#allocation21 + $0x5dc] sm:$0xff]
    %v3734 = vld [vmem:[#allocation21 + $0x5e4] sm:$0xf]
    %v3735 = vld [vmem:[#allocation21 + $0x5e8] sm:$0xff]
    %v3736 = vld [vmem:[#allocation21 + $0x5f0] sm:$0xff]
    %v3737 = vld [vmem:[#allocation21 + $0x5f8] sm:$0xff]
    %v3738 = vld [vmem:[#allocation21 + $0x600] sm:$0xf]
    %v3739 = vld [vmem:[#allocation21 + $0x604] sm:$0xff]
    %v3740 = vld [vmem:[#allocation21 + $0x60c] sm:$0xff]
    %v3741 = vld [vmem:[#allocation21 + $0x614] sm:$0xff]
    %v3742 = vld [vmem:[#allocation21 + $0x61c] sm:$0xf]
    %v3743 = vld [vmem:[#allocation21 + $0x620] sm:$0xff]
    %v3744 = vld [vmem:[#allocation21 + $0x628] sm:$0xff]
    %v3745 = vld [vmem:[#allocation21 + $0x630] sm:$0xff]
    %v3746 = vld [vmem:[#allocation21 + $0x638] sm:$0xf]
    %v3747 = vld [vmem:[#allocation21 + $0x63c] sm:$0xff]
    %v3748 = vld [vmem:[#allocation21 + $0x644] sm:$0xff]
    %v3749 = vld [vmem:[#allocation21 + $0x64c] sm:$0xff]
    %v3750 = vld [vmem:[#allocation21 + $0x654] sm:$0xf]
    %v3751 = vld [vmem:[#allocation21 + $0x658] sm:$0xff]
    %v3752 = vld [vmem:[#allocation21 + $0x660] sm:$0xff]
    %v3753 = vld [vmem:[#allocation21 + $0x668] sm:$0xff]
    %v3754 = vld [vmem:[#allocation21 + $0x670] sm:$0xf]
    %v3755 = vld [vmem:[#allocation21 + $0x674] sm:$0xff]
    %v3756 = vld [vmem:[#allocation21 + $0x67c] sm:$0xff]
    %v3757 = vld [vmem:[#allocation21 + $0x684] sm:$0xff]
    %v3758 = vld [vmem:[#allocation21 + $0x68c] sm:$0xf]
    %v3759 = vld [vmem:[#allocation21 + $0x690] sm:$0xff]
    %v3760 = vld [vmem:[#allocation21 + $0x698] sm:$0xff]
    %v3761 = vld [vmem:[#allocation21 + $0x6a0] sm:$0xff]
    %v3762 = vld [vmem:[#allocation21 + $0x6a8] sm:$0xf]
    %v3763 = vld [vmem:[#allocation21 + $0x6ac] sm:$0xff]
    %v3764 = vld [vmem:[#allocation21 + $0x6b4] sm:$0xff]
    %v3765 = vld [vmem:[#allocation21 + $0x6bc] sm:$0xff]
    %v3766 = vld [vmem:[#allocation21 + $0x6c4] sm:$0xf]
    %v3767 = vld [vmem:[#allocation21 + $0x6c8] sm:$0xff]
    %v3768 = vld [vmem:[#allocation21 + $0x6d0] sm:$0xff]
    %v3769 = vld [vmem:[#allocation21 + $0x6d8] sm:$0xff]
    %v3770 = vld [vmem:[#allocation21 + $0x6e0] sm:$0xf]
    %v3771 = vld [vmem:[#allocation21 + $0x6e4] sm:$0xff]
    %v3772 = vld [vmem:[#allocation21 + $0x6ec] sm:$0xff]
    %v3773 = vld [vmem:[#allocation21 + $0x6f4] sm:$0xff]
    %v3774 = vld [vmem:[#allocation21 + $0x6fc] sm:$0xf]
    %v3775 = vld [vmem:[#allocation21 + $0x700] sm:$0xff]
    %v3776 = vld [vmem:[#allocation21 + $0x708] sm:$0xff]
    %v3777 = vld [vmem:[#allocation21 + $0x710] sm:$0xff]
    %v3778 = vld [vmem:[#allocation21 + $0x718] sm:$0xf]
    %v3779 = vld [vmem:[#allocation21 + $0x71c] sm:$0xff]
    %v3780 = vld [vmem:[#allocation21 + $0x724] sm:$0xff]
    %v3781 = vld [vmem:[#allocation21 + $0x72c] sm:$0xff]
    %v3782 = vld [vmem:[#allocation21 + $0x734] sm:$0xf]
    %v3783 = vld [vmem:[#allocation21 + $0x738] sm:$0xff]
    %v3784 = vld [vmem:[#allocation21 + $0x740] sm:$0xff]
    %v3785 = vld [vmem:[#allocation21 + $0x748] sm:$0xff]
    %v3786 = vld [vmem:[#allocation21 + $0x750] sm:$0xf]
    %v3787 = vld [vmem:[#allocation21 + $0x754] sm:$0xff]
    %v3788 = vld [vmem:[#allocation21 + $0x75c] sm:$0xff]
    %v3789 = vld [vmem:[#allocation21 + $0x764] sm:$0xff]
    %v3790 = vld [vmem:[#allocation21 + $0x76c] sm:$0xf]
    %v3791 = vld [vmem:[#allocation21 + $0x770] sm:$0xff]
    %v3792 = vld [vmem:[#allocation21 + $0x778] sm:$0xff]
    %v3793 = vld [vmem:[#allocation21 + $0x780] sm:$0xff]
    %v3794 = vld [vmem:[#allocation21 + $0x788] sm:$0xf]
    %v3795 = vld [vmem:[#allocation21 + $0x78c] sm:$0xff]
    %v3796 = vld [vmem:[#allocation21 + $0x794] sm:$0xff]
    %v3797 = vld [vmem:[#allocation21 + $0x79c] sm:$0xff]
    %v3798 = vld [vmem:[#allocation21 + $0x7a4] sm:$0xf]
    %v3799 = vld [vmem:[#allocation21 + $0x7a8] sm:$0xff]
    %v3800 = vld [vmem:[#allocation21 + $0x7b0] sm:$0xff]
    %v3801 = vld [vmem:[#allocation21 + $0x7b8] sm:$0xff]
    %v3802 = vld [vmem:[#allocation21 + $0x7c0] sm:$0xf]
    %v3803 = vld [vmem:[#allocation21 + $0x7c4] sm:$0xff]
    %v3804 = vld [vmem:[#allocation21 + $0x7cc] sm:$0xff]
    %v3805 = vld [vmem:[#allocation21 + $0x7d4] sm:$0xff]
    %v3806 = vld [vmem:[#allocation21 + $0x7dc] sm:$0xf]
    %v3807 = vld [vmem:[#allocation21 + $0x7e0] sm:$0xff]
    %v3808 = vld [vmem:[#allocation21 + $0x7e8] sm:$0xff]
    %v3809 = vld [vmem:[#allocation21 + $0x7f0] sm:$0xff]
    %v3810 = vld [vmem:[#allocation21 + $0x7f8] sm:$0xf]
    %v3811 = vld [vmem:[#allocation21 + $0x7fc] sm:$0xff]
    %v3812 = vld [vmem:[#allocation21 + $0x804] sm:$0xff]
    %v3813 = vld [vmem:[#allocation21 + $0x80c] sm:$0xff]
    %v3814 = vld [vmem:[#allocation21 + $0x814] sm:$0xf]
    %v3815 = vld [vmem:[#allocation21 + $0x818] sm:$0xff]
    %v3816 = vld [vmem:[#allocation21 + $0x820] sm:$0xff]
    %v3817 = vld [vmem:[#allocation21 + $0x828] sm:$0xff]
    %v3818 = vld [vmem:[#allocation21 + $0x830] sm:$0xf]
    %v3819 = vld [vmem:[#allocation21 + $0x834] sm:$0xff]
    %v3820 = vld [vmem:[#allocation21 + $0x83c] sm:$0xff]
    %v3821 = vld [vmem:[#allocation21 + $0x844] sm:$0xff]
    %v3822 = vld [vmem:[#allocation21 + $0x84c] sm:$0xf]
    %v3823 = vld [vmem:[#allocation21 + $0x850] sm:$0xff]
    %v3824 = vld [vmem:[#allocation21 + $0x858] sm:$0xff]
    %v3825 = vld [vmem:[#allocation21 + $0x860] sm:$0xff]
    %v3826 = vld [vmem:[#allocation21 + $0x868] sm:$0xf]
    %v3827 = vld [vmem:[#allocation21 + $0x86c] sm:$0xff]
    %v3828 = vld [vmem:[#allocation21 + $0x874] sm:$0xff]
    %v3829 = vld [vmem:[#allocation21 + $0x87c] sm:$0xff]
    %v3830 = vld [vmem:[#allocation21 + $0x884] sm:$0xf]
    %v3831 = vld [vmem:[#allocation21 + $0x888] sm:$0xff]
    %v3832 = vld [vmem:[#allocation21 + $0x890] sm:$0xff]
    %v3833 = vld [vmem:[#allocation21 + $0x898] sm:$0xff]
    %v3834 = vld [vmem:[#allocation21 + $0x8a0] sm:$0xf]
    %v3835 = vld [vmem:[#allocation21 + $0x8a4] sm:$0xff]
    %v3836 = vld [vmem:[#allocation21 + $0x8ac] sm:$0xff]
    %v3837 = vld [vmem:[#allocation21 + $0x8b4] sm:$0xff]
    %v3838 = vld [vmem:[#allocation21 + $0x8bc] sm:$0xf]
    %v3839 = vld [vmem:[#allocation21 + $0x8c0] sm:$0xff]
    %v3840 = vld [vmem:[#allocation21 + $0x8c8] sm:$0xff]
    %v3841 = vld [vmem:[#allocation21 + $0x8d0] sm:$0xff]
    %v3842 = vld [vmem:[#allocation21 + $0x8d8] sm:$0xf]
    %v3843 = vld [vmem:[#allocation21 + $0x8dc] sm:$0xff]
    %v3844 = vld [vmem:[#allocation21 + $0x8e4] sm:$0xff]
    %v3845 = vld [vmem:[#allocation21 + $0x8ec] sm:$0xff]
    %v3846 = vld [vmem:[#allocation21 + $0x8f4] sm:$0xf]
    %v3847 = vld [vmem:[#allocation21 + $0x8f8] sm:$0xff]
    %v3848 = vld [vmem:[#allocation21 + $0x900] sm:$0xff]
    %v3849 = vld [vmem:[#allocation21 + $0x908] sm:$0xff]
    %v3850 = vld [vmem:[#allocation21 + $0x910] sm:$0xf]
    %v3851 = vld [vmem:[#allocation21 + $0x914] sm:$0xff]
    %v3852 = vld [vmem:[#allocation21 + $0x91c] sm:$0xff]
    %v3853 = vld [vmem:[#allocation21 + $0x924] sm:$0xff]
    %v3854 = vld [vmem:[#allocation21 + $0x92c] sm:$0xf]
    %v3855 = vld [vmem:[#allocation21 + $0x930] sm:$0xff]
    %v3856 = vld [vmem:[#allocation21 + $0x938] sm:$0xff]
    %v3857 = vld [vmem:[#allocation21 + $0x940] sm:$0xff]
    %v3858 = vld [vmem:[#allocation21 + $0x948] sm:$0xf]
    %v3859 = vld [vmem:[#allocation21 + $0x94c] sm:$0xff]
    %v3860 = vld [vmem:[#allocation21 + $0x954] sm:$0xff]
    %v3861 = vld [vmem:[#allocation21 + $0x95c] sm:$0xff]
    %v3862 = vld [vmem:[#allocation21 + $0x964] sm:$0xf]
    %v3863 = vld [vmem:[#allocation21 + $0x968] sm:$0xff]
    %v3864 = vld [vmem:[#allocation21 + $0x970] sm:$0xff]
    %v3865 = vld [vmem:[#allocation21 + $0x978] sm:$0xff]
    %v3866 = vld [vmem:[#allocation21 + $0x980] sm:$0xf]
    %v3867 = vld [vmem:[#allocation21 + $0x984] sm:$0xff]
    %v3868 = vld [vmem:[#allocation21 + $0x98c] sm:$0xff]
    %v3869 = vld [vmem:[#allocation21 + $0x994] sm:$0xff]
    %v3870 = vld [vmem:[#allocation21 + $0x99c] sm:$0xf]
    %v3871 = vld [vmem:[#allocation21 + $0x9a0] sm:$0xff]
    %v3872 = vld [vmem:[#allocation21 + $0x9a8] sm:$0xff]
    %v3873 = vld [vmem:[#allocation21 + $0x9b0] sm:$0xff]
    %v3874 = vld [vmem:[#allocation21 + $0x9b8] sm:$0xf]
    %v3875 = vld [vmem:[#allocation21 + $0x9bc] sm:$0xff]
    %v3876 = vld [vmem:[#allocation21 + $0x9c4] sm:$0xff]
    %v3877 = vld [vmem:[#allocation21 + $0x9cc] sm:$0xff]
    %v3878 = vld [vmem:[#allocation21 + $0x9d4] sm:$0xf]
    %v3879 = vld [vmem:[#allocation21 + $0x9d8] sm:$0xff]
    %v3880 = vld [vmem:[#allocation21 + $0x9e0] sm:$0xff]
    %v3881 = vld [vmem:[#allocation21 + $0x9e8] sm:$0xff]
    %v3882 = vld [vmem:[#allocation21 + $0x9f0] sm:$0xf]
    %v3883 = vld [vmem:[#allocation21 + $0x9f4] sm:$0xff]
    %v3884 = vld [vmem:[#allocation21 + $0x9fc] sm:$0xff]
    %v3885 = vld [vmem:[#allocation21 + $0xa04] sm:$0xff]
    %v3886 = vld [vmem:[#allocation21 + $0xa0c] sm:$0xf]
    %v3887 = vld [vmem:[#allocation21 + $0xa10] sm:$0xff]
    %v3888 = vld [vmem:[#allocation21 + $0xa18] sm:$0xff]
    %v3889 = vld [vmem:[#allocation21 + $0xa20] sm:$0xff]
    %v3890 = vld [vmem:[#allocation21 + $0xa28] sm:$0xf]
    %v3891 = vld [vmem:[#allocation21 + $0xa2c] sm:$0xff]
    %v3892 = vld [vmem:[#allocation21 + $0xa34] sm:$0xff]
    %v3893 = vld [vmem:[#allocation21 + $0xa3c] sm:$0xff]
    %v3894 = vld [vmem:[#allocation21 + $0xa44] sm:$0xf]
    %v3895 = vld [vmem:[#allocation21 + $0xa48] sm:$0xff]
    %v3896 = vld [vmem:[#allocation21 + $0xa50] sm:$0xff]
    %v3897 = vld [vmem:[#allocation21 + $0xa58] sm:$0xff]
    %v3898 = vld [vmem:[#allocation21 + $0xa60] sm:$0xf]
    %v3899 = vld [vmem:[#allocation21 + $0xa64] sm:$0xff]
    %v3900 = vld [vmem:[#allocation21 + $0xa6c] sm:$0xff]
    %v3901 = vld [vmem:[#allocation21 + $0xa74] sm:$0xff]
    %v3902 = vld [vmem:[#allocation21 + $0xa7c] sm:$0xf]
    %v3903 = vld [vmem:[#allocation21 + $0xa80] sm:$0xff]
    %v3904 = vld [vmem:[#allocation21 + $0xa88] sm:$0xff]
    %v3905 = vld [vmem:[#allocation21 + $0xa90] sm:$0xff]
    %v3906 = vld [vmem:[#allocation21 + $0xa98] sm:$0xf]
    %v3907 = vld [vmem:[#allocation21 + $0xa9c] sm:$0xff]
    %v3908 = vld [vmem:[#allocation21 + $0xaa4] sm:$0xff]
    %v3909 = vld [vmem:[#allocation21 + $0xaac] sm:$0xff]
    %v3910 = vld [vmem:[#allocation21 + $0xab4] sm:$0xf]
    %v3911 = vld [vmem:[#allocation21 + $0xab8] sm:$0xff]
    %v3912 = vld [vmem:[#allocation21 + $0xac0] sm:$0xff]
    %v3913 = vld [vmem:[#allocation21 + $0xac8] sm:$0xff]
    %v3914 = vld [vmem:[#allocation21 + $0xad0] sm:$0xf]
    %v3915 = vld [vmem:[#allocation21 + $0xad4] sm:$0xff]
    %v3916 = vld [vmem:[#allocation21 + $0xadc] sm:$0xff]
    %v3917 = vld [vmem:[#allocation21 + $0xae4] sm:$0xff]
    %v3918 = vld [vmem:[#allocation21 + $0xaec] sm:$0xf]
    %v3919 = vld [vmem:[#allocation21 + $0xaf0] sm:$0xff]
    %v3920 = vld [vmem:[#allocation21 + $0xaf8] sm:$0xff]
    %v3921 = vld [vmem:[#allocation21 + $0xb00] sm:$0xff]
    %v3922 = vld [vmem:[#allocation21 + $0xb08] sm:$0xf]
    %v3923 = vld [vmem:[#allocation21 + $0xb0c] sm:$0xff]
    %v3924 = vld [vmem:[#allocation21 + $0xb14] sm:$0xff]
    %v3925 = vld [vmem:[#allocation21 + $0xb1c] sm:$0xff]
    %v3926 = vld [vmem:[#allocation21 + $0xb24] sm:$0xf]
    %v3927 = vld [vmem:[#allocation21 + $0xb28] sm:$0xff]
    %v3928 = vld [vmem:[#allocation21 + $0xb30] sm:$0xff]
    %v3929 = vld [vmem:[#allocation21 + $0xb38] sm:$0xff]
    %v3930 = vld [vmem:[#allocation21 + $0xb40] sm:$0xf]
    %v3931 = vld [vmem:[#allocation21 + $0xb44] sm:$0xff]
    %v3932 = vld [vmem:[#allocation21 + $0xb4c] sm:$0xff]
    %v3933 = vld [vmem:[#allocation21 + $0xb54] sm:$0xff]
    %v3934 = vld [vmem:[#allocation21 + $0xb5c] sm:$0xf]
    %v3935 = vld [vmem:[#allocation21 + $0xb60] sm:$0xff]
    %v3936 = vld [vmem:[#allocation21 + $0xb68] sm:$0xff]
    %v3937 = vld [vmem:[#allocation21 + $0xb70] sm:$0xff]
    %v3938 = vld [vmem:[#allocation21 + $0xb78] sm:$0xf]
    %v3939 = vld [vmem:[#allocation21 + $0xb7c] sm:$0xff]
    %v3940 = vld [vmem:[#allocation21 + $0xb84] sm:$0xff]
    %v3941 = vld [vmem:[#allocation21 + $0xb8c] sm:$0xff]
    %v3942 = vld [vmem:[#allocation21 + $0xb94] sm:$0xf]
    %v3943 = vld [vmem:[#allocation21 + $0xb98] sm:$0xff]
    %v3944 = vld [vmem:[#allocation21 + $0xba0] sm:$0xff]
    %v3945 = vld [vmem:[#allocation21 + $0xba8] sm:$0xff]
    %v3946 = vld [vmem:[#allocation21 + $0xbb0] sm:$0xf]
    %v3947 = vld [vmem:[#allocation21 + $0xbb4] sm:$0xff]
    %v3948 = vld [vmem:[#allocation21 + $0xbbc] sm:$0xff]
    %v3949 = vld [vmem:[#allocation21 + $0xbc4] sm:$0xff]
    %v3950 = vld [vmem:[#allocation21 + $0xbcc] sm:$0xf]
    %v3951 = vld [vmem:[#allocation21 + $0xbd0] sm:$0xff]
    %v3952 = vld [vmem:[#allocation21 + $0xbd8] sm:$0xff]
    %v3953 = vld [vmem:[#allocation21 + $0xbe0] sm:$0xff]
    %v3954 = vld [vmem:[#allocation21 + $0xbe8] sm:$0xf]
    %v3955 = vld [vmem:[#allocation21 + $0xbec] sm:$0xff]
    %v3956 = vld [vmem:[#allocation21 + $0xbf4] sm:$0xff]
    %v3957 = vld [vmem:[#allocation21 + $0xbfc] sm:$0xff]
    %v3958 = vld [vmem:[#allocation21 + $0xc04] sm:$0xf]
    %v3959 = vld [vmem:[#allocation21 + $0xc08] sm:$0xff]
    %v3960 = vld [vmem:[#allocation21 + $0xc10] sm:$0xff]
    %v3961 = vld [vmem:[#allocation21 + $0xc18] sm:$0xff]
    %v3962 = vld [vmem:[#allocation21 + $0xc20] sm:$0xf]
    %v3963 = vld [vmem:[#allocation21 + $0xc24] sm:$0xff]
    %v3964 = vld [vmem:[#allocation21 + $0xc2c] sm:$0xff]
    %v3965 = vld [vmem:[#allocation21 + $0xc34] sm:$0xff]
    %v3966 = vld [vmem:[#allocation21 + $0xc3c] sm:$0xf]
    %v3967 = vld [vmem:[#allocation21 + $0xc40] sm:$0xff]
    %v3968 = vld [vmem:[#allocation21 + $0xc48] sm:$0xff]
    %v3969 = vld [vmem:[#allocation21 + $0xc50] sm:$0xff]
    %v3970 = vld [vmem:[#allocation21 + $0xc58] sm:$0xf]
    %v3971 = vld [vmem:[#allocation21 + $0xc5c] sm:$0xff]
    %v3972 = vld [vmem:[#allocation21 + $0xc64] sm:$0xff]
    %v3973 = vld [vmem:[#allocation21 + $0xc6c] sm:$0xff]
    %v3974 = vld [vmem:[#allocation21 + $0xc74] sm:$0xf]
    %v3975 = vld [vmem:[#allocation21 + $0xc78] sm:$0xff]
    %v3976 = vld [vmem:[#allocation21 + $0xc80] sm:$0xff]
    %v3977 = vld [vmem:[#allocation21 + $0xc88] sm:$0xff]
    %v3978 = vld [vmem:[#allocation21 + $0xc90] sm:$0xf]
    %v3979 = vld [vmem:[#allocation21 + $0xc94] sm:$0xff]
    %v3980 = vld [vmem:[#allocation21 + $0xc9c] sm:$0xff]
    %v3981 = vld [vmem:[#allocation21 + $0xca4] sm:$0xff]
    %v3982 = vld [vmem:[#allocation21 + $0xcac] sm:$0xf]
    %v3983 = vld [vmem:[#allocation21 + $0xcb0] sm:$0xff]
    %v3984 = vld [vmem:[#allocation21 + $0xcb8] sm:$0xff]
    %v3985 = vld [vmem:[#allocation21 + $0xcc0] sm:$0xff]
    %v3986 = vld [vmem:[#allocation21 + $0xcc8] sm:$0xf]
    %v3987 = vld [vmem:[#allocation21 + $0xccc] sm:$0xff]
    %v3988 = vld [vmem:[#allocation21 + $0xcd4] sm:$0xff]
    %v3989 = vld [vmem:[#allocation21 + $0xcdc] sm:$0xff]
    %v3990 = vld [vmem:[#allocation21 + $0xce4] sm:$0xf]
    %v3991 = vld [vmem:[#allocation21 + $0xce8] sm:$0xff]
    %v3992 = vld [vmem:[#allocation21 + $0xcf0] sm:$0xff]
    %v3993 = vld [vmem:[#allocation21 + $0xcf8] sm:$0xff]
    %v3994 = vld [vmem:[#allocation21 + $0xd00] sm:$0xf]
    %v3995 = vld [vmem:[#allocation21 + $0xd04] sm:$0xff]
    %v3996 = vld [vmem:[#allocation21 + $0xd0c] sm:$0xff]
    %v3997 = vld [vmem:[#allocation21 + $0xd14] sm:$0xff]
    %v3998 = vld [vmem:[#allocation21 + $0xd1c] sm:$0xf]
    %v3999 = vld [vmem:[#allocation21 + $0xd20] sm:$0xff]
    %v4000 = vld [vmem:[#allocation21 + $0xd28] sm:$0xff]
    %v4001 = vld [vmem:[#allocation21 + $0xd30] sm:$0xff]
    %v4002 = vld [vmem:[#allocation21 + $0xd38] sm:$0xf]
    %v4003 = vld [vmem:[#allocation21 + $0xd3c] sm:$0xff]
    %v4004 = vld [vmem:[#allocation21 + $0xd44] sm:$0xff]
    %v4005 = vld [vmem:[#allocation21 + $0xd4c] sm:$0xff]
    %v4006 = vld [vmem:[#allocation21 + $0xd54] sm:$0xf]
    %v4007 = vld [vmem:[#allocation21 + $0xd58] sm:$0xff]
    %v4008 = vld [vmem:[#allocation21 + $0xd60] sm:$0xff]
    %v4009 = vld [vmem:[#allocation21 + $0xd68] sm:$0xff]
    %v4010 = vld [vmem:[#allocation21 + $0xd70] sm:$0xf]
    %v4011 = vld [vmem:[#allocation21 + $0xd74] sm:$0xff]
    %v4012 = vld [vmem:[#allocation21 + $0xd7c] sm:$0xff]
    %v4013 = vld [vmem:[#allocation21 + $0xd84] sm:$0xff]
    %v4014 = vld [vmem:[#allocation21 + $0xd8c] sm:$0xf]
    %v4015 = vld [vmem:[#allocation21 + $0xd90] sm:$0xff]
    %v4016 = vld [vmem:[#allocation21 + $0xd98] sm:$0xff]
    %v4017 = vld [vmem:[#allocation21 + $0xda0] sm:$0xff]
    %v4018 = vld [vmem:[#allocation21 + $0xda8] sm:$0xf]
    %v4019 = vld [vmem:[#allocation21 + $0xdac] sm:$0xff]
    %v4020 = vld [vmem:[#allocation21 + $0xdb4] sm:$0xff]
    %v4021 = vld [vmem:[#allocation21 + $0xdbc] sm:$0xff]
    %v4022 = vld [vmem:[#allocation21 + $0xdc4] sm:$0xf]
    %v4023 = vld [vmem:[#allocation21 + $0xdc8] sm:$0xff]
    %v4024 = vld [vmem:[#allocation21 + $0xdd0] sm:$0xff]
    %v4025 = vld [vmem:[#allocation21 + $0xdd8] sm:$0xff]
    %v4026 = vld [vmem:[#allocation21 + $0xde0] sm:$0xf]
    %v4027 = vld [vmem:[#allocation21 + $0xde4] sm:$0xff]
    %v4028 = vld [vmem:[#allocation21 + $0xdec] sm:$0xff]
    %v4029 = vld [vmem:[#allocation21 + $0xdf4] sm:$0xff]
    %v4030 = vld [vmem:[#allocation21 + $0xdfc] sm:$0xf]
    %v4031 = vld [vmem:[#allocation22] sm:$0xff]
    %v4033 = vlaneseq
    %v4034 = vshrl.u32 %v4033, 7
    %v4035 = vsub.s32 0, %v4034
    %v4036 = vrot.slane %v4031, %v4035
    %v4037 = vlaneseq
    %v4038 = vshrl.u32 %v4037, 7
    %v4039 = vsub.s32 1, %v4038
    %v4040 = vrot.slane %v4031, %v4039
    %v4041 = vlaneseq
    %v4042 = vshrl.u32 %v4041, 7
    %v4043 = vsub.s32 2, %v4042
    %v4044 = vrot.slane %v4031, %v4043
    %v4045 = vlaneseq
    %v4046 = vshrl.u32 %v4045, 7
    %v4047 = vsub.s32 3, %v4046
    %v4048 = vrot.slane %v4031, %v4047
    %v4049 = vlaneseq
    %v4050 = vshrl.u32 %v4049, 7
    %v4051 = vsub.s32 4, %v4050
    %v4052 = vrot.slane %v4031, %v4051
    %v4053 = vlaneseq
    %v4054 = vshrl.u32 %v4053, 7
    %v4055 = vsub.s32 5, %v4054
    %v4056 = vrot.slane %v4031, %v4055
    %v4057 = vlaneseq
    %v4058 = vshrl.u32 %v4057, 7
    %v4059 = vsub.s32 6, %v4058
    %v4060 = vrot.slane %v4031, %v4059
    %v4580 = vunpack.c.l.b16 %v3519
    %v4581 = vunpack.c.h.b16 %v3519
    %v4582 = vunpack.c.l.b16 %v3520
    %v4583 = vunpack.c.h.b16 %v3520
    %v4584 = vunpack.c.l.b16 %v3521
    %v4585 = vunpack.c.h.b16 %v3521
    %v4586 = vunpack.c.l.b16 %v3522
    %v4587 = vunpack.c.l.b16 %v3523
    %v4588 = vunpack.c.h.b16 %v3523
    %v4589 = vunpack.c.l.b16 %v3524
    %v4590 = vunpack.c.h.b16 %v3524
    %v4591 = vunpack.c.l.b16 %v3525
    %v4592 = vunpack.c.h.b16 %v3525
    %v4593 = vunpack.c.l.b16 %v3526
    %v4594 = vunpack.c.l.b16 %v3527
    %v4595 = vunpack.c.h.b16 %v3527
    %v4596 = vunpack.c.l.b16 %v3528
    %v4597 = vunpack.c.h.b16 %v3528
    %v4598 = vunpack.c.l.b16 %v3529
    %v4599 = vunpack.c.h.b16 %v3529
    %v4600 = vunpack.c.l.b16 %v3530
    %v4601 = vunpack.c.l.b16 %v3531
    %v4602 = vunpack.c.h.b16 %v3531
    %v4603 = vunpack.c.l.b16 %v3532
    %v4604 = vunpack.c.h.b16 %v3532
    %v4605 = vunpack.c.l.b16 %v3533
    %v4606 = vunpack.c.h.b16 %v3533
    %v4607 = vunpack.c.l.b16 %v3534
    %v4608 = vunpack.c.l.b16 %v3535
    %v4609 = vunpack.c.h.b16 %v3535
    %v4610 = vunpack.c.l.b16 %v3536
    %v4611 = vunpack.c.h.b16 %v3536
    %v4612 = vunpack.c.l.b16 %v3537
    %v4613 = vunpack.c.h.b16 %v3537
    %v4614 = vunpack.c.l.b16 %v3538
    %v4615 = vunpack.c.l.b16 %v3539
    %v4616 = vunpack.c.h.b16 %v3539
    %v4617 = vunpack.c.l.b16 %v3540
    %v4618 = vunpack.c.h.b16 %v3540
    %v4619 = vunpack.c.l.b16 %v3541
    %v4620 = vunpack.c.h.b16 %v3541
    %v4621 = vunpack.c.l.b16 %v3542
    %v4622 = vunpack.c.l.b16 %v3543
    %v4623 = vunpack.c.h.b16 %v3543
    %v4624 = vunpack.c.l.b16 %v3544
    %v4625 = vunpack.c.h.b16 %v3544
    %v4626 = vunpack.c.l.b16 %v3545
    %v4627 = vunpack.c.h.b16 %v3545
    %v4628 = vunpack.c.l.b16 %v3546
    %v4629 = vunpack.c.l.b16 %v3547
    %v4630 = vunpack.c.h.b16 %v3547
    %v4631 = vunpack.c.l.b16 %v3548
    %v4632 = vunpack.c.h.b16 %v3548
    %v4633 = vunpack.c.l.b16 %v3549
    %v4634 = vunpack.c.h.b16 %v3549
    %v4635 = vunpack.c.l.b16 %v3550
    %v4636 = vunpack.c.l.b16 %v3551
    %v4637 = vunpack.c.h.b16 %v3551
    %v4638 = vunpack.c.l.b16 %v3552
    %v4639 = vunpack.c.h.b16 %v3552
    %v4640 = vunpack.c.l.b16 %v3553
    %v4641 = vunpack.c.h.b16 %v3553
    %v4642 = vunpack.c.l.b16 %v3554
    %v4643 = vunpack.c.l.b16 %v3555
    %v4644 = vunpack.c.h.b16 %v3555
    %v4645 = vunpack.c.l.b16 %v3556
    %v4646 = vunpack.c.h.b16 %v3556
    %v4647 = vunpack.c.l.b16 %v3557
    %v4648 = vunpack.c.h.b16 %v3557
    %v4649 = vunpack.c.l.b16 %v3558
    %v4650 = vunpack.c.l.b16 %v3559
    %v4651 = vunpack.c.h.b16 %v3559
    %v4652 = vunpack.c.l.b16 %v3560
    %v4653 = vunpack.c.h.b16 %v3560
    %v4654 = vunpack.c.l.b16 %v3561
    %v4655 = vunpack.c.h.b16 %v3561
    %v4656 = vunpack.c.l.b16 %v3562
    %v4657 = vunpack.c.l.b16 %v3563
    %v4658 = vunpack.c.h.b16 %v3563
    %v4659 = vunpack.c.l.b16 %v3564
    %v4660 = vunpack.c.h.b16 %v3564
    %v4661 = vunpack.c.l.b16 %v3565
    %v4662 = vunpack.c.h.b16 %v3565
    %v4663 = vunpack.c.l.b16 %v3566
    %v4664 = vunpack.c.l.b16 %v3567
    %v4665 = vunpack.c.h.b16 %v3567
    %v4666 = vunpack.c.l.b16 %v3568
    %v4667 = vunpack.c.h.b16 %v3568
    %v4668 = vunpack.c.l.b16 %v3569
    %v4669 = vunpack.c.h.b16 %v3569
    %v4670 = vunpack.c.l.b16 %v3570
    %v4671 = vunpack.c.l.b16 %v3571
    %v4672 = vunpack.c.h.b16 %v3571
    %v4673 = vunpack.c.l.b16 %v3572
    %v4674 = vunpack.c.h.b16 %v3572
    %v4675 = vunpack.c.l.b16 %v3573
    %v4676 = vunpack.c.h.b16 %v3573
    %v4677 = vunpack.c.l.b16 %v3574
    %v4678 = vunpack.c.l.b16 %v3575
    %v4679 = vunpack.c.h.b16 %v3575
    %v4680 = vunpack.c.l.b16 %v3576
    %v4681 = vunpack.c.h.b16 %v3576
    %v4682 = vunpack.c.l.b16 %v3577
    %v4683 = vunpack.c.h.b16 %v3577
    %v4684 = vunpack.c.l.b16 %v3578
    %v4685 = vunpack.c.l.b16 %v3579
    %v4686 = vunpack.c.h.b16 %v3579
    %v4687 = vunpack.c.l.b16 %v3580
    %v4688 = vunpack.c.h.b16 %v3580
    %v4689 = vunpack.c.l.b16 %v3581
    %v4690 = vunpack.c.h.b16 %v3581
    %v4691 = vunpack.c.l.b16 %v3582
    %v4692 = vunpack.c.l.b16 %v3583
    %v4693 = vunpack.c.h.b16 %v3583
    %v4694 = vunpack.c.l.b16 %v3584
    %v4695 = vunpack.c.h.b16 %v3584
    %v4696 = vunpack.c.l.b16 %v3585
    %v4697 = vunpack.c.h.b16 %v3585
    %v4698 = vunpack.c.l.b16 %v3586
    %v4699 = vunpack.c.l.b16 %v3587
    %v4700 = vunpack.c.h.b16 %v3587
    %v4701 = vunpack.c.l.b16 %v3588
    %v4702 = vunpack.c.h.b16 %v3588
    %v4703 = vunpack.c.l.b16 %v3589
    %v4704 = vunpack.c.h.b16 %v3589
    %v4705 = vunpack.c.l.b16 %v3590
    %v4706 = vunpack.c.l.b16 %v3591
    %v4707 = vunpack.c.h.b16 %v3591
    %v4708 = vunpack.c.l.b16 %v3592
    %v4709 = vunpack.c.h.b16 %v3592
    %v4710 = vunpack.c.l.b16 %v3593
    %v4711 = vunpack.c.h.b16 %v3593
    %v4712 = vunpack.c.l.b16 %v3594
    %v4713 = vunpack.c.l.b16 %v3595
    %v4714 = vunpack.c.h.b16 %v3595
    %v4715 = vunpack.c.l.b16 %v3596
    %v4716 = vunpack.c.h.b16 %v3596
    %v4717 = vunpack.c.l.b16 %v3597
    %v4718 = vunpack.c.h.b16 %v3597
    %v4719 = vunpack.c.l.b16 %v3598
    %v4720 = vunpack.c.l.b16 %v3599
    %v4721 = vunpack.c.h.b16 %v3599
    %v4722 = vunpack.c.l.b16 %v3600
    %v4723 = vunpack.c.h.b16 %v3600
    %v4724 = vunpack.c.l.b16 %v3601
    %v4725 = vunpack.c.h.b16 %v3601
    %v4726 = vunpack.c.l.b16 %v3602
    %v4727 = vunpack.c.l.b16 %v3603
    %v4728 = vunpack.c.h.b16 %v3603
    %v4729 = vunpack.c.l.b16 %v3604
    %v4730 = vunpack.c.h.b16 %v3604
    %v4731 = vunpack.c.l.b16 %v3605
    %v4732 = vunpack.c.h.b16 %v3605
    %v4733 = vunpack.c.l.b16 %v3606
    %v4734 = vunpack.c.l.b16 %v3607
    %v4735 = vunpack.c.h.b16 %v3607
    %v4736 = vunpack.c.l.b16 %v3608
    %v4737 = vunpack.c.h.b16 %v3608
    %v4738 = vunpack.c.l.b16 %v3609
    %v4739 = vunpack.c.h.b16 %v3609
    %v4740 = vunpack.c.l.b16 %v3610
    %v4741 = vunpack.c.l.b16 %v3611
    %v4742 = vunpack.c.h.b16 %v3611
    %v4743 = vunpack.c.l.b16 %v3612
    %v4744 = vunpack.c.h.b16 %v3612
    %v4745 = vunpack.c.l.b16 %v3613
    %v4746 = vunpack.c.h.b16 %v3613
    %v4747 = vunpack.c.l.b16 %v3614
    %v4748 = vunpack.c.l.b16 %v3615
    %v4749 = vunpack.c.h.b16 %v3615
    %v4750 = vunpack.c.l.b16 %v3616
    %v4751 = vunpack.c.h.b16 %v3616
    %v4752 = vunpack.c.l.b16 %v3617
    %v4753 = vunpack.c.h.b16 %v3617
    %v4754 = vunpack.c.l.b16 %v3618
    %v4755 = vunpack.c.l.b16 %v3619
    %v4756 = vunpack.c.h.b16 %v3619
    %v4757 = vunpack.c.l.b16 %v3620
    %v4758 = vunpack.c.h.b16 %v3620
    %v4759 = vunpack.c.l.b16 %v3621
    %v4760 = vunpack.c.h.b16 %v3621
    %v4761 = vunpack.c.l.b16 %v3622
    %v4762 = vunpack.c.l.b16 %v3623
    %v4763 = vunpack.c.h.b16 %v3623
    %v4764 = vunpack.c.l.b16 %v3624
    %v4765 = vunpack.c.h.b16 %v3624
    %v4766 = vunpack.c.l.b16 %v3625
    %v4767 = vunpack.c.h.b16 %v3625
    %v4768 = vunpack.c.l.b16 %v3626
    %v4769 = vunpack.c.l.b16 %v3627
    %v4770 = vunpack.c.h.b16 %v3627
    %v4771 = vunpack.c.l.b16 %v3628
    %v4772 = vunpack.c.h.b16 %v3628
    %v4773 = vunpack.c.l.b16 %v3629
    %v4774 = vunpack.c.h.b16 %v3629
    %v4775 = vunpack.c.l.b16 %v3630
    %v4776 = vunpack.c.l.b16 %v3631
    %v4777 = vunpack.c.h.b16 %v3631
    %v4778 = vunpack.c.l.b16 %v3632
    %v4779 = vunpack.c.h.b16 %v3632
    %v4780 = vunpack.c.l.b16 %v3633
    %v4781 = vunpack.c.h.b16 %v3633
    %v4782 = vunpack.c.l.b16 %v3634
    %v4783 = vunpack.c.l.b16 %v3635
    %v4784 = vunpack.c.h.b16 %v3635
    %v4785 = vunpack.c.l.b16 %v3636
    %v4786 = vunpack.c.h.b16 %v3636
    %v4787 = vunpack.c.l.b16 %v3637
    %v4788 = vunpack.c.h.b16 %v3637
    %v4789 = vunpack.c.l.b16 %v3638
    %v4790 = vunpack.c.l.b16 %v3639
    %v4791 = vunpack.c.h.b16 %v3639
    %v4792 = vunpack.c.l.b16 %v3640
    %v4793 = vunpack.c.h.b16 %v3640
    %v4794 = vunpack.c.l.b16 %v3641
    %v4795 = vunpack.c.h.b16 %v3641
    %v4796 = vunpack.c.l.b16 %v3642
    %v4797 = vunpack.c.l.b16 %v3643
    %v4798 = vunpack.c.h.b16 %v3643
    %v4799 = vunpack.c.l.b16 %v3644
    %v4800 = vunpack.c.h.b16 %v3644
    %v4801 = vunpack.c.l.b16 %v3645
    %v4802 = vunpack.c.h.b16 %v3645
    %v4803 = vunpack.c.l.b16 %v3646
    %v4804 = vunpack.c.l.b16 %v3647
    %v4805 = vunpack.c.h.b16 %v3647
    %v4806 = vunpack.c.l.b16 %v3648
    %v4807 = vunpack.c.h.b16 %v3648
    %v4808 = vunpack.c.l.b16 %v3649
    %v4809 = vunpack.c.h.b16 %v3649
    %v4810 = vunpack.c.l.b16 %v3650
    %v4811 = vunpack.c.l.b16 %v3651
    %v4812 = vunpack.c.h.b16 %v3651
    %v4813 = vunpack.c.l.b16 %v3652
    %v4814 = vunpack.c.h.b16 %v3652
    %v4815 = vunpack.c.l.b16 %v3653
    %v4816 = vunpack.c.h.b16 %v3653
    %v4817 = vunpack.c.l.b16 %v3654
    %v4818 = vunpack.c.l.b16 %v3655
    %v4819 = vunpack.c.h.b16 %v3655
    %v4820 = vunpack.c.l.b16 %v3656
    %v4821 = vunpack.c.h.b16 %v3656
    %v4822 = vunpack.c.l.b16 %v3657
    %v4823 = vunpack.c.h.b16 %v3657
    %v4824 = vunpack.c.l.b16 %v3658
    %v4825 = vunpack.c.l.b16 %v3659
    %v4826 = vunpack.c.h.b16 %v3659
    %v4827 = vunpack.c.l.b16 %v3660
    %v4828 = vunpack.c.h.b16 %v3660
    %v4829 = vunpack.c.l.b16 %v3661
    %v4830 = vunpack.c.h.b16 %v3661
    %v4831 = vunpack.c.l.b16 %v3662
    %v4832 = vunpack.c.l.b16 %v3663
    %v4833 = vunpack.c.h.b16 %v3663
    %v4834 = vunpack.c.l.b16 %v3664
    %v4835 = vunpack.c.h.b16 %v3664
    %v4836 = vunpack.c.l.b16 %v3665
    %v4837 = vunpack.c.h.b16 %v3665
    %v4838 = vunpack.c.l.b16 %v3666
    %v4839 = vunpack.c.l.b16 %v3667
    %v4840 = vunpack.c.h.b16 %v3667
    %v4841 = vunpack.c.l.b16 %v3668
    %v4842 = vunpack.c.h.b16 %v3668
    %v4843 = vunpack.c.l.b16 %v3669
    %v4844 = vunpack.c.h.b16 %v3669
    %v4845 = vunpack.c.l.b16 %v3670
    %v4846 = vunpack.c.l.b16 %v3671
    %v4847 = vunpack.c.h.b16 %v3671
    %v4848 = vunpack.c.l.b16 %v3672
    %v4849 = vunpack.c.h.b16 %v3672
    %v4850 = vunpack.c.l.b16 %v3673
    %v4851 = vunpack.c.h.b16 %v3673
    %v4852 = vunpack.c.l.b16 %v3674
    %v4853 = vunpack.c.l.b16 %v3675
    %v4854 = vunpack.c.h.b16 %v3675
    %v4855 = vunpack.c.l.b16 %v3676
    %v4856 = vunpack.c.h.b16 %v3676
    %v4857 = vunpack.c.l.b16 %v3677
    %v4858 = vunpack.c.h.b16 %v3677
    %v4859 = vunpack.c.l.b16 %v3678
    %v4860 = vunpack.c.l.b16 %v3679
    %v4861 = vunpack.c.h.b16 %v3679
    %v4862 = vunpack.c.l.b16 %v3680
    %v4863 = vunpack.c.h.b16 %v3680
    %v4864 = vunpack.c.l.b16 %v3681
    %v4865 = vunpack.c.h.b16 %v3681
    %v4866 = vunpack.c.l.b16 %v3682
    %v4867 = vunpack.c.l.b16 %v3683
    %v4868 = vunpack.c.h.b16 %v3683
    %v4869 = vunpack.c.l.b16 %v3684
    %v4870 = vunpack.c.h.b16 %v3684
    %v4871 = vunpack.c.l.b16 %v3685
    %v4872 = vunpack.c.h.b16 %v3685
    %v4873 = vunpack.c.l.b16 %v3686
    %v4874 = vunpack.c.l.b16 %v3687
    %v4875 = vunpack.c.h.b16 %v3687
    %v4876 = vunpack.c.l.b16 %v3688
    %v4877 = vunpack.c.h.b16 %v3688
    %v4878 = vunpack.c.l.b16 %v3689
    %v4879 = vunpack.c.h.b16 %v3689
    %v4880 = vunpack.c.l.b16 %v3690
    %v4881 = vunpack.c.l.b16 %v3691
    %v4882 = vunpack.c.h.b16 %v3691
    %v4883 = vunpack.c.l.b16 %v3692
    %v4884 = vunpack.c.h.b16 %v3692
    %v4885 = vunpack.c.l.b16 %v3693
    %v4886 = vunpack.c.h.b16 %v3693
    %v4887 = vunpack.c.l.b16 %v3694
    %v4888 = vunpack.c.l.b16 %v3695
    %v4889 = vunpack.c.h.b16 %v3695
    %v4890 = vunpack.c.l.b16 %v3696
    %v4891 = vunpack.c.h.b16 %v3696
    %v4892 = vunpack.c.l.b16 %v3697
    %v4893 = vunpack.c.h.b16 %v3697
    %v4894 = vunpack.c.l.b16 %v3698
    %v4895 = vunpack.c.l.b16 %v3699
    %v4896 = vunpack.c.h.b16 %v3699
    %v4897 = vunpack.c.l.b16 %v3700
    %v4898 = vunpack.c.h.b16 %v3700
    %v4899 = vunpack.c.l.b16 %v3701
    %v4900 = vunpack.c.h.b16 %v3701
    %v4901 = vunpack.c.l.b16 %v3702
    %v4902 = vunpack.c.l.b16 %v3703
    %v4903 = vunpack.c.h.b16 %v3703
    %v4904 = vunpack.c.l.b16 %v3704
    %v4905 = vunpack.c.h.b16 %v3704
    %v4906 = vunpack.c.l.b16 %v3705
    %v4907 = vunpack.c.h.b16 %v3705
    %v4908 = vunpack.c.l.b16 %v3706
    %v4909 = vunpack.c.l.b16 %v3707
    %v4910 = vunpack.c.h.b16 %v3707
    %v4911 = vunpack.c.l.b16 %v3708
    %v4912 = vunpack.c.h.b16 %v3708
    %v4913 = vunpack.c.l.b16 %v3709
    %v4914 = vunpack.c.h.b16 %v3709
    %v4915 = vunpack.c.l.b16 %v3710
    %v4916 = vunpack.c.l.b16 %v3711
    %v4917 = vunpack.c.h.b16 %v3711
    %v4918 = vunpack.c.l.b16 %v3712
    %v4919 = vunpack.c.h.b16 %v3712
    %v4920 = vunpack.c.l.b16 %v3713
    %v4921 = vunpack.c.h.b16 %v3713
    %v4922 = vunpack.c.l.b16 %v3714
    %v4923 = vunpack.c.l.b16 %v3715
    %v4924 = vunpack.c.h.b16 %v3715
    %v4925 = vunpack.c.l.b16 %v3716
    %v4926 = vunpack.c.h.b16 %v3716
    %v4927 = vunpack.c.l.b16 %v3717
    %v4928 = vunpack.c.h.b16 %v3717
    %v4929 = vunpack.c.l.b16 %v3718
    %v4930 = vunpack.c.l.b16 %v3719
    %v4931 = vunpack.c.h.b16 %v3719
    %v4932 = vunpack.c.l.b16 %v3720
    %v4933 = vunpack.c.h.b16 %v3720
    %v4934 = vunpack.c.l.b16 %v3721
    %v4935 = vunpack.c.h.b16 %v3721
    %v4936 = vunpack.c.l.b16 %v3722
    %v4937 = vunpack.c.l.b16 %v3723
    %v4938 = vunpack.c.h.b16 %v3723
    %v4939 = vunpack.c.l.b16 %v3724
    %v4940 = vunpack.c.h.b16 %v3724
    %v4941 = vunpack.c.l.b16 %v3725
    %v4942 = vunpack.c.h.b16 %v3725
    %v4943 = vunpack.c.l.b16 %v3726
    %v4944 = vunpack.c.l.b16 %v3727
    %v4945 = vunpack.c.h.b16 %v3727
    %v4946 = vunpack.c.l.b16 %v3728
    %v4947 = vunpack.c.h.b16 %v3728
    %v4948 = vunpack.c.l.b16 %v3729
    %v4949 = vunpack.c.h.b16 %v3729
    %v4950 = vunpack.c.l.b16 %v3730
    %v4951 = vunpack.c.l.b16 %v3731
    %v4952 = vunpack.c.h.b16 %v3731
    %v4953 = vunpack.c.l.b16 %v3732
    %v4954 = vunpack.c.h.b16 %v3732
    %v4955 = vunpack.c.l.b16 %v3733
    %v4956 = vunpack.c.h.b16 %v3733
    %v4957 = vunpack.c.l.b16 %v3734
    %v4958 = vunpack.c.l.b16 %v3735
    %v4959 = vunpack.c.h.b16 %v3735
    %v4960 = vunpack.c.l.b16 %v3736
    %v4961 = vunpack.c.h.b16 %v3736
    %v4962 = vunpack.c.l.b16 %v3737
    %v4963 = vunpack.c.h.b16 %v3737
    %v4964 = vunpack.c.l.b16 %v3738
    %v4965 = vunpack.c.l.b16 %v3739
    %v4966 = vunpack.c.h.b16 %v3739
    %v4967 = vunpack.c.l.b16 %v3740
    %v4968 = vunpack.c.h.b16 %v3740
    %v4969 = vunpack.c.l.b16 %v3741
    %v4970 = vunpack.c.h.b16 %v3741
    %v4971 = vunpack.c.l.b16 %v3742
    %v4972 = vunpack.c.l.b16 %v3743
    %v4973 = vunpack.c.h.b16 %v3743
    %v4974 = vunpack.c.l.b16 %v3744
    %v4975 = vunpack.c.h.b16 %v3744
    %v4976 = vunpack.c.l.b16 %v3745
    %v4977 = vunpack.c.h.b16 %v3745
    %v4978 = vunpack.c.l.b16 %v3746
    %v4979 = vunpack.c.l.b16 %v3747
    %v4980 = vunpack.c.h.b16 %v3747
    %v4981 = vunpack.c.l.b16 %v3748
    %v4982 = vunpack.c.h.b16 %v3748
    %v4983 = vunpack.c.l.b16 %v3749
    %v4984 = vunpack.c.h.b16 %v3749
    %v4985 = vunpack.c.l.b16 %v3750
    %v4986 = vunpack.c.l.b16 %v3751
    %v4987 = vunpack.c.h.b16 %v3751
    %v4988 = vunpack.c.l.b16 %v3752
    %v4989 = vunpack.c.h.b16 %v3752
    %v4990 = vunpack.c.l.b16 %v3753
    %v4991 = vunpack.c.h.b16 %v3753
    %v4992 = vunpack.c.l.b16 %v3754
    %v4993 = vunpack.c.l.b16 %v3755
    %v4994 = vunpack.c.h.b16 %v3755
    %v4995 = vunpack.c.l.b16 %v3756
    %v4996 = vunpack.c.h.b16 %v3756
    %v4997 = vunpack.c.l.b16 %v3757
    %v4998 = vunpack.c.h.b16 %v3757
    %v4999 = vunpack.c.l.b16 %v3758
    %v5000 = vunpack.c.l.b16 %v3759
    %v5001 = vunpack.c.h.b16 %v3759
    %v5002 = vunpack.c.l.b16 %v3760
    %v5003 = vunpack.c.h.b16 %v3760
    %v5004 = vunpack.c.l.b16 %v3761
    %v5005 = vunpack.c.h.b16 %v3761
    %v5006 = vunpack.c.l.b16 %v3762
    %v5007 = vunpack.c.l.b16 %v3763
    %v5008 = vunpack.c.h.b16 %v3763
    %v5009 = vunpack.c.l.b16 %v3764
    %v5010 = vunpack.c.h.b16 %v3764
    %v5011 = vunpack.c.l.b16 %v3765
    %v5012 = vunpack.c.h.b16 %v3765
    %v5013 = vunpack.c.l.b16 %v3766
    %v5014 = vunpack.c.l.b16 %v3767
    %v5015 = vunpack.c.h.b16 %v3767
    %v5016 = vunpack.c.l.b16 %v3768
    %v5017 = vunpack.c.h.b16 %v3768
    %v5018 = vunpack.c.l.b16 %v3769
    %v5019 = vunpack.c.h.b16 %v3769
    %v5020 = vunpack.c.l.b16 %v3770
    %v5021 = vunpack.c.l.b16 %v3771
    %v5022 = vunpack.c.h.b16 %v3771
    %v5023 = vunpack.c.l.b16 %v3772
    %v5024 = vunpack.c.h.b16 %v3772
    %v5025 = vunpack.c.l.b16 %v3773
    %v5026 = vunpack.c.h.b16 %v3773
    %v5027 = vunpack.c.l.b16 %v3774
    %v5028 = vunpack.c.l.b16 %v3775
    %v5029 = vunpack.c.h.b16 %v3775
    %v5030 = vunpack.c.l.b16 %v3776
    %v5031 = vunpack.c.h.b16 %v3776
    %v5032 = vunpack.c.l.b16 %v3777
    %v5033 = vunpack.c.h.b16 %v3777
    %v5034 = vunpack.c.l.b16 %v3778
    %v5035 = vunpack.c.l.b16 %v3779
    %v5036 = vunpack.c.h.b16 %v3779
    %v5037 = vunpack.c.l.b16 %v3780
    %v5038 = vunpack.c.h.b16 %v3780
    %v5039 = vunpack.c.l.b16 %v3781
    %v5040 = vunpack.c.h.b16 %v3781
    %v5041 = vunpack.c.l.b16 %v3782
    %v5042 = vunpack.c.l.b16 %v3783
    %v5043 = vunpack.c.h.b16 %v3783
    %v5044 = vunpack.c.l.b16 %v3784
    %v5045 = vunpack.c.h.b16 %v3784
    %v5046 = vunpack.c.l.b16 %v3785
    %v5047 = vunpack.c.h.b16 %v3785
    %v5048 = vunpack.c.l.b16 %v3786
    %v5049 = vunpack.c.l.b16 %v3787
    %v5050 = vunpack.c.h.b16 %v3787
    %v5051 = vunpack.c.l.b16 %v3788
    %v5052 = vunpack.c.h.b16 %v3788
    %v5053 = vunpack.c.l.b16 %v3789
    %v5054 = vunpack.c.h.b16 %v3789
    %v5055 = vunpack.c.l.b16 %v3790
    %v5056 = vunpack.c.l.b16 %v3791
    %v5057 = vunpack.c.h.b16 %v3791
    %v5058 = vunpack.c.l.b16 %v3792
    %v5059 = vunpack.c.h.b16 %v3792
    %v5060 = vunpack.c.l.b16 %v3793
    %v5061 = vunpack.c.h.b16 %v3793
    %v5062 = vunpack.c.l.b16 %v3794
    %v5063 = vunpack.c.l.b16 %v3795
    %v5064 = vunpack.c.h.b16 %v3795
    %v5065 = vunpack.c.l.b16 %v3796
    %v5066 = vunpack.c.h.b16 %v3796
    %v5067 = vunpack.c.l.b16 %v3797
    %v5068 = vunpack.c.h.b16 %v3797
    %v5069 = vunpack.c.l.b16 %v3798
    %v5070 = vunpack.c.l.b16 %v3799
    %v5071 = vunpack.c.h.b16 %v3799
    %v5072 = vunpack.c.l.b16 %v3800
    %v5073 = vunpack.c.h.b16 %v3800
    %v5074 = vunpack.c.l.b16 %v3801
    %v5075 = vunpack.c.h.b16 %v3801
    %v5076 = vunpack.c.l.b16 %v3802
    %v5077 = vunpack.c.l.b16 %v3803
    %v5078 = vunpack.c.h.b16 %v3803
    %v5079 = vunpack.c.l.b16 %v3804
    %v5080 = vunpack.c.h.b16 %v3804
    %v5081 = vunpack.c.l.b16 %v3805
    %v5082 = vunpack.c.h.b16 %v3805
    %v5083 = vunpack.c.l.b16 %v3806
    %v5084 = vunpack.c.l.b16 %v3807
    %v5085 = vunpack.c.h.b16 %v3807
    %v5086 = vunpack.c.l.b16 %v3808
    %v5087 = vunpack.c.h.b16 %v3808
    %v5088 = vunpack.c.l.b16 %v3809
    %v5089 = vunpack.c.h.b16 %v3809
    %v5090 = vunpack.c.l.b16 %v3810
    %v5091 = vunpack.c.l.b16 %v3811
    %v5092 = vunpack.c.h.b16 %v3811
    %v5093 = vunpack.c.l.b16 %v3812
    %v5094 = vunpack.c.h.b16 %v3812
    %v5095 = vunpack.c.l.b16 %v3813
    %v5096 = vunpack.c.h.b16 %v3813
    %v5097 = vunpack.c.l.b16 %v3814
    %v5098 = vunpack.c.l.b16 %v3815
    %v5099 = vunpack.c.h.b16 %v3815
    %v5100 = vunpack.c.l.b16 %v3816
    %v5101 = vunpack.c.h.b16 %v3816
    %v5102 = vunpack.c.l.b16 %v3817
    %v5103 = vunpack.c.h.b16 %v3817
    %v5104 = vunpack.c.l.b16 %v3818
    %v5105 = vunpack.c.l.b16 %v3819
    %v5106 = vunpack.c.h.b16 %v3819
    %v5107 = vunpack.c.l.b16 %v3820
    %v5108 = vunpack.c.h.b16 %v3820
    %v5109 = vunpack.c.l.b16 %v3821
    %v5110 = vunpack.c.h.b16 %v3821
    %v5111 = vunpack.c.l.b16 %v3822
    %v5112 = vunpack.c.l.b16 %v3823
    %v5113 = vunpack.c.h.b16 %v3823
    %v5114 = vunpack.c.l.b16 %v3824
    %v5115 = vunpack.c.h.b16 %v3824
    %v5116 = vunpack.c.l.b16 %v3825
    %v5117 = vunpack.c.h.b16 %v3825
    %v5118 = vunpack.c.l.b16 %v3826
    %v5119 = vunpack.c.l.b16 %v3827
    %v5120 = vunpack.c.h.b16 %v3827
    %v5121 = vunpack.c.l.b16 %v3828
    %v5122 = vunpack.c.h.b16 %v3828
    %v5123 = vunpack.c.l.b16 %v3829
    %v5124 = vunpack.c.h.b16 %v3829
    %v5125 = vunpack.c.l.b16 %v3830
    %v5126 = vunpack.c.l.b16 %v3831
    %v5127 = vunpack.c.h.b16 %v3831
    %v5128 = vunpack.c.l.b16 %v3832
    %v5129 = vunpack.c.h.b16 %v3832
    %v5130 = vunpack.c.l.b16 %v3833
    %v5131 = vunpack.c.h.b16 %v3833
    %v5132 = vunpack.c.l.b16 %v3834
    %v5133 = vunpack.c.l.b16 %v3835
    %v5134 = vunpack.c.h.b16 %v3835
    %v5135 = vunpack.c.l.b16 %v3836
    %v5136 = vunpack.c.h.b16 %v3836
    %v5137 = vunpack.c.l.b16 %v3837
    %v5138 = vunpack.c.h.b16 %v3837
    %v5139 = vunpack.c.l.b16 %v3838
    %v5140 = vunpack.c.l.b16 %v3839
    %v5141 = vunpack.c.h.b16 %v3839
    %v5142 = vunpack.c.l.b16 %v3840
    %v5143 = vunpack.c.h.b16 %v3840
    %v5144 = vunpack.c.l.b16 %v3841
    %v5145 = vunpack.c.h.b16 %v3841
    %v5146 = vunpack.c.l.b16 %v3842
    %v5147 = vunpack.c.l.b16 %v3843
    %v5148 = vunpack.c.h.b16 %v3843
    %v5149 = vunpack.c.l.b16 %v3844
    %v5150 = vunpack.c.h.b16 %v3844
    %v5151 = vunpack.c.l.b16 %v3845
    %v5152 = vunpack.c.h.b16 %v3845
    %v5153 = vunpack.c.l.b16 %v3846
    %v5154 = vunpack.c.l.b16 %v3847
    %v5155 = vunpack.c.h.b16 %v3847
    %v5156 = vunpack.c.l.b16 %v3848
    %v5157 = vunpack.c.h.b16 %v3848
    %v5158 = vunpack.c.l.b16 %v3849
    %v5159 = vunpack.c.h.b16 %v3849
    %v5160 = vunpack.c.l.b16 %v3850
    %v5161 = vunpack.c.l.b16 %v3851
    %v5162 = vunpack.c.h.b16 %v3851
    %v5163 = vunpack.c.l.b16 %v3852
    %v5164 = vunpack.c.h.b16 %v3852
    %v5165 = vunpack.c.l.b16 %v3853
    %v5166 = vunpack.c.h.b16 %v3853
    %v5167 = vunpack.c.l.b16 %v3854
    %v5168 = vunpack.c.l.b16 %v3855
    %v5169 = vunpack.c.h.b16 %v3855
    %v5170 = vunpack.c.l.b16 %v3856
    %v5171 = vunpack.c.h.b16 %v3856
    %v5172 = vunpack.c.l.b16 %v3857
    %v5173 = vunpack.c.h.b16 %v3857
    %v5174 = vunpack.c.l.b16 %v3858
    %v5175 = vunpack.c.l.b16 %v3859
    %v5176 = vunpack.c.h.b16 %v3859
    %v5177 = vunpack.c.l.b16 %v3860
    %v5178 = vunpack.c.h.b16 %v3860
    %v5179 = vunpack.c.l.b16 %v3861
    %v5180 = vunpack.c.h.b16 %v3861
    %v5181 = vunpack.c.l.b16 %v3862
    %v5182 = vunpack.c.l.b16 %v3863
    %v5183 = vunpack.c.h.b16 %v3863
    %v5184 = vunpack.c.l.b16 %v3864
    %v5185 = vunpack.c.h.b16 %v3864
    %v5186 = vunpack.c.l.b16 %v3865
    %v5187 = vunpack.c.h.b16 %v3865
    %v5188 = vunpack.c.l.b16 %v3866
    %v5189 = vunpack.c.l.b16 %v3867
    %v5190 = vunpack.c.h.b16 %v3867
    %v5191 = vunpack.c.l.b16 %v3868
    %v5192 = vunpack.c.h.b16 %v3868
    %v5193 = vunpack.c.l.b16 %v3869
    %v5194 = vunpack.c.h.b16 %v3869
    %v5195 = vunpack.c.l.b16 %v3870
    %v5196 = vunpack.c.l.b16 %v3871
    %v5197 = vunpack.c.h.b16 %v3871
    %v5198 = vunpack.c.l.b16 %v3872
    %v5199 = vunpack.c.h.b16 %v3872
    %v5200 = vunpack.c.l.b16 %v3873
    %v5201 = vunpack.c.h.b16 %v3873
    %v5202 = vunpack.c.l.b16 %v3874
    %v5203 = vunpack.c.l.b16 %v3875
    %v5204 = vunpack.c.h.b16 %v3875
    %v5205 = vunpack.c.l.b16 %v3876
    %v5206 = vunpack.c.h.b16 %v3876
    %v5207 = vunpack.c.l.b16 %v3877
    %v5208 = vunpack.c.h.b16 %v3877
    %v5209 = vunpack.c.l.b16 %v3878
    %v5210 = vunpack.c.l.b16 %v3879
    %v5211 = vunpack.c.h.b16 %v3879
    %v5212 = vunpack.c.l.b16 %v3880
    %v5213 = vunpack.c.h.b16 %v3880
    %v5214 = vunpack.c.l.b16 %v3881
    %v5215 = vunpack.c.h.b16 %v3881
    %v5216 = vunpack.c.l.b16 %v3882
    %v5217 = vunpack.c.l.b16 %v3883
    %v5218 = vunpack.c.h.b16 %v3883
    %v5219 = vunpack.c.l.b16 %v3884
    %v5220 = vunpack.c.h.b16 %v3884
    %v5221 = vunpack.c.l.b16 %v3885
    %v5222 = vunpack.c.h.b16 %v3885
    %v5223 = vunpack.c.l.b16 %v3886
    %v5224 = vunpack.c.l.b16 %v3887
    %v5225 = vunpack.c.h.b16 %v3887
    %v5226 = vunpack.c.l.b16 %v3888
    %v5227 = vunpack.c.h.b16 %v3888
    %v5228 = vunpack.c.l.b16 %v3889
    %v5229 = vunpack.c.h.b16 %v3889
    %v5230 = vunpack.c.l.b16 %v3890
    %v5231 = vunpack.c.l.b16 %v3891
    %v5232 = vunpack.c.h.b16 %v3891
    %v5233 = vunpack.c.l.b16 %v3892
    %v5234 = vunpack.c.h.b16 %v3892
    %v5235 = vunpack.c.l.b16 %v3893
    %v5236 = vunpack.c.h.b16 %v3893
    %v5237 = vunpack.c.l.b16 %v3894
    %v5238 = vunpack.c.l.b16 %v3895
    %v5239 = vunpack.c.h.b16 %v3895
    %v5240 = vunpack.c.l.b16 %v3896
    %v5241 = vunpack.c.h.b16 %v3896
    %v5242 = vunpack.c.l.b16 %v3897
    %v5243 = vunpack.c.h.b16 %v3897
    %v5244 = vunpack.c.l.b16 %v3898
    %v5245 = vunpack.c.l.b16 %v3899
    %v5246 = vunpack.c.h.b16 %v3899
    %v5247 = vunpack.c.l.b16 %v3900
    %v5248 = vunpack.c.h.b16 %v3900
    %v5249 = vunpack.c.l.b16 %v3901
    %v5250 = vunpack.c.h.b16 %v3901
    %v5251 = vunpack.c.l.b16 %v3902
    %v5252 = vunpack.c.l.b16 %v3903
    %v5253 = vunpack.c.h.b16 %v3903
    %v5254 = vunpack.c.l.b16 %v3904
    %v5255 = vunpack.c.h.b16 %v3904
    %v5256 = vunpack.c.l.b16 %v3905
    %v5257 = vunpack.c.h.b16 %v3905
    %v5258 = vunpack.c.l.b16 %v3906
    %v5259 = vunpack.c.l.b16 %v3907
    %v5260 = vunpack.c.h.b16 %v3907
    %v5261 = vunpack.c.l.b16 %v3908
    %v5262 = vunpack.c.h.b16 %v3908
    %v5263 = vunpack.c.l.b16 %v3909
    %v5264 = vunpack.c.h.b16 %v3909
    %v5265 = vunpack.c.l.b16 %v3910
    %v5266 = vunpack.c.l.b16 %v3911
    %v5267 = vunpack.c.h.b16 %v3911
    %v5268 = vunpack.c.l.b16 %v3912
    %v5269 = vunpack.c.h.b16 %v3912
    %v5270 = vunpack.c.l.b16 %v3913
    %v5271 = vunpack.c.h.b16 %v3913
    %v5272 = vunpack.c.l.b16 %v3914
    %v5273 = vunpack.c.l.b16 %v3915
    %v5274 = vunpack.c.h.b16 %v3915
    %v5275 = vunpack.c.l.b16 %v3916
    %v5276 = vunpack.c.h.b16 %v3916
    %v5277 = vunpack.c.l.b16 %v3917
    %v5278 = vunpack.c.h.b16 %v3917
    %v5279 = vunpack.c.l.b16 %v3918
    %v5280 = vunpack.c.l.b16 %v3919
    %v5281 = vunpack.c.h.b16 %v3919
    %v5282 = vunpack.c.l.b16 %v3920
    %v5283 = vunpack.c.h.b16 %v3920
    %v5284 = vunpack.c.l.b16 %v3921
    %v5285 = vunpack.c.h.b16 %v3921
    %v5286 = vunpack.c.l.b16 %v3922
    %v5287 = vunpack.c.l.b16 %v3923
    %v5288 = vunpack.c.h.b16 %v3923
    %v5289 = vunpack.c.l.b16 %v3924
    %v5290 = vunpack.c.h.b16 %v3924
    %v5291 = vunpack.c.l.b16 %v3925
    %v5292 = vunpack.c.h.b16 %v3925
    %v5293 = vunpack.c.l.b16 %v3926
    %v5294 = vunpack.c.l.b16 %v3927
    %v5295 = vunpack.c.h.b16 %v3927
    %v5296 = vunpack.c.l.b16 %v3928
    %v5297 = vunpack.c.h.b16 %v3928
    %v5298 = vunpack.c.l.b16 %v3929
    %v5299 = vunpack.c.h.b16 %v3929
    %v5300 = vunpack.c.l.b16 %v3930
    %v5301 = vunpack.c.l.b16 %v3931
    %v5302 = vunpack.c.h.b16 %v3931
    %v5303 = vunpack.c.l.b16 %v3932
    %v5304 = vunpack.c.h.b16 %v3932
    %v5305 = vunpack.c.l.b16 %v3933
    %v5306 = vunpack.c.h.b16 %v3933
    %v5307 = vunpack.c.l.b16 %v3934
    %v5308 = vunpack.c.l.b16 %v3935
    %v5309 = vunpack.c.h.b16 %v3935
    %v5310 = vunpack.c.l.b16 %v3936
    %v5311 = vunpack.c.h.b16 %v3936
    %v5312 = vunpack.c.l.b16 %v3937
    %v5313 = vunpack.c.h.b16 %v3937
    %v5314 = vunpack.c.l.b16 %v3938
    %v5315 = vunpack.c.l.b16 %v3939
    %v5316 = vunpack.c.h.b16 %v3939
    %v5317 = vunpack.c.l.b16 %v3940
    %v5318 = vunpack.c.h.b16 %v3940
    %v5319 = vunpack.c.l.b16 %v3941
    %v5320 = vunpack.c.h.b16 %v3941
    %v5321 = vunpack.c.l.b16 %v3942
    %v5322 = vunpack.c.l.b16 %v3943
    %v5323 = vunpack.c.h.b16 %v3943
    %v5324 = vunpack.c.l.b16 %v3944
    %v5325 = vunpack.c.h.b16 %v3944
    %v5326 = vunpack.c.l.b16 %v3945
    %v5327 = vunpack.c.h.b16 %v3945
    %v5328 = vunpack.c.l.b16 %v3946
    %v5329 = vunpack.c.l.b16 %v3947
    %v5330 = vunpack.c.h.b16 %v3947
    %v5331 = vunpack.c.l.b16 %v3948
    %v5332 = vunpack.c.h.b16 %v3948
    %v5333 = vunpack.c.l.b16 %v3949
    %v5334 = vunpack.c.h.b16 %v3949
    %v5335 = vunpack.c.l.b16 %v3950
    %v5336 = vunpack.c.l.b16 %v3951
    %v5337 = vunpack.c.h.b16 %v3951
    %v5338 = vunpack.c.l.b16 %v3952
    %v5339 = vunpack.c.h.b16 %v3952
    %v5340 = vunpack.c.l.b16 %v3953
    %v5341 = vunpack.c.h.b16 %v3953
    %v5342 = vunpack.c.l.b16 %v3954
    %v5343 = vunpack.c.l.b16 %v3955
    %v5344 = vunpack.c.h.b16 %v3955
    %v5345 = vunpack.c.l.b16 %v3956
    %v5346 = vunpack.c.h.b16 %v3956
    %v5347 = vunpack.c.l.b16 %v3957
    %v5348 = vunpack.c.h.b16 %v3957
    %v5349 = vunpack.c.l.b16 %v3958
    %v5350 = vunpack.c.l.b16 %v3959
    %v5351 = vunpack.c.h.b16 %v3959
    %v5352 = vunpack.c.l.b16 %v3960
    %v5353 = vunpack.c.h.b16 %v3960
    %v5354 = vunpack.c.l.b16 %v3961
    %v5355 = vunpack.c.h.b16 %v3961
    %v5356 = vunpack.c.l.b16 %v3962
    %v5357 = vunpack.c.l.b16 %v3963
    %v5358 = vunpack.c.h.b16 %v3963
    %v5359 = vunpack.c.l.b16 %v3964
    %v5360 = vunpack.c.h.b16 %v3964
    %v5361 = vunpack.c.l.b16 %v3965
    %v5362 = vunpack.c.h.b16 %v3965
    %v5363 = vunpack.c.l.b16 %v3966
    %v5364 = vunpack.c.l.b16 %v3967
    %v5365 = vunpack.c.h.b16 %v3967
    %v5366 = vunpack.c.l.b16 %v3968
    %v5367 = vunpack.c.h.b16 %v3968
    %v5368 = vunpack.c.l.b16 %v3969
    %v5369 = vunpack.c.h.b16 %v3969
    %v5370 = vunpack.c.l.b16 %v3970
    %v5371 = vunpack.c.l.b16 %v3971
    %v5372 = vunpack.c.h.b16 %v3971
    %v5373 = vunpack.c.l.b16 %v3972
    %v5374 = vunpack.c.h.b16 %v3972
    %v5375 = vunpack.c.l.b16 %v3973
    %v5376 = vunpack.c.h.b16 %v3973
    %v5377 = vunpack.c.l.b16 %v3974
    %v5378 = vunpack.c.l.b16 %v3975
    %v5379 = vunpack.c.h.b16 %v3975
    %v5380 = vunpack.c.l.b16 %v3976
    %v5381 = vunpack.c.h.b16 %v3976
    %v5382 = vunpack.c.l.b16 %v3977
    %v5383 = vunpack.c.h.b16 %v3977
    %v5384 = vunpack.c.l.b16 %v3978
    %v5385 = vunpack.c.l.b16 %v3979
    %v5386 = vunpack.c.h.b16 %v3979
    %v5387 = vunpack.c.l.b16 %v3980
    %v5388 = vunpack.c.h.b16 %v3980
    %v5389 = vunpack.c.l.b16 %v3981
    %v5390 = vunpack.c.h.b16 %v3981
    %v5391 = vunpack.c.l.b16 %v3982
    %v5392 = vunpack.c.l.b16 %v3983
    %v5393 = vunpack.c.h.b16 %v3983
    %v5394 = vunpack.c.l.b16 %v3984
    %v5395 = vunpack.c.h.b16 %v3984
    %v5396 = vunpack.c.l.b16 %v3985
    %v5397 = vunpack.c.h.b16 %v3985
    %v5398 = vunpack.c.l.b16 %v3986
    %v5399 = vunpack.c.l.b16 %v3987
    %v5400 = vunpack.c.h.b16 %v3987
    %v5401 = vunpack.c.l.b16 %v3988
    %v5402 = vunpack.c.h.b16 %v3988
    %v5403 = vunpack.c.l.b16 %v3989
    %v5404 = vunpack.c.h.b16 %v3989
    %v5405 = vunpack.c.l.b16 %v3990
    %v5406 = vunpack.c.l.b16 %v3991
    %v5407 = vunpack.c.h.b16 %v3991
    %v5408 = vunpack.c.l.b16 %v3992
    %v5409 = vunpack.c.h.b16 %v3992
    %v5410 = vunpack.c.l.b16 %v3993
    %v5411 = vunpack.c.h.b16 %v3993
    %v5412 = vunpack.c.l.b16 %v3994
    %v5413 = vunpack.c.l.b16 %v3995
    %v5414 = vunpack.c.h.b16 %v3995
    %v5415 = vunpack.c.l.b16 %v3996
    %v5416 = vunpack.c.h.b16 %v3996
    %v5417 = vunpack.c.l.b16 %v3997
    %v5418 = vunpack.c.h.b16 %v3997
    %v5419 = vunpack.c.l.b16 %v3998
    %v5420 = vunpack.c.l.b16 %v3999
    %v5421 = vunpack.c.h.b16 %v3999
    %v5422 = vunpack.c.l.b16 %v4000
    %v5423 = vunpack.c.h.b16 %v4000
    %v5424 = vunpack.c.l.b16 %v4001
    %v5425 = vunpack.c.h.b16 %v4001
    %v5426 = vunpack.c.l.b16 %v4002
    %v5427 = vunpack.c.l.b16 %v4003
    %v5428 = vunpack.c.h.b16 %v4003
    %v5429 = vunpack.c.l.b16 %v4004
    %v5430 = vunpack.c.h.b16 %v4004
    %v5431 = vunpack.c.l.b16 %v4005
    %v5432 = vunpack.c.h.b16 %v4005
    %v5433 = vunpack.c.l.b16 %v4006
    %v5434 = vunpack.c.l.b16 %v4007
    %v5435 = vunpack.c.h.b16 %v4007
    %v5436 = vunpack.c.l.b16 %v4008
    %v5437 = vunpack.c.h.b16 %v4008
    %v5438 = vunpack.c.l.b16 %v4009
    %v5439 = vunpack.c.h.b16 %v4009
    %v5440 = vunpack.c.l.b16 %v4010
    %v5441 = vunpack.c.l.b16 %v4011
    %v5442 = vunpack.c.h.b16 %v4011
    %v5443 = vunpack.c.l.b16 %v4012
    %v5444 = vunpack.c.h.b16 %v4012
    %v5445 = vunpack.c.l.b16 %v4013
    %v5446 = vunpack.c.h.b16 %v4013
    %v5447 = vunpack.c.l.b16 %v4014
    %v5448 = vunpack.c.l.b16 %v4015
    %v5449 = vunpack.c.h.b16 %v4015
    %v5450 = vunpack.c.l.b16 %v4016
    %v5451 = vunpack.c.h.b16 %v4016
    %v5452 = vunpack.c.l.b16 %v4017
    %v5453 = vunpack.c.h.b16 %v4017
    %v5454 = vunpack.c.l.b16 %v4018
    %v5455 = vunpack.c.l.b16 %v4019
    %v5456 = vunpack.c.h.b16 %v4019
    %v5457 = vunpack.c.l.b16 %v4020
    %v5458 = vunpack.c.h.b16 %v4020
    %v5459 = vunpack.c.l.b16 %v4021
    %v5460 = vunpack.c.h.b16 %v4021
    %v5461 = vunpack.c.l.b16 %v4022
    %v5462 = vunpack.c.l.b16 %v4023
    %v5463 = vunpack.c.h.b16 %v4023
    %v5464 = vunpack.c.l.b16 %v4024
    %v5465 = vunpack.c.h.b16 %v4024
    %v5466 = vunpack.c.l.b16 %v4025
    %v5467 = vunpack.c.h.b16 %v4025
    %v5468 = vunpack.c.l.b16 %v4026
    %v5469 = vunpack.c.l.b16 %v4027
    %v5470 = vunpack.c.h.b16 %v4027
    %v5471 = vunpack.c.l.b16 %v4028
    %v5472 = vunpack.c.h.b16 %v4028
    %v5473 = vunpack.c.l.b16 %v4029
    %v5474 = vunpack.c.h.b16 %v4029
    %v5475 = vunpack.c.l.b16 %v4030
    %v5476 = vpack.c.b16 %v4587, %v4580
    %v5477 = vpack.c.b16 %v4588, %v4581
    %v5478 = vpack.c.b16 %v4589, %v4582
    %v5479 = vpack.c.b16 %v4590, %v4583
    %v5480 = vpack.c.b16 %v4591, %v4584
    %v5481 = vpack.c.b16 %v4592, %v4585
    %v5482 = vpack.c.b16 %v4593, %v4586
    %v5483 = vpack.c.b16 %v4601, %v4594
    %v5484 = vpack.c.b16 %v4602, %v4595
    %v5485 = vpack.c.b16 %v4603, %v4596
    %v5486 = vpack.c.b16 %v4604, %v4597
    %v5487 = vpack.c.b16 %v4605, %v4598
    %v5488 = vpack.c.b16 %v4606, %v4599
    %v5489 = vpack.c.b16 %v4607, %v4600
    %v5490 = vpack.c.b16 %v4615, %v4608
    %v5491 = vpack.c.b16 %v4616, %v4609
    %v5492 = vpack.c.b16 %v4617, %v4610
    %v5493 = vpack.c.b16 %v4618, %v4611
    %v5494 = vpack.c.b16 %v4619, %v4612
    %v5495 = vpack.c.b16 %v4620, %v4613
    %v5496 = vpack.c.b16 %v4621, %v4614
    %v5497 = vpack.c.b16 %v4629, %v4622
    %v5498 = vpack.c.b16 %v4630, %v4623
    %v5499 = vpack.c.b16 %v4631, %v4624
    %v5500 = vpack.c.b16 %v4632, %v4625
    %v5501 = vpack.c.b16 %v4633, %v4626
    %v5502 = vpack.c.b16 %v4634, %v4627
    %v5503 = vpack.c.b16 %v4635, %v4628
    %v5504 = vpack.c.b16 %v4643, %v4636
    %v5505 = vpack.c.b16 %v4644, %v4637
    %v5506 = vpack.c.b16 %v4645, %v4638
    %v5507 = vpack.c.b16 %v4646, %v4639
    %v5508 = vpack.c.b16 %v4647, %v4640
    %v5509 = vpack.c.b16 %v4648, %v4641
    %v5510 = vpack.c.b16 %v4649, %v4642
    %v5511 = vpack.c.b16 %v4657, %v4650
    %v5512 = vpack.c.b16 %v4658, %v4651
    %v5513 = vpack.c.b16 %v4659, %v4652
    %v5514 = vpack.c.b16 %v4660, %v4653
    %v5515 = vpack.c.b16 %v4661, %v4654
    %v5516 = vpack.c.b16 %v4662, %v4655
    %v5517 = vpack.c.b16 %v4663, %v4656
    %v5518 = vpack.c.b16 %v4671, %v4664
    %v5519 = vpack.c.b16 %v4672, %v4665
    %v5520 = vpack.c.b16 %v4673, %v4666
    %v5521 = vpack.c.b16 %v4674, %v4667
    %v5522 = vpack.c.b16 %v4675, %v4668
    %v5523 = vpack.c.b16 %v4676, %v4669
    %v5524 = vpack.c.b16 %v4677, %v4670
    %v5525 = vpack.c.b16 %v4685, %v4678
    %v5526 = vpack.c.b16 %v4686, %v4679
    %v5527 = vpack.c.b16 %v4687, %v4680
    %v5528 = vpack.c.b16 %v4688, %v4681
    %v5529 = vpack.c.b16 %v4689, %v4682
    %v5530 = vpack.c.b16 %v4690, %v4683
    %v5531 = vpack.c.b16 %v4691, %v4684
    %v5532 = vpack.c.b16 %v4699, %v4692
    %v5533 = vpack.c.b16 %v4700, %v4693
    %v5534 = vpack.c.b16 %v4701, %v4694
    %v5535 = vpack.c.b16 %v4702, %v4695
    %v5536 = vpack.c.b16 %v4703, %v4696
    %v5537 = vpack.c.b16 %v4704, %v4697
    %v5538 = vpack.c.b16 %v4705, %v4698
    %v5539 = vpack.c.b16 %v4713, %v4706
    %v5540 = vpack.c.b16 %v4714, %v4707
    %v5541 = vpack.c.b16 %v4715, %v4708
    %v5542 = vpack.c.b16 %v4716, %v4709
    %v5543 = vpack.c.b16 %v4717, %v4710
    %v5544 = vpack.c.b16 %v4718, %v4711
    %v5545 = vpack.c.b16 %v4719, %v4712
    %v5546 = vpack.c.b16 %v4727, %v4720
    %v5547 = vpack.c.b16 %v4728, %v4721
    %v5548 = vpack.c.b16 %v4729, %v4722
    %v5549 = vpack.c.b16 %v4730, %v4723
    %v5550 = vpack.c.b16 %v4731, %v4724
    %v5551 = vpack.c.b16 %v4732, %v4725
    %v5552 = vpack.c.b16 %v4733, %v4726
    %v5553 = vpack.c.b16 %v4741, %v4734
    %v5554 = vpack.c.b16 %v4742, %v4735
    %v5555 = vpack.c.b16 %v4743, %v4736
    %v5556 = vpack.c.b16 %v4744, %v4737
    %v5557 = vpack.c.b16 %v4745, %v4738
    %v5558 = vpack.c.b16 %v4746, %v4739
    %v5559 = vpack.c.b16 %v4747, %v4740
    %v5560 = vpack.c.b16 %v4755, %v4748
    %v5561 = vpack.c.b16 %v4756, %v4749
    %v5562 = vpack.c.b16 %v4757, %v4750
    %v5563 = vpack.c.b16 %v4758, %v4751
    %v5564 = vpack.c.b16 %v4759, %v4752
    %v5565 = vpack.c.b16 %v4760, %v4753
    %v5566 = vpack.c.b16 %v4761, %v4754
    %v5567 = vpack.c.b16 %v4769, %v4762
    %v5568 = vpack.c.b16 %v4770, %v4763
    %v5569 = vpack.c.b16 %v4771, %v4764
    %v5570 = vpack.c.b16 %v4772, %v4765
    %v5571 = vpack.c.b16 %v4773, %v4766
    %v5572 = vpack.c.b16 %v4774, %v4767
    %v5573 = vpack.c.b16 %v4775, %v4768
    %v5574 = vpack.c.b16 %v4783, %v4776
    %v5575 = vpack.c.b16 %v4784, %v4777
    %v5576 = vpack.c.b16 %v4785, %v4778
    %v5577 = vpack.c.b16 %v4786, %v4779
    %v5578 = vpack.c.b16 %v4787, %v4780
    %v5579 = vpack.c.b16 %v4788, %v4781
    %v5580 = vpack.c.b16 %v4789, %v4782
    %v5581 = vpack.c.b16 %v4797, %v4790
    %v5582 = vpack.c.b16 %v4798, %v4791
    %v5583 = vpack.c.b16 %v4799, %v4792
    %v5584 = vpack.c.b16 %v4800, %v4793
    %v5585 = vpack.c.b16 %v4801, %v4794
    %v5586 = vpack.c.b16 %v4802, %v4795
    %v5587 = vpack.c.b16 %v4803, %v4796
    %v5588 = vpack.c.b16 %v4811, %v4804
    %v5589 = vpack.c.b16 %v4812, %v4805
    %v5590 = vpack.c.b16 %v4813, %v4806
    %v5591 = vpack.c.b16 %v4814, %v4807
    %v5592 = vpack.c.b16 %v4815, %v4808
    %v5593 = vpack.c.b16 %v4816, %v4809
    %v5594 = vpack.c.b16 %v4817, %v4810
    %v5595 = vpack.c.b16 %v4825, %v4818
    %v5596 = vpack.c.b16 %v4826, %v4819
    %v5597 = vpack.c.b16 %v4827, %v4820
    %v5598 = vpack.c.b16 %v4828, %v4821
    %v5599 = vpack.c.b16 %v4829, %v4822
    %v5600 = vpack.c.b16 %v4830, %v4823
    %v5601 = vpack.c.b16 %v4831, %v4824
    %v5602 = vpack.c.b16 %v4839, %v4832
    %v5603 = vpack.c.b16 %v4840, %v4833
    %v5604 = vpack.c.b16 %v4841, %v4834
    %v5605 = vpack.c.b16 %v4842, %v4835
    %v5606 = vpack.c.b16 %v4843, %v4836
    %v5607 = vpack.c.b16 %v4844, %v4837
    %v5608 = vpack.c.b16 %v4845, %v4838
    %v5609 = vpack.c.b16 %v4853, %v4846
    %v5610 = vpack.c.b16 %v4854, %v4847
    %v5611 = vpack.c.b16 %v4855, %v4848
    %v5612 = vpack.c.b16 %v4856, %v4849
    %v5613 = vpack.c.b16 %v4857, %v4850
    %v5614 = vpack.c.b16 %v4858, %v4851
    %v5615 = vpack.c.b16 %v4859, %v4852
    %v5616 = vpack.c.b16 %v4867, %v4860
    %v5617 = vpack.c.b16 %v4868, %v4861
    %v5618 = vpack.c.b16 %v4869, %v4862
    %v5619 = vpack.c.b16 %v4870, %v4863
    %v5620 = vpack.c.b16 %v4871, %v4864
    %v5621 = vpack.c.b16 %v4872, %v4865
    %v5622 = vpack.c.b16 %v4873, %v4866
    %v5623 = vpack.c.b16 %v4881, %v4874
    %v5624 = vpack.c.b16 %v4882, %v4875
    %v5625 = vpack.c.b16 %v4883, %v4876
    %v5626 = vpack.c.b16 %v4884, %v4877
    %v5627 = vpack.c.b16 %v4885, %v4878
    %v5628 = vpack.c.b16 %v4886, %v4879
    %v5629 = vpack.c.b16 %v4887, %v4880
    %v5630 = vpack.c.b16 %v4895, %v4888
    %v5631 = vpack.c.b16 %v4896, %v4889
    %v5632 = vpack.c.b16 %v4897, %v4890
    %v5633 = vpack.c.b16 %v4898, %v4891
    %v5634 = vpack.c.b16 %v4899, %v4892
    %v5635 = vpack.c.b16 %v4900, %v4893
    %v5636 = vpack.c.b16 %v4901, %v4894
    %v5637 = vpack.c.b16 %v4909, %v4902
    %v5638 = vpack.c.b16 %v4910, %v4903
    %v5639 = vpack.c.b16 %v4911, %v4904
    %v5640 = vpack.c.b16 %v4912, %v4905
    %v5641 = vpack.c.b16 %v4913, %v4906
    %v5642 = vpack.c.b16 %v4914, %v4907
    %v5643 = vpack.c.b16 %v4915, %v4908
    %v5644 = vpack.c.b16 %v4923, %v4916
    %v5645 = vpack.c.b16 %v4924, %v4917
    %v5646 = vpack.c.b16 %v4925, %v4918
    %v5647 = vpack.c.b16 %v4926, %v4919
    %v5648 = vpack.c.b16 %v4927, %v4920
    %v5649 = vpack.c.b16 %v4928, %v4921
    %v5650 = vpack.c.b16 %v4929, %v4922
    %v5651 = vpack.c.b16 %v4937, %v4930
    %v5652 = vpack.c.b16 %v4938, %v4931
    %v5653 = vpack.c.b16 %v4939, %v4932
    %v5654 = vpack.c.b16 %v4940, %v4933
    %v5655 = vpack.c.b16 %v4941, %v4934
    %v5656 = vpack.c.b16 %v4942, %v4935
    %v5657 = vpack.c.b16 %v4943, %v4936
    %v5658 = vpack.c.b16 %v4951, %v4944
    %v5659 = vpack.c.b16 %v4952, %v4945
    %v5660 = vpack.c.b16 %v4953, %v4946
    %v5661 = vpack.c.b16 %v4954, %v4947
    %v5662 = vpack.c.b16 %v4955, %v4948
    %v5663 = vpack.c.b16 %v4956, %v4949
    %v5664 = vpack.c.b16 %v4957, %v4950
    %v5665 = vpack.c.b16 %v4965, %v4958
    %v5666 = vpack.c.b16 %v4966, %v4959
    %v5667 = vpack.c.b16 %v4967, %v4960
    %v5668 = vpack.c.b16 %v4968, %v4961
    %v5669 = vpack.c.b16 %v4969, %v4962
    %v5670 = vpack.c.b16 %v4970, %v4963
    %v5671 = vpack.c.b16 %v4971, %v4964
    %v5672 = vpack.c.b16 %v4979, %v4972
    %v5673 = vpack.c.b16 %v4980, %v4973
    %v5674 = vpack.c.b16 %v4981, %v4974
    %v5675 = vpack.c.b16 %v4982, %v4975
    %v5676 = vpack.c.b16 %v4983, %v4976
    %v5677 = vpack.c.b16 %v4984, %v4977
    %v5678 = vpack.c.b16 %v4985, %v4978
    %v5679 = vpack.c.b16 %v4993, %v4986
    %v5680 = vpack.c.b16 %v4994, %v4987
    %v5681 = vpack.c.b16 %v4995, %v4988
    %v5682 = vpack.c.b16 %v4996, %v4989
    %v5683 = vpack.c.b16 %v4997, %v4990
    %v5684 = vpack.c.b16 %v4998, %v4991
    %v5685 = vpack.c.b16 %v4999, %v4992
    %v5686 = vpack.c.b16 %v5007, %v5000
    %v5687 = vpack.c.b16 %v5008, %v5001
    %v5688 = vpack.c.b16 %v5009, %v5002
    %v5689 = vpack.c.b16 %v5010, %v5003
    %v5690 = vpack.c.b16 %v5011, %v5004
    %v5691 = vpack.c.b16 %v5012, %v5005
    %v5692 = vpack.c.b16 %v5013, %v5006
    %v5693 = vpack.c.b16 %v5021, %v5014
    %v5694 = vpack.c.b16 %v5022, %v5015
    %v5695 = vpack.c.b16 %v5023, %v5016
    %v5696 = vpack.c.b16 %v5024, %v5017
    %v5697 = vpack.c.b16 %v5025, %v5018
    %v5698 = vpack.c.b16 %v5026, %v5019
    %v5699 = vpack.c.b16 %v5027, %v5020
    %v5700 = vpack.c.b16 %v5035, %v5028
    %v5701 = vpack.c.b16 %v5036, %v5029
    %v5702 = vpack.c.b16 %v5037, %v5030
    %v5703 = vpack.c.b16 %v5038, %v5031
    %v5704 = vpack.c.b16 %v5039, %v5032
    %v5705 = vpack.c.b16 %v5040, %v5033
    %v5706 = vpack.c.b16 %v5041, %v5034
    %v5707 = vpack.c.b16 %v5049, %v5042
    %v5708 = vpack.c.b16 %v5050, %v5043
    %v5709 = vpack.c.b16 %v5051, %v5044
    %v5710 = vpack.c.b16 %v5052, %v5045
    %v5711 = vpack.c.b16 %v5053, %v5046
    %v5712 = vpack.c.b16 %v5054, %v5047
    %v5713 = vpack.c.b16 %v5055, %v5048
    %v5714 = vpack.c.b16 %v5063, %v5056
    %v5715 = vpack.c.b16 %v5064, %v5057
    %v5716 = vpack.c.b16 %v5065, %v5058
    %v5717 = vpack.c.b16 %v5066, %v5059
    %v5718 = vpack.c.b16 %v5067, %v5060
    %v5719 = vpack.c.b16 %v5068, %v5061
    %v5720 = vpack.c.b16 %v5069, %v5062
    %v5721 = vpack.c.b16 %v5077, %v5070
    %v5722 = vpack.c.b16 %v5078, %v5071
    %v5723 = vpack.c.b16 %v5079, %v5072
    %v5724 = vpack.c.b16 %v5080, %v5073
    %v5725 = vpack.c.b16 %v5081, %v5074
    %v5726 = vpack.c.b16 %v5082, %v5075
    %v5727 = vpack.c.b16 %v5083, %v5076
    %v5728 = vpack.c.b16 %v5091, %v5084
    %v5729 = vpack.c.b16 %v5092, %v5085
    %v5730 = vpack.c.b16 %v5093, %v5086
    %v5731 = vpack.c.b16 %v5094, %v5087
    %v5732 = vpack.c.b16 %v5095, %v5088
    %v5733 = vpack.c.b16 %v5096, %v5089
    %v5734 = vpack.c.b16 %v5097, %v5090
    %v5735 = vpack.c.b16 %v5105, %v5098
    %v5736 = vpack.c.b16 %v5106, %v5099
    %v5737 = vpack.c.b16 %v5107, %v5100
    %v5738 = vpack.c.b16 %v5108, %v5101
    %v5739 = vpack.c.b16 %v5109, %v5102
    %v5740 = vpack.c.b16 %v5110, %v5103
    %v5741 = vpack.c.b16 %v5111, %v5104
    %v5742 = vpack.c.b16 %v5119, %v5112
    %v5743 = vpack.c.b16 %v5120, %v5113
    %v5744 = vpack.c.b16 %v5121, %v5114
    %v5745 = vpack.c.b16 %v5122, %v5115
    %v5746 = vpack.c.b16 %v5123, %v5116
    %v5747 = vpack.c.b16 %v5124, %v5117
    %v5748 = vpack.c.b16 %v5125, %v5118
    %v5749 = vpack.c.b16 %v5133, %v5126
    %v5750 = vpack.c.b16 %v5134, %v5127
    %v5751 = vpack.c.b16 %v5135, %v5128
    %v5752 = vpack.c.b16 %v5136, %v5129
    %v5753 = vpack.c.b16 %v5137, %v5130
    %v5754 = vpack.c.b16 %v5138, %v5131
    %v5755 = vpack.c.b16 %v5139, %v5132
    %v5756 = vpack.c.b16 %v5147, %v5140
    %v5757 = vpack.c.b16 %v5148, %v5141
    %v5758 = vpack.c.b16 %v5149, %v5142
    %v5759 = vpack.c.b16 %v5150, %v5143
    %v5760 = vpack.c.b16 %v5151, %v5144
    %v5761 = vpack.c.b16 %v5152, %v5145
    %v5762 = vpack.c.b16 %v5153, %v5146
    %v5763 = vpack.c.b16 %v5161, %v5154
    %v5764 = vpack.c.b16 %v5162, %v5155
    %v5765 = vpack.c.b16 %v5163, %v5156
    %v5766 = vpack.c.b16 %v5164, %v5157
    %v5767 = vpack.c.b16 %v5165, %v5158
    %v5768 = vpack.c.b16 %v5166, %v5159
    %v5769 = vpack.c.b16 %v5167, %v5160
    %v5770 = vpack.c.b16 %v5175, %v5168
    %v5771 = vpack.c.b16 %v5176, %v5169
    %v5772 = vpack.c.b16 %v5177, %v5170
    %v5773 = vpack.c.b16 %v5178, %v5171
    %v5774 = vpack.c.b16 %v5179, %v5172
    %v5775 = vpack.c.b16 %v5180, %v5173
    %v5776 = vpack.c.b16 %v5181, %v5174
    %v5777 = vpack.c.b16 %v5189, %v5182
    %v5778 = vpack.c.b16 %v5190, %v5183
    %v5779 = vpack.c.b16 %v5191, %v5184
    %v5780 = vpack.c.b16 %v5192, %v5185
    %v5781 = vpack.c.b16 %v5193, %v5186
    %v5782 = vpack.c.b16 %v5194, %v5187
    %v5783 = vpack.c.b16 %v5195, %v5188
    %v5784 = vpack.c.b16 %v5203, %v5196
    %v5785 = vpack.c.b16 %v5204, %v5197
    %v5786 = vpack.c.b16 %v5205, %v5198
    %v5787 = vpack.c.b16 %v5206, %v5199
    %v5788 = vpack.c.b16 %v5207, %v5200
    %v5789 = vpack.c.b16 %v5208, %v5201
    %v5790 = vpack.c.b16 %v5209, %v5202
    %v5791 = vpack.c.b16 %v5217, %v5210
    %v5792 = vpack.c.b16 %v5218, %v5211
    %v5793 = vpack.c.b16 %v5219, %v5212
    %v5794 = vpack.c.b16 %v5220, %v5213
    %v5795 = vpack.c.b16 %v5221, %v5214
    %v5796 = vpack.c.b16 %v5222, %v5215
    %v5797 = vpack.c.b16 %v5223, %v5216
    %v5798 = vpack.c.b16 %v5231, %v5224
    %v5799 = vpack.c.b16 %v5232, %v5225
    %v5800 = vpack.c.b16 %v5233, %v5226
    %v5801 = vpack.c.b16 %v5234, %v5227
    %v5802 = vpack.c.b16 %v5235, %v5228
    %v5803 = vpack.c.b16 %v5236, %v5229
    %v5804 = vpack.c.b16 %v5237, %v5230
    %v5805 = vpack.c.b16 %v5245, %v5238
    %v5806 = vpack.c.b16 %v5246, %v5239
    %v5807 = vpack.c.b16 %v5247, %v5240
    %v5808 = vpack.c.b16 %v5248, %v5241
    %v5809 = vpack.c.b16 %v5249, %v5242
    %v5810 = vpack.c.b16 %v5250, %v5243
    %v5811 = vpack.c.b16 %v5251, %v5244
    %v5812 = vpack.c.b16 %v5259, %v5252
    %v5813 = vpack.c.b16 %v5260, %v5253
    %v5814 = vpack.c.b16 %v5261, %v5254
    %v5815 = vpack.c.b16 %v5262, %v5255
    %v5816 = vpack.c.b16 %v5263, %v5256
    %v5817 = vpack.c.b16 %v5264, %v5257
    %v5818 = vpack.c.b16 %v5265, %v5258
    %v5819 = vpack.c.b16 %v5273, %v5266
    %v5820 = vpack.c.b16 %v5274, %v5267
    %v5821 = vpack.c.b16 %v5275, %v5268
    %v5822 = vpack.c.b16 %v5276, %v5269
    %v5823 = vpack.c.b16 %v5277, %v5270
    %v5824 = vpack.c.b16 %v5278, %v5271
    %v5825 = vpack.c.b16 %v5279, %v5272
    %v5826 = vpack.c.b16 %v5287, %v5280
    %v5827 = vpack.c.b16 %v5288, %v5281
    %v5828 = vpack.c.b16 %v5289, %v5282
    %v5829 = vpack.c.b16 %v5290, %v5283
    %v5830 = vpack.c.b16 %v5291, %v5284
    %v5831 = vpack.c.b16 %v5292, %v5285
    %v5832 = vpack.c.b16 %v5293, %v5286
    %v5833 = vpack.c.b16 %v5301, %v5294
    %v5834 = vpack.c.b16 %v5302, %v5295
    %v5835 = vpack.c.b16 %v5303, %v5296
    %v5836 = vpack.c.b16 %v5304, %v5297
    %v5837 = vpack.c.b16 %v5305, %v5298
    %v5838 = vpack.c.b16 %v5306, %v5299
    %v5839 = vpack.c.b16 %v5307, %v5300
    %v5840 = vpack.c.b16 %v5315, %v5308
    %v5841 = vpack.c.b16 %v5316, %v5309
    %v5842 = vpack.c.b16 %v5317, %v5310
    %v5843 = vpack.c.b16 %v5318, %v5311
    %v5844 = vpack.c.b16 %v5319, %v5312
    %v5845 = vpack.c.b16 %v5320, %v5313
    %v5846 = vpack.c.b16 %v5321, %v5314
    %v5847 = vpack.c.b16 %v5329, %v5322
    %v5848 = vpack.c.b16 %v5330, %v5323
    %v5849 = vpack.c.b16 %v5331, %v5324
    %v5850 = vpack.c.b16 %v5332, %v5325
    %v5851 = vpack.c.b16 %v5333, %v5326
    %v5852 = vpack.c.b16 %v5334, %v5327
    %v5853 = vpack.c.b16 %v5335, %v5328
    %v5854 = vpack.c.b16 %v5343, %v5336
    %v5855 = vpack.c.b16 %v5344, %v5337
    %v5856 = vpack.c.b16 %v5345, %v5338
    %v5857 = vpack.c.b16 %v5346, %v5339
    %v5858 = vpack.c.b16 %v5347, %v5340
    %v5859 = vpack.c.b16 %v5348, %v5341
    %v5860 = vpack.c.b16 %v5349, %v5342
    %v5861 = vpack.c.b16 %v5357, %v5350
    %v5862 = vpack.c.b16 %v5358, %v5351
    %v5863 = vpack.c.b16 %v5359, %v5352
    %v5864 = vpack.c.b16 %v5360, %v5353
    %v5865 = vpack.c.b16 %v5361, %v5354
    %v5866 = vpack.c.b16 %v5362, %v5355
    %v5867 = vpack.c.b16 %v5363, %v5356
    %v5868 = vpack.c.b16 %v5371, %v5364
    %v5869 = vpack.c.b16 %v5372, %v5365
    %v5870 = vpack.c.b16 %v5373, %v5366
    %v5871 = vpack.c.b16 %v5374, %v5367
    %v5872 = vpack.c.b16 %v5375, %v5368
    %v5873 = vpack.c.b16 %v5376, %v5369
    %v5874 = vpack.c.b16 %v5377, %v5370
    %v5875 = vpack.c.b16 %v5385, %v5378
    %v5876 = vpack.c.b16 %v5386, %v5379
    %v5877 = vpack.c.b16 %v5387, %v5380
    %v5878 = vpack.c.b16 %v5388, %v5381
    %v5879 = vpack.c.b16 %v5389, %v5382
    %v5880 = vpack.c.b16 %v5390, %v5383
    %v5881 = vpack.c.b16 %v5391, %v5384
    %v5882 = vpack.c.b16 %v5399, %v5392
    %v5883 = vpack.c.b16 %v5400, %v5393
    %v5884 = vpack.c.b16 %v5401, %v5394
    %v5885 = vpack.c.b16 %v5402, %v5395
    %v5886 = vpack.c.b16 %v5403, %v5396
    %v5887 = vpack.c.b16 %v5404, %v5397
    %v5888 = vpack.c.b16 %v5405, %v5398
    %v5889 = vpack.c.b16 %v5413, %v5406
    %v5890 = vpack.c.b16 %v5414, %v5407
    %v5891 = vpack.c.b16 %v5415, %v5408
    %v5892 = vpack.c.b16 %v5416, %v5409
    %v5893 = vpack.c.b16 %v5417, %v5410
    %v5894 = vpack.c.b16 %v5418, %v5411
    %v5895 = vpack.c.b16 %v5419, %v5412
    %v5896 = vpack.c.b16 %v5427, %v5420
    %v5897 = vpack.c.b16 %v5428, %v5421
    %v5898 = vpack.c.b16 %v5429, %v5422
    %v5899 = vpack.c.b16 %v5430, %v5423
    %v5900 = vpack.c.b16 %v5431, %v5424
    %v5901 = vpack.c.b16 %v5432, %v5425
    %v5902 = vpack.c.b16 %v5433, %v5426
    %v5903 = vpack.c.b16 %v5441, %v5434
    %v5904 = vpack.c.b16 %v5442, %v5435
    %v5905 = vpack.c.b16 %v5443, %v5436
    %v5906 = vpack.c.b16 %v5444, %v5437
    %v5907 = vpack.c.b16 %v5445, %v5438
    %v5908 = vpack.c.b16 %v5446, %v5439
    %v5909 = vpack.c.b16 %v5447, %v5440
    %v5910 = vpack.c.b16 %v5455, %v5448
    %v5911 = vpack.c.b16 %v5456, %v5449
    %v5912 = vpack.c.b16 %v5457, %v5450
    %v5913 = vpack.c.b16 %v5458, %v5451
    %v5914 = vpack.c.b16 %v5459, %v5452
    %v5915 = vpack.c.b16 %v5460, %v5453
    %v5916 = vpack.c.b16 %v5461, %v5454
    %v5917 = vpack.c.b16 %v5469, %v5462
    %v5918 = vpack.c.b16 %v5470, %v5463
    %v5919 = vpack.c.b16 %v5471, %v5464
    %v5920 = vpack.c.b16 %v5472, %v5465
    %v5921 = vpack.c.b16 %v5473, %v5466
    %v5922 = vpack.c.b16 %v5474, %v5467
    %v5923 = vpack.c.b16 %v5475, %v5468
    %6372 = vmatprep.subr.bf16.mxu0 %v5477
    %6373 = vmatpush1.bf16.msra.mxu0 %v5476
    %6374 = vmatprep.subr.bf16.mxu0 %v5484
    %6375 = vmatpush1.bf16.msra.mxu0 %v5483
    %6376 = vmatprep.subr.bf16.mxu0 %v5491
    %6377 = vmatpush1.bf16.msra.mxu0 %v5490
    %6378 = vmatprep.subr.bf16.mxu0 %v5498
    %6379 = vmatpush1.bf16.msra.mxu0 %v5497
    %6380 = vmatprep.subr.bf16.mxu0 %v5505
    %6381 = vmatpush1.bf16.msra.mxu0 %v5504
    %6382 = vmatprep.subr.bf16.mxu0 %v5512
    %6383 = vmatpush1.bf16.msra.mxu0 %v5511
    %6384 = vmatprep.subr.bf16.mxu0 %v5519
    %6385 = vmatpush1.bf16.msra.mxu0 %v5518
    %6386 = vmatprep.subr.bf16.mxu0 %v5526
    %6387 = vmatpush1.bf16.msra.mxu0 %v5525
    %6388 = vmatprep.subr.bf16.mxu0 %v5533
    %6389 = vmatpush1.bf16.msra.mxu0 %v5532
    %6390 = vmatprep.subr.bf16.mxu0 %v5540
    %6391 = vmatpush1.bf16.msra.mxu0 %v5539
    %6392 = vmatprep.subr.bf16.mxu0 %v5547
    %6393 = vmatpush1.bf16.msra.mxu0 %v5546
    %6394 = vmatprep.subr.bf16.mxu0 %v5554
    %6395 = vmatpush1.bf16.msra.mxu0 %v5553
    %6396 = vmatprep.subr.bf16.mxu0 %v5561
    %6397 = vmatpush1.bf16.msra.mxu0 %v5560
    %6398 = vmatprep.subr.bf16.mxu0 %v5568
    %6399 = vmatpush1.bf16.msra.mxu0 %v5567
    %6400 = vmatprep.subr.bf16.mxu0 %v5575
    %6401 = vmatpush1.bf16.msra.mxu0 %v5574
    %6402 = vmatprep.subr.bf16.mxu0 %v5582
    %6403 = vmatpush1.bf16.msra.mxu0 %v5581
    %6404 = vmatprep.mubr.bf16.mxu0 %v3512
    %6405 = vmatmul.mubr.bf16.gmra.mrb[0].mxu0 %v3511
    %v6406 = vpop.f32.mrb[0].mxu0
    %v6407 = vadd.f32 %v4036, %v6406
    %v6408 = vpop.f32.mrb[0].mxu0
    %v6409 = vadd.f32 %v4040, %v6408
    %v6410 = vpop.f32.mrb[0].mxu0
    %v6411 = vpop.f32.mrb[0].mxu0
    %6412 = vdwg.mxu0
    %6413 = vmatprep.subr.bf16.mxu0 %v5589
    %6414 = vmatpush1.bf16.msra.mxu0 %v5588
    %6415 = vmatprep.subr.bf16.mxu0 %v5596
    %6416 = vmatpush1.bf16.msra.mxu0 %v5595
    %6417 = vmatprep.subr.bf16.mxu0 %v5603
    %6418 = vmatpush1.bf16.msra.mxu0 %v5602
    %6419 = vmatprep.subr.bf16.mxu0 %v5610
    %6420 = vmatpush1.bf16.msra.mxu0 %v5609
    %6421 = vmatprep.subr.bf16.mxu0 %v5617
    %6422 = vmatpush1.bf16.msra.mxu0 %v5616
    %6423 = vmatprep.subr.bf16.mxu0 %v5624
    %6424 = vmatpush1.bf16.msra.mxu0 %v5623
    %6425 = vmatprep.subr.bf16.mxu0 %v5631
    %6426 = vmatpush1.bf16.msra.mxu0 %v5630
    %6427 = vmatprep.subr.bf16.mxu0 %v5638
    %6428 = vmatpush1.bf16.msra.mxu0 %v5637
    %6429 = vmatprep.subr.bf16.mxu0 %v5645
    %6430 = vmatpush1.bf16.msra.mxu0 %v5644
    %6431 = vmatprep.subr.bf16.mxu0 %v5652
    %6432 = vmatpush1.bf16.msra.mxu0 %v5651
    %6433 = vmatprep.subr.bf16.mxu0 %v5659
    %6434 = vmatpush1.bf16.msra.mxu0 %v5658
    %6435 = vmatprep.subr.bf16.mxu0 %v5666
    %6436 = vmatpush1.bf16.msra.mxu0 %v5665
    %6437 = vmatprep.subr.bf16.mxu0 %v5673
    %6438 = vmatpush1.bf16.msra.mxu0 %v5672
    %6439 = vmatprep.subr.bf16.mxu0 %v5680
    %6440 = vmatpush1.bf16.msra.mxu0 %v5679
    %6441 = vmatprep.subr.bf16.mxu0 %v5687
    %6442 = vmatpush1.bf16.msra.mxu0 %v5686
    %6443 = vmatprep.subr.bf16.mxu0 %v5694
    %6444 = vmatpush1.bf16.msra.mxu0 %v5693
    %6445 = vmatprep.mubr.bf16.mxu0 %v3514
    %6446 = vmatmul.mubr.bf16.gmra.mrb[0].mxu0 %v3513
    %v6447 = vpop.f32.mrb[0].mxu0
    %v6448 = vadd.f32 %v6407, %v6447
    %v6449 = vpop.f32.mrb[0].mxu0
    %v6450 = vadd.f32 %v6409, %v6449
    %v6451 = vpop.f32.mrb[0].mxu0
    %v6452 = vpop.f32.mrb[0].mxu0
    %6453 = vdwg.mxu0
    %6454 = vmatprep.subr.bf16.mxu0 %v5701
    %6455 = vmatpush1.bf16.msra.mxu0 %v5700
    %6456 = vmatprep.subr.bf16.mxu0 %v5708
    %6457 = vmatpush1.bf16.msra.mxu0 %v5707
    %6458 = vmatprep.subr.bf16.mxu0 %v5715
    %6459 = vmatpush1.bf16.msra.mxu0 %v5714
    %6460 = vmatprep.subr.bf16.mxu0 %v5722
    %6461 = vmatpush1.bf16.msra.mxu0 %v5721
    %6462 = vmatprep.subr.bf16.mxu0 %v5729
    %6463 = vmatpush1.bf16.msra.mxu0 %v5728
    %6464 = vmatprep.subr.bf16.mxu0 %v5736
    %6465 = vmatpush1.bf16.msra.mxu0 %v5735
    %6466 = vmatprep.subr.bf16.mxu0 %v5743
    %6467 = vmatpush1.bf16.msra.mxu0 %v5742
    %6468 = vmatprep.subr.bf16.mxu0 %v5750
    %6469 = vmatpush1.bf16.msra.mxu0 %v5749
    %6470 = vmatprep.subr.bf16.mxu0 %v5757
    %6471 = vmatpush1.bf16.msra.mxu0 %v5756
    %6472 = vmatprep.subr.bf16.mxu0 %v5764
    %6473 = vmatpush1.bf16.msra.mxu0 %v5763
    %6474 = vmatprep.subr.bf16.mxu0 %v5771
    %6475 = vmatpush1.bf16.msra.mxu0 %v5770
    %6476 = vmatprep.subr.bf16.mxu0 %v5778
    %6477 = vmatpush1.bf16.msra.mxu0 %v5777
    %6478 = vmatprep.subr.bf16.mxu0 %v5785
    %6479 = vmatpush1.bf16.msra.mxu0 %v5784
    %6480 = vmatprep.subr.bf16.mxu0 %v5792
    %6481 = vmatpush1.bf16.msra.mxu0 %v5791
    %6482 = vmatprep.subr.bf16.mxu0 %v5799
    %6483 = vmatpush1.bf16.msra.mxu0 %v5798
    %6484 = vmatprep.subr.bf16.mxu0 %v5806
    %6485 = vmatpush1.bf16.msra.mxu0 %v5805
    %6486 = vmatprep.mubr.bf16.mxu0 %v3516
    %6487 = vmatmul.mubr.bf16.gmra.mrb[0].mxu0 %v3515
    %v6488 = vpop.f32.mrb[0].mxu0
    %v6489 = vadd.f32 %v6448, %v6488
    %v6490 = vpop.f32.mrb[0].mxu0
    %v6491 = vadd.f32 %v6450, %v6490
    %v6492 = vpop.f32.mrb[0].mxu0
    %v6493 = vpop.f32.mrb[0].mxu0
    %6494 = vdwg.mxu0
    %6495 = vmatprep.subr.bf16.mxu0 %v5813
    %6496 = vmatpush1.bf16.msra.mxu0 %v5812
    %6497 = vmatprep.subr.bf16.mxu0 %v5820
    %6498 = vmatpush1.bf16.msra.mxu0 %v5819
    %6499 = vmatprep.subr.bf16.mxu0 %v5827
    %6500 = vmatpush1.bf16.msra.mxu0 %v5826
    %6501 = vmatprep.subr.bf16.mxu0 %v5834
    %6502 = vmatpush1.bf16.msra.mxu0 %v5833
    %6503 = vmatprep.subr.bf16.mxu0 %v5841
    %6504 = vmatpush1.bf16.msra.mxu0 %v5840
    %6505 = vmatprep.subr.bf16.mxu0 %v5848
    %6506 = vmatpush1.bf16.msra.mxu0 %v5847
    %6507 = vmatprep.subr.bf16.mxu0 %v5855
    %6508 = vmatpush1.bf16.msra.mxu0 %v5854
    %6509 = vmatprep.subr.bf16.mxu0 %v5862
    %6510 = vmatpush1.bf16.msra.mxu0 %v5861
    %6511 = vmatprep.subr.bf16.mxu0 %v5869
    %6512 = vmatpush1.bf16.msra.mxu0 %v5868
    %6513 = vmatprep.subr.bf16.mxu0 %v5876
    %6514 = vmatpush1.bf16.msra.mxu0 %v5875
    %6515 = vmatprep.subr.bf16.mxu0 %v5883
    %6516 = vmatpush1.bf16.msra.mxu0 %v5882
    %6517 = vmatprep.subr.bf16.mxu0 %v5890
    %6518 = vmatpush1.bf16.msra.mxu0 %v5889
    %6519 = vmatprep.subr.bf16.mxu0 %v5897
    %6520 = vmatpush1.bf16.msra.mxu0 %v5896
    %6521 = vmatprep.subr.bf16.mxu0 %v5904
    %6522 = vmatpush1.bf16.msra.mxu0 %v5903
    %6523 = vmatprep.subr.bf16.mxu0 %v5911
    %6524 = vmatpush1.bf16.msra.mxu0 %v5910
    %6525 = vmatprep.subr.bf16.mxu0 %v5918
    %6526 = vmatpush1.bf16.msra.mxu0 %v5917
    %6527 = vmatprep.mubr.bf16.mxu0 %v3518
    %6528 = vmatmul.mubr.bf16.gmra.mrb[0].mxu0 %v3517
    %v6529 = vpop.f32.mrb[0].mxu0
    %v6530 = vadd.f32 %v6489, %v6529
    %v6531 = vpop.f32.mrb[0].mxu0
    %v6532 = vadd.f32 %v6491, %v6531
    %v6533 = vpop.f32.mrb[0].mxu0
    %v6534 = vpop.f32.mrb[0].mxu0
    %6535 = vdwg.mxu0
    %6536 = vmatprep.subr.bf16.mxu0 %v5479
    %6537 = vmatpush1.bf16.msra.mxu0 %v5478
    %6538 = vmatprep.subr.bf16.mxu0 %v5486
    %6539 = vmatpush1.bf16.msra.mxu0 %v5485
    %6540 = vmatprep.subr.bf16.mxu0 %v5493
    %6541 = vmatpush1.bf16.msra.mxu0 %v5492
    %6542 = vmatprep.subr.bf16.mxu0 %v5500
    %6543 = vmatpush1.bf16.msra.mxu0 %v5499
    %6544 = vmatprep.subr.bf16.mxu0 %v5507
    %6545 = vmatpush1.bf16.msra.mxu0 %v5506
    %6546 = vmatprep.subr.bf16.mxu0 %v5514
    %6547 = vmatpush1.bf16.msra.mxu0 %v5513
    %6548 = vmatprep.subr.bf16.mxu0 %v5521
    %6549 = vmatpush1.bf16.msra.mxu0 %v5520
    %6550 = vmatprep.subr.bf16.mxu0 %v5528
    %6551 = vmatpush1.bf16.msra.mxu0 %v5527
    %6552 = vmatprep.subr.bf16.mxu0 %v5535
    %6553 = vmatpush1.bf16.msra.mxu0 %v5534
    %6554 = vmatprep.subr.bf16.mxu0 %v5542
    %6555 = vmatpush1.bf16.msra.mxu0 %v5541
    %6556 = vmatprep.subr.bf16.mxu0 %v5549
    %6557 = vmatpush1.bf16.msra.mxu0 %v5548
    %6558 = vmatprep.subr.bf16.mxu0 %v5556
    %6559 = vmatpush1.bf16.msra.mxu0 %v5555
    %6560 = vmatprep.subr.bf16.mxu0 %v5563
    %6561 = vmatpush1.bf16.msra.mxu0 %v5562
    %6562 = vmatprep.subr.bf16.mxu0 %v5570
    %6563 = vmatpush1.bf16.msra.mxu0 %v5569
    %6564 = vmatprep.subr.bf16.mxu0 %v5577
    %6565 = vmatpush1.bf16.msra.mxu0 %v5576
    %6566 = vmatprep.subr.bf16.mxu0 %v5584
    %6567 = vmatpush1.bf16.msra.mxu0 %v5583
    %6568 = vmatprep.mubr.bf16.mxu0 %v3512
    %6569 = vmatmul.mubr.bf16.gmra.mrb[0].mxu0 %v3511
    %v6570 = vpop.f32.mrb[0].mxu0
    %v6571 = vadd.f32 %v4044, %v6570
    %v6572 = vpop.f32.mrb[0].mxu0
    %v6573 = vadd.f32 %v4048, %v6572
    %v6574 = vpop.f32.mrb[0].mxu0
    %v6575 = vpop.f32.mrb[0].mxu0
    %6576 = vdwg.mxu0
    %6577 = vmatprep.subr.bf16.mxu0 %v5591
    %6578 = vmatpush1.bf16.msra.mxu0 %v5590
    %6579 = vmatprep.subr.bf16.mxu0 %v5598
    %6580 = vmatpush1.bf16.msra.mxu0 %v5597
    %6581 = vmatprep.subr.bf16.mxu0 %v5605
    %6582 = vmatpush1.bf16.msra.mxu0 %v5604
    %6583 = vmatprep.subr.bf16.mxu0 %v5612
    %6584 = vmatpush1.bf16.msra.mxu0 %v5611
    %6585 = vmatprep.subr.bf16.mxu0 %v5619
    %6586 = vmatpush1.bf16.msra.mxu0 %v5618
    %6587 = vmatprep.subr.bf16.mxu0 %v5626
    %6588 = vmatpush1.bf16.msra.mxu0 %v5625
    %6589 = vmatprep.subr.bf16.mxu0 %v5633
    %6590 = vmatpush1.bf16.msra.mxu0 %v5632
    %6591 = vmatprep.subr.bf16.mxu0 %v5640
    %6592 = vmatpush1.bf16.msra.mxu0 %v5639
    %6593 = vmatprep.subr.bf16.mxu0 %v5647
    %6594 = vmatpush1.bf16.msra.mxu0 %v5646
    %6595 = vmatprep.subr.bf16.mxu0 %v5654
    %6596 = vmatpush1.bf16.msra.mxu0 %v5653
    %6597 = vmatprep.subr.bf16.mxu0 %v5661
    %6598 = vmatpush1.bf16.msra.mxu0 %v5660
    %6599 = vmatprep.subr.bf16.mxu0 %v5668
    %6600 = vmatpush1.bf16.msra.mxu0 %v5667
    %6601 = vmatprep.subr.bf16.mxu0 %v5675
    %6602 = vmatpush1.bf16.msra.mxu0 %v5674
    %6603 = vmatprep.subr.bf16.mxu0 %v5682
    %6604 = vmatpush1.bf16.msra.mxu0 %v5681
    %6605 = vmatprep.subr.bf16.mxu0 %v5689
    %6606 = vmatpush1.bf16.msra.mxu0 %v5688
    %6607 = vmatprep.subr.bf16.mxu0 %v5696
    %6608 = vmatpush1.bf16.msra.mxu0 %v5695
    %6609 = vmatprep.mubr.bf16.mxu0 %v3514
    %6610 = vmatmul.mubr.bf16.gmra.mrb[0].mxu0 %v3513
    %v6611 = vpop.f32.mrb[0].mxu0
    %v6612 = vadd.f32 %v6571, %v6611
    %v6613 = vpop.f32.mrb[0].mxu0
    %v6614 = vadd.f32 %v6573, %v6613
    %v6615 = vpop.f32.mrb[0].mxu0
    %v6616 = vpop.f32.mrb[0].mxu0
    %6617 = vdwg.mxu0
    %6618 = vmatprep.subr.bf16.mxu0 %v5703
    %6619 = vmatpush1.bf16.msra.mxu0 %v5702
    %6620 = vmatprep.subr.bf16.mxu0 %v5710
    %6621 = vmatpush1.bf16.msra.mxu0 %v5709
    %6622 = vmatprep.subr.bf16.mxu0 %v5717
    %6623 = vmatpush1.bf16.msra.mxu0 %v5716
    %6624 = vmatprep.subr.bf16.mxu0 %v5724
    %6625 = vmatpush1.bf16.msra.mxu0 %v5723
    %6626 = vmatprep.subr.bf16.mxu0 %v5731
    %6627 = vmatpush1.bf16.msra.mxu0 %v5730
    %6628 = vmatprep.subr.bf16.mxu0 %v5738
    %6629 = vmatpush1.bf16.msra.mxu0 %v5737
    %6630 = vmatprep.subr.bf16.mxu0 %v5745
    %6631 = vmatpush1.bf16.msra.mxu0 %v5744
    %6632 = vmatprep.subr.bf16.mxu0 %v5752
    %6633 = vmatpush1.bf16.msra.mxu0 %v5751
    %6634 = vmatprep.subr.bf16.mxu0 %v5759
    %6635 = vmatpush1.bf16.msra.mxu0 %v5758
    %6636 = vmatprep.subr.bf16.mxu0 %v5766
    %6637 = vmatpush1.bf16.msra.mxu0 %v5765
    %6638 = vmatprep.subr.bf16.mxu0 %v5773
    %6639 = vmatpush1.bf16.msra.mxu0 %v5772
    %6640 = vmatprep.subr.bf16.mxu0 %v5780
    %6641 = vmatpush1.bf16.msra.mxu0 %v5779
    %6642 = vmatprep.subr.bf16.mxu0 %v5787
    %6643 = vmatpush1.bf16.msra.mxu0 %v5786
    %6644 = vmatprep.subr.bf16.mxu0 %v5794
    %6645 = vmatpush1.bf16.msra.mxu0 %v5793
    %6646 = vmatprep.subr.bf16.mxu0 %v5801
    %6647 = vmatpush1.bf16.msra.mxu0 %v5800
    %6648 = vmatprep.subr.bf16.mxu0 %v5808
    %6649 = vmatpush1.bf16.msra.mxu0 %v5807
    %6650 = vmatprep.mubr.bf16.mxu0 %v3516
    %6651 = vmatmul.mubr.bf16.gmra.mrb[0].mxu0 %v3515
    %v6652 = vpop.f32.mrb[0].mxu0
    %v6653 = vadd.f32 %v6612, %v6652
    %v6654 = vpop.f32.mrb[0].mxu0
    %v6655 = vadd.f32 %v6614, %v6654
    %v6656 = vpop.f32.mrb[0].mxu0
    %v6657 = vpop.f32.mrb[0].mxu0
    %6658 = vdwg.mxu0
    %6659 = vmatprep.subr.bf16.mxu0 %v5815
    %6660 = vmatpush1.bf16.msra.mxu0 %v5814
    %6661 = vmatprep.subr.bf16.mxu0 %v5822
    %6662 = vmatpush1.bf16.msra.mxu0 %v5821
    %6663 = vmatprep.subr.bf16.mxu0 %v5829
    %6664 = vmatpush1.bf16.msra.mxu0 %v5828
    %6665 = vmatprep.subr.bf16.mxu0 %v5836
    %6666 = vmatpush1.bf16.msra.mxu0 %v5835
    %6667 = vmatprep.subr.bf16.mxu0 %v5843
    %6668 = vmatpush1.bf16.msra.mxu0 %v5842
    %6669 = vmatprep.subr.bf16.mxu0 %v5850
    %6670 = vmatpush1.bf16.msra.mxu0 %v5849
    %6671 = vmatprep.subr.bf16.mxu0 %v5857
    %6672 = vmatpush1.bf16.msra.mxu0 %v5856
    %6673 = vmatprep.subr.bf16.mxu0 %v5864
    %6674 = vmatpush1.bf16.msra.mxu0 %v5863
    %6675 = vmatprep.subr.bf16.mxu0 %v5871
    %6676 = vmatpush1.bf16.msra.mxu0 %v5870
    %6677 = vmatprep.subr.bf16.mxu0 %v5878
    %6678 = vmatpush1.bf16.msra.mxu0 %v5877
    %6679 = vmatprep.subr.bf16.mxu0 %v5885
    %6680 = vmatpush1.bf16.msra.mxu0 %v5884
    %6681 = vmatprep.subr.bf16.mxu0 %v5892
    %6682 = vmatpush1.bf16.msra.mxu0 %v5891
    %6683 = vmatprep.subr.bf16.mxu0 %v5899
    %6684 = vmatpush1.bf16.msra.mxu0 %v5898
    %6685 = vmatprep.subr.bf16.mxu0 %v5906
    %6686 = vmatpush1.bf16.msra.mxu0 %v5905
    %6687 = vmatprep.subr.bf16.mxu0 %v5913
    %6688 = vmatpush1.bf16.msra.mxu0 %v5912
    %6689 = vmatprep.subr.bf16.mxu0 %v5920
    %6690 = vmatpush1.bf16.msra.mxu0 %v5919
    %6691 = vmatprep.mubr.bf16.mxu0 %v3518
    %6692 = vmatmul.mubr.bf16.gmra.mrb[0].mxu0 %v3517
    %v6693 = vpop.f32.mrb[0].mxu0
    %v6694 = vadd.f32 %v6653, %v6693
    %v6695 = vpop.f32.mrb[0].mxu0
    %v6696 = vadd.f32 %v6655, %v6695
    %v6697 = vpop.f32.mrb[0].mxu0
    %v6698 = vpop.f32.mrb[0].mxu0
    %6699 = vdwg.mxu0
    %6700 = vmatprep.subr.bf16.mxu0 %v5481
    %6701 = vmatpush1.bf16.msra.mxu0 %v5480
    %6702 = vmatprep.subr.bf16.mxu0 %v5488
    %6703 = vmatpush1.bf16.msra.mxu0 %v5487
    %6704 = vmatprep.subr.bf16.mxu0 %v5495
    %6705 = vmatpush1.bf16.msra.mxu0 %v5494
    %6706 = vmatprep.subr.bf16.mxu0 %v5502
    %6707 = vmatpush1.bf16.msra.mxu0 %v5501
    %6708 = vmatprep.subr.bf16.mxu0 %v5509
    %6709 = vmatpush1.bf16.msra.mxu0 %v5508
    %6710 = vmatprep.subr.bf16.mxu0 %v5516
    %6711 = vmatpush1.bf16.msra.mxu0 %v5515
    %6712 = vmatprep.subr.bf16.mxu0 %v5523
    %6713 = vmatpush1.bf16.msra.mxu0 %v5522
    %6714 = vmatprep.subr.bf16.mxu0 %v5530
    %6715 = vmatpush1.bf16.msra.mxu0 %v5529
    %6716 = vmatprep.subr.bf16.mxu0 %v5537
    %6717 = vmatpush1.bf16.msra.mxu0 %v5536
    %6718 = vmatprep.subr.bf16.mxu0 %v5544
    %6719 = vmatpush1.bf16.msra.mxu0 %v5543
    %6720 = vmatprep.subr.bf16.mxu0 %v5551
    %6721 = vmatpush1.bf16.msra.mxu0 %v5550
    %6722 = vmatprep.subr.bf16.mxu0 %v5558
    %6723 = vmatpush1.bf16.msra.mxu0 %v5557
    %6724 = vmatprep.subr.bf16.mxu0 %v5565
    %6725 = vmatpush1.bf16.msra.mxu0 %v5564
    %6726 = vmatprep.subr.bf16.mxu0 %v5572
    %6727 = vmatpush1.bf16.msra.mxu0 %v5571
    %6728 = vmatprep.subr.bf16.mxu0 %v5579
    %6729 = vmatpush1.bf16.msra.mxu0 %v5578
    %6730 = vmatprep.subr.bf16.mxu0 %v5586
    %6731 = vmatpush1.bf16.msra.mxu0 %v5585
    %6732 = vmatprep.mubr.bf16.mxu0 %v3512
    %6733 = vmatmul.mubr.bf16.gmra.mrb[0].mxu0 %v3511
    %v6734 = vpop.f32.mrb[0].mxu0
    %v6735 = vadd.f32 %v4052, %v6734
    %v6736 = vpop.f32.mrb[0].mxu0
    %v6737 = vadd.f32 %v4056, %v6736
    %v6738 = vpop.f32.mrb[0].mxu0
    %v6739 = vpop.f32.mrb[0].mxu0
    %6740 = vdwg.mxu0
    %6741 = vmatprep.subr.bf16.mxu0 %v5593
    %6742 = vmatpush1.bf16.msra.mxu0 %v5592
    %6743 = vmatprep.subr.bf16.mxu0 %v5600
    %6744 = vmatpush1.bf16.msra.mxu0 %v5599
    %6745 = vmatprep.subr.bf16.mxu0 %v5607
    %6746 = vmatpush1.bf16.msra.mxu0 %v5606
    %6747 = vmatprep.subr.bf16.mxu0 %v5614
    %6748 = vmatpush1.bf16.msra.mxu0 %v5613
    %6749 = vmatprep.subr.bf16.mxu0 %v5621
    %6750 = vmatpush1.bf16.msra.mxu0 %v5620
    %6751 = vmatprep.subr.bf16.mxu0 %v5628
    %6752 = vmatpush1.bf16.msra.mxu0 %v5627
    %6753 = vmatprep.subr.bf16.mxu0 %v5635
    %6754 = vmatpush1.bf16.msra.mxu0 %v5634
    %6755 = vmatprep.subr.bf16.mxu0 %v5642
    %6756 = vmatpush1.bf16.msra.mxu0 %v5641
    %6757 = vmatprep.subr.bf16.mxu0 %v5649
    %6758 = vmatpush1.bf16.msra.mxu0 %v5648
    %6759 = vmatprep.subr.bf16.mxu0 %v5656
    %6760 = vmatpush1.bf16.msra.mxu0 %v5655
    %6761 = vmatprep.subr.bf16.mxu0 %v5663
    %6762 = vmatpush1.bf16.msra.mxu0 %v5662
    %6763 = vmatprep.subr.bf16.mxu0 %v5670
    %6764 = vmatpush1.bf16.msra.mxu0 %v5669
    %6765 = vmatprep.subr.bf16.mxu0 %v5677
    %6766 = vmatpush1.bf16.msra.mxu0 %v5676
    %6767 = vmatprep.subr.bf16.mxu0 %v5684
    %6768 = vmatpush1.bf16.msra.mxu0 %v5683
    %6769 = vmatprep.subr.bf16.mxu0 %v5691
    %6770 = vmatpush1.bf16.msra.mxu0 %v5690
    %6771 = vmatprep.subr.bf16.mxu0 %v5698
    %6772 = vmatpush1.bf16.msra.mxu0 %v5697
    %6773 = vmatprep.mubr.bf16.mxu0 %v3514
    %6774 = vmatmul.mubr.bf16.gmra.mrb[0].mxu0 %v3513
    %v6775 = vpop.f32.mrb[0].mxu0
    %v6776 = vadd.f32 %v6735, %v6775
    %v6777 = vpop.f32.mrb[0].mxu0
    %v6778 = vadd.f32 %v6737, %v6777
    %v6779 = vpop.f32.mrb[0].mxu0
    %v6780 = vpop.f32.mrb[0].mxu0
    %6781 = vdwg.mxu0
    %6782 = vmatprep.subr.bf16.mxu0 %v5705
    %6783 = vmatpush1.bf16.msra.mxu0 %v5704
    %6784 = vmatprep.subr.bf16.mxu0 %v5712
    %6785 = vmatpush1.bf16.msra.mxu0 %v5711
    %6786 = vmatprep.subr.bf16.mxu0 %v5719
    %6787 = vmatpush1.bf16.msra.mxu0 %v5718
    %6788 = vmatprep.subr.bf16.mxu0 %v5726
    %6789 = vmatpush1.bf16.msra.mxu0 %v5725
    %6790 = vmatprep.subr.bf16.mxu0 %v5733
    %6791 = vmatpush1.bf16.msra.mxu0 %v5732
    %6792 = vmatprep.subr.bf16.mxu0 %v5740
    %6793 = vmatpush1.bf16.msra.mxu0 %v5739
    %6794 = vmatprep.subr.bf16.mxu0 %v5747
    %6795 = vmatpush1.bf16.msra.mxu0 %v5746
    %6796 = vmatprep.subr.bf16.mxu0 %v5754
    %6797 = vmatpush1.bf16.msra.mxu0 %v5753
    %6798 = vmatprep.subr.bf16.mxu0 %v5761
    %6799 = vmatpush1.bf16.msra.mxu0 %v5760
    %6800 = vmatprep.subr.bf16.mxu0 %v5768
    %6801 = vmatpush1.bf16.msra.mxu0 %v5767
    %6802 = vmatprep.subr.bf16.mxu0 %v5775
    %6803 = vmatpush1.bf16.msra.mxu0 %v5774
    %6804 = vmatprep.subr.bf16.mxu0 %v5782
    %6805 = vmatpush1.bf16.msra.mxu0 %v5781
    %6806 = vmatprep.subr.bf16.mxu0 %v5789
    %6807 = vmatpush1.bf16.msra.mxu0 %v5788
    %6808 = vmatprep.subr.bf16.mxu0 %v5796
    %6809 = vmatpush1.bf16.msra.mxu0 %v5795
    %6810 = vmatprep.subr.bf16.mxu0 %v5803
    %6811 = vmatpush1.bf16.msra.mxu0 %v5802
    %6812 = vmatprep.subr.bf16.mxu0 %v5810
    %6813 = vmatpush1.bf16.msra.mxu0 %v5809
    %6814 = vmatprep.mubr.bf16.mxu0 %v3516
    %6815 = vmatmul.mubr.bf16.gmra.mrb[0].mxu0 %v3515
    %v6816 = vpop.f32.mrb[0].mxu0
    %v6817 = vadd.f32 %v6776, %v6816
    %v6818 = vpop.f32.mrb[0].mxu0
    %v6819 = vadd.f32 %v6778, %v6818
    %v6820 = vpop.f32.mrb[0].mxu0
    %v6821 = vpop.f32.mrb[0].mxu0
    %6822 = vdwg.mxu0
    %6823 = vmatprep.subr.bf16.mxu0 %v5817
    %6824 = vmatpush1.bf16.msra.mxu0 %v5816
    %6825 = vmatprep.subr.bf16.mxu0 %v5824
    %6826 = vmatpush1.bf16.msra.mxu0 %v5823
    %6827 = vmatprep.subr.bf16.mxu0 %v5831
    %6828 = vmatpush1.bf16.msra.mxu0 %v5830
    %6829 = vmatprep.subr.bf16.mxu0 %v5838
    %6830 = vmatpush1.bf16.msra.mxu0 %v5837
    %6831 = vmatprep.subr.bf16.mxu0 %v5845
    %6832 = vmatpush1.bf16.msra.mxu0 %v5844
    %6833 = vmatprep.subr.bf16.mxu0 %v5852
    %6834 = vmatpush1.bf16.msra.mxu0 %v5851
    %6835 = vmatprep.subr.bf16.mxu0 %v5859
    %6836 = vmatpush1.bf16.msra.mxu0 %v5858
    %6837 = vmatprep.subr.bf16.mxu0 %v5866
    %6838 = vmatpush1.bf16.msra.mxu0 %v5865
    %6839 = vmatprep.subr.bf16.mxu0 %v5873
    %6840 = vmatpush1.bf16.msra.mxu0 %v5872
    %6841 = vmatprep.subr.bf16.mxu0 %v5880
    %6842 = vmatpush1.bf16.msra.mxu0 %v5879
    %6843 = vmatprep.subr.bf16.mxu0 %v5887
    %6844 = vmatpush1.bf16.msra.mxu0 %v5886
    %6845 = vmatprep.subr.bf16.mxu0 %v5894
    %6846 = vmatpush1.bf16.msra.mxu0 %v5893
    %6847 = vmatprep.subr.bf16.mxu0 %v5901
    %6848 = vmatpush1.bf16.msra.mxu0 %v5900
    %6849 = vmatprep.subr.bf16.mxu0 %v5908
    %6850 = vmatpush1.bf16.msra.mxu0 %v5907
    %6851 = vmatprep.subr.bf16.mxu0 %v5915
    %6852 = vmatpush1.bf16.msra.mxu0 %v5914
    %6853 = vmatprep.subr.bf16.mxu0 %v5922
    %6854 = vmatpush1.bf16.msra.mxu0 %v5921
    %6855 = vmatprep.mubr.bf16.mxu0 %v3518
    %6856 = vmatmul.mubr.bf16.gmra.mrb[0].mxu0 %v3517
    %v6857 = vpop.f32.mrb[0].mxu0
    %v6858 = vadd.f32 %v6817, %v6857
    %v6859 = vpop.f32.mrb[0].mxu0
    %v6860 = vadd.f32 %v6819, %v6859
    %v6861 = vpop.f32.mrb[0].mxu0
    %v6862 = vpop.f32.mrb[0].mxu0
    %6863 = vdwg.mxu0
    %6864 = vmatprep.subr.bf16.mxu0 0
    %6865 = vmatpush1.bf16.msra.mxu0 %v5482
    %6866 = vmatprep.subr.bf16.mxu0 0
    %6867 = vmatpush1.bf16.msra.mxu0 %v5489
    %6868 = vmatprep.subr.bf16.mxu0 0
    %6869 = vmatpush1.bf16.msra.mxu0 %v5496
    %6870 = vmatprep.subr.bf16.mxu0 0
    %6871 = vmatpush1.bf16.msra.mxu0 %v5503
    %6872 = vmatprep.subr.bf16.mxu0 0
    %6873 = vmatpush1.bf16.msra.mxu0 %v5510
    %6874 = vmatprep.subr.bf16.mxu0 0
    %6875 = vmatpush1.bf16.msra.mxu0 %v5517
    %6876 = vmatprep.subr.bf16.mxu0 0
    %6877 = vmatpush1.bf16.msra.mxu0 %v5524
    %6878 = vmatprep.subr.bf16.mxu0 0
    %6879 = vmatpush1.bf16.msra.mxu0 %v5531
    %6880 = vmatprep.subr.bf16.mxu0 0
    %6881 = vmatpush1.bf16.msra.mxu0 %v5538
    %6882 = vmatprep.subr.bf16.mxu0 0
    %6883 = vmatpush1.bf16.msra.mxu0 %v5545
    %6884 = vmatprep.subr.bf16.mxu0 0
    %6885 = vmatpush1.bf16.msra.mxu0 %v5552
    %6886 = vmatprep.subr.bf16.mxu0 0
    %6887 = vmatpush1.bf16.msra.mxu0 %v5559
    %6888 = vmatprep.subr.bf16.mxu0 0
    %6889 = vmatpush1.bf16.msra.mxu0 %v5566
    %6890 = vmatprep.subr.bf16.mxu0 0
    %6891 = vmatpush1.bf16.msra.mxu0 %v5573
    %6892 = vmatprep.subr.bf16.mxu0 0
    %6893 = vmatpush1.bf16.msra.mxu0 %v5580
    %6894 = vmatprep.subr.bf16.mxu0 0
    %6895 = vmatpush1.bf16.msra.mxu0 %v5587
    %6896 = vmatprep.mubr.bf16.mxu0 %v3512
    %6897 = vmatmul.mubr.bf16.gmra.mrb[0].mxu0 %v3511
    %v6898 = vpop.f32.mrb[0].mxu0
    %v6899 = vadd.f32 %v4060, %v6898
    %v6900 = vpop.f32.mrb[0].mxu0
    %v6901 = vpop.f32.mrb[0].mxu0
    %v6902 = vpop.f32.mrb[0].mxu0
    %6903 = vdwg.mxu0
    %6904 = vmatprep.subr.bf16.mxu0 0
    %6905 = vmatpush1.bf16.msra.mxu0 %v5594
    %6906 = vmatprep.subr.bf16.mxu0 0
    %6907 = vmatpush1.bf16.msra.mxu0 %v5601
    %6908 = vmatprep.subr.bf16.mxu0 0
    %6909 = vmatpush1.bf16.msra.mxu0 %v5608
    %6910 = vmatprep.subr.bf16.mxu0 0
    %6911 = vmatpush1.bf16.msra.mxu0 %v5615
    %6912 = vmatprep.subr.bf16.mxu0 0
    %6913 = vmatpush1.bf16.msra.mxu0 %v5622
    %6914 = vmatprep.subr.bf16.mxu0 0
    %6915 = vmatpush1.bf16.msra.mxu0 %v5629
    %6916 = vmatprep.subr.bf16.mxu0 0
    %6917 = vmatpush1.bf16.msra.mxu0 %v5636
    %6918 = vmatprep.subr.bf16.mxu0 0
    %6919 = vmatpush1.bf16.msra.mxu0 %v5643
    %6920 = vmatprep.subr.bf16.mxu0 0
    %6921 = vmatpush1.bf16.msra.mxu0 %v5650
    %6922 = vmatprep.subr.bf16.mxu0 0
    %6923 = vmatpush1.bf16.msra.mxu0 %v5657
    %6924 = vmatprep.subr.bf16.mxu0 0
    %6925 = vmatpush1.bf16.msra.mxu0 %v5664
    %6926 = vmatprep.subr.bf16.mxu0 0
    %6927 = vmatpush1.bf16.msra.mxu0 %v5671
    %6928 = vmatprep.subr.bf16.mxu0 0
    %6929 = vmatpush1.bf16.msra.mxu0 %v5678
    %6930 = vmatprep.subr.bf16.mxu0 0
    %6931 = vmatpush1.bf16.msra.mxu0 %v5685
    %6932 = vmatprep.subr.bf16.mxu0 0
    %6933 = vmatpush1.bf16.msra.mxu0 %v5692
    %6934 = vmatprep.subr.bf16.mxu0 0
    %6935 = vmatpush1.bf16.msra.mxu0 %v5699
    %6936 = vmatprep.mubr.bf16.mxu0 %v3514
    %6937 = vmatmul.mubr.bf16.gmra.mrb[0].mxu0 %v3513
    %v6938 = vpop.f32.mrb[0].mxu0
    %v6939 = vadd.f32 %v6899, %v6938
    %v6940 = vpop.f32.mrb[0].mxu0
    %v6941 = vpop.f32.mrb[0].mxu0
    %v6942 = vpop.f32.mrb[0].mxu0
    %6943 = vdwg.mxu0
    %6944 = vmatprep.subr.bf16.mxu0 0
    %6945 = vmatpush1.bf16.msra.mxu0 %v5706
    %6946 = vmatprep.subr.bf16.mxu0 0
    %6947 = vmatpush1.bf16.msra.mxu0 %v5713
    %6948 = vmatprep.subr.bf16.mxu0 0
    %6949 = vmatpush1.bf16.msra.mxu0 %v5720
    %6950 = vmatprep.subr.bf16.mxu0 0
    %6951 = vmatpush1.bf16.msra.mxu0 %v5727
    %6952 = vmatprep.subr.bf16.mxu0 0
    %6953 = vmatpush1.bf16.msra.mxu0 %v5734
    %6954 = vmatprep.subr.bf16.mxu0 0
    %6955 = vmatpush1.bf16.msra.mxu0 %v5741
    %6956 = vmatprep.subr.bf16.mxu0 0
    %6957 = vmatpush1.bf16.msra.mxu0 %v5748
    %6958 = vmatprep.subr.bf16.mxu0 0
    %6959 = vmatpush1.bf16.msra.mxu0 %v5755
    %6960 = vmatprep.subr.bf16.mxu0 0
    %6961 = vmatpush1.bf16.msra.mxu0 %v5762
    %6962 = vmatprep.subr.bf16.mxu0 0
    %6963 = vmatpush1.bf16.msra.mxu0 %v5769
    %6964 = vmatprep.subr.bf16.mxu0 0
    %6965 = vmatpush1.bf16.msra.mxu0 %v5776
    %6966 = vmatprep.subr.bf16.mxu0 0
    %6967 = vmatpush1.bf16.msra.mxu0 %v5783
    %6968 = vmatprep.subr.bf16.mxu0 0
    %6969 = vmatpush1.bf16.msra.mxu0 %v5790
    %6970 = vmatprep.subr.bf16.mxu0 0
    %6971 = vmatpush1.bf16.msra.mxu0 %v5797
    %6972 = vmatprep.subr.bf16.mxu0 0
    %6973 = vmatpush1.bf16.msra.mxu0 %v5804
    %6974 = vmatprep.subr.bf16.mxu0 0
    %6975 = vmatpush1.bf16.msra.mxu0 %v5811
    %6976 = vmatprep.mubr.bf16.mxu0 %v3516
    %6977 = vmatmul.mubr.bf16.gmra.mrb[0].mxu0 %v3515
    %v6978 = vpop.f32.mrb[0].mxu0
    %v6979 = vadd.f32 %v6939, %v6978
    %v6980 = vpop.f32.mrb[0].mxu0
    %v6981 = vpop.f32.mrb[0].mxu0
    %v6982 = vpop.f32.mrb[0].mxu0
    %6983 = vdwg.mxu0
    %6984 = vmatprep.subr.bf16.mxu0 0
    %6985 = vmatpush1.bf16.msra.mxu0 %v5818
    %6986 = vmatprep.subr.bf16.mxu0 0
    %6987 = vmatpush1.bf16.msra.mxu0 %v5825
    %6988 = vmatprep.subr.bf16.mxu0 0
    %6989 = vmatpush1.bf16.msra.mxu0 %v5832
    %6990 = vmatprep.subr.bf16.mxu0 0
    %6991 = vmatpush1.bf16.msra.mxu0 %v5839
    %6992 = vmatprep.subr.bf16.mxu0 0
    %6993 = vmatpush1.bf16.msra.mxu0 %v5846
    %6994 = vmatprep.subr.bf16.mxu0 0
    %6995 = vmatpush1.bf16.msra.mxu0 %v5853
    %6996 = vmatprep.subr.bf16.mxu0 0
    %6997 = vmatpush1.bf16.msra.mxu0 %v5860
    %6998 = vmatprep.subr.bf16.mxu0 0
    %6999 = vmatpush1.bf16.msra.mxu0 %v5867
    %7000 = vmatprep.subr.bf16.mxu0 0
    %7001 = vmatpush1.bf16.msra.mxu0 %v5874
    %7002 = vmatprep.subr.bf16.mxu0 0
    %7003 = vmatpush1.bf16.msra.mxu0 %v5881
    %7004 = vmatprep.subr.bf16.mxu0 0
    %7005 = vmatpush1.bf16.msra.mxu0 %v5888
    %7006 = vmatprep.subr.bf16.mxu0 0
    %7007 = vmatpush1.bf16.msra.mxu0 %v5895
    %7008 = vmatprep.subr.bf16.mxu0 0
    %7009 = vmatpush1.bf16.msra.mxu0 %v5902
    %7010 = vmatprep.subr.bf16.mxu0 0
    %7011 = vmatpush1.bf16.msra.mxu0 %v5909
    %7012 = vmatprep.subr.bf16.mxu0 0
    %7013 = vmatpush1.bf16.msra.mxu0 %v5916
    %7014 = vmatprep.subr.bf16.mxu0 0
    %7015 = vmatpush1.bf16.msra.mxu0 %v5923
    %7016 = vmatprep.mubr.bf16.mxu0 %v3518
    %7017 = vmatmul.mubr.bf16.gmra.mrb[0].mxu0 %v3517
    %v7018 = vpop.f32.mrb[0].mxu0
    %v7019 = vadd.f32 %v6979, %v7018
    %v7020 = vpop.f32.mrb[0].mxu0
    %v7021 = vpop.f32.mrb[0].mxu0
    %v7022 = vpop.f32.mrb[0].mxu0
    %7023 = vdwg.mxu0
    %v7024 = vtanh.pop %v6530
    %v7025 = vtanh.pop %v6532
    %v7026 = vtanh.pop %v6694
    %v7027 = vtanh.pop %v6696
    %v7028 = vtanh.pop %v6858
    %v7029 = vtanh.pop %v6860
    %v7030 = vtanh.pop %v7019
    %7031 = vst [vmem:[%s14] sm:$0xff] %v7024
    %7032 = vst [vmem:[%s14 + $0x8] sm:$0xff] %v7025
    %7033 = vst [vmem:[%s14 + $0x10] sm:$0xff] %v7026
    %7034 = vst [vmem:[%s14 + $0x18] sm:$0xff] %v7027
    %7035 = vst [vmem:[%s14 + $0x20] sm:$0xff] %v7028
    %7036 = vst [vmem:[%s14 + $0x28] sm:$0xff] %v7029
    %7037 = vst [vmem:[%s14 + $0x30] sm:$0xff] %v7030
    // Predicated region
    $region114: #{generator_forward.1} parent=1 // pred_check
      _
    $region115: #{generator_forward.1} parent=1 // pred_check_branch
      %7039 = sbr.rel (0) target = $region117
    $region116: #{generator_forward.1} parent=1 // pred_region
      _
    $region117: #{generator_forward.1} parent=1 // pred_fallthru
      _
    // Predicated region
    $region118: #{generator_forward.1} parent=1 // pred_check
      _
    $region119: #{generator_forward.1} parent=1 // pred_check_branch
      %7041 = sbr.rel (0) target = $region121
    $region120: #{generator_forward.1} parent=1 // pred_region
      _
    $region121: #{generator_forward.1} parent=1 // pred_fallthru
      _
    %7042 = vsyncpa [#allocation3], 1
    %7043 = vsyncpa [#allocation5], 1
    %7044 = vsyncpa [#allocation8], 1
    %7045 = vsyncpa [#allocation11], 1
    %7046 = vsyncpa [#allocation14], 1
    %7047 = vsyncpa [#allocation17], 1
    %7048 = vsyncpa [#allocation20], 1
    %7049 = vsyncpa [#allocation23], 1

</llo_original>
